<compile_context>
chip_gen: v6e
topology: v6e:2x2x1
jax: 0.10.0
libtpu: 0.0.40
codegen_flags: <defaults>
</compile_context>

<pallas_src>
import math

import jax
import jax.numpy as jnp
from jax.experimental import pallas as pl
from jax.experimental.pallas import tpu as pltpu

HIDDEN = 1024

# Rows per grid step. At 1024 the live (TILE_N, 1024) f32 activations (u and
# tanh(u)) are ~4 MiB each; total kernel VMEM stays well under the explicit
# 40 MiB budget below on every generation (v5e/v6e/v7x).
TILE_N = 1024


def _softplus(x):
    # numerically stable softplus (wrapper-side only; never runs in the kernel)
    return jnp.maximum(x, 0.0) + jnp.log1p(jnp.exp(-jnp.abs(x)))


def gamma_kernel(scal_ref, t_ref, sw2h_ref, b2h_ref, sw3h_ref, o_ref):
    """Processes one (tile_n, 1) row tile of t.

    scal_ref (SMEM, f32[4]): [softplus(w1), b1, scale, offset]
       scale  = (gamma_1 - gamma_0) / (gamma_tilde(1) - gamma_tilde(0))
       offset = gamma_0 + scale * (b3' - gamma_tilde(0))
    sw2h_ref: (1, H)  0.5 * softplus(l2.weight)   (lane-dense row)
    b2h_ref : (1, H)  0.5 * l2.bias
    sw3h_ref: (H, 1)  0.5 * softplus(l3.weight)   (MXU rhs column)
    """
    sw1 = scal_ref[0]
    b1 = scal_ref[1]
    scale = scal_ref[2]
    offset = scal_ref[3]

    t = t_ref[...]                                    # (tile_n, 1)
    l1_t = t * sw1 + b1                               # (tile_n, 1)

    # Hidden chain: one FMA + one tanh per hidden element (EUP floor).
    u = l1_t * sw2h_ref[...] + b2h_ref[...]           # (tile_n, H)
    th = jnp.tanh(u)                                  # (tile_n, H)

    # l3 projection: H-contraction on the MXU. Precision pinned explicitly so the
    # f32 operands are NOT silently truncated to a single bf16 pass (the normalized
    # endpoint difference amplifies that error past tolerance).
    proj = jnp.dot(
        th, sw3h_ref[...],
        preferred_element_type=jnp.float32,
        precision=jax.lax.Precision.HIGHEST,
    )                                                 # (tile_n, 1)

    # Fused epilogue: gamma = offset + scale * (l1_t + proj)
    o_ref[...] = offset + scale * (l1_t + proj)


def gamma_network(t, params, *, tile_n=TILE_N):
    """t: (N, 1) float -> gamma: (N, 1) float32 (matches PyTorch GammaNetwork.forward)."""
    n = t.shape[0]

    # v7x: make sure moderate batches produce >= 2 grid steps so both TensorCores
    # get a row tile; large batches still use the full TILE_N tile.
    half = -(-n // 2)                                  # cdiv(n, 2)
    half = max(8, ((half + 7) // 8) * 8)               # sublane-aligned
    tile_n = max(8, (min(tile_n, half) // 8) * 8)
    npad = ((n + tile_n - 1) // tile_n) * tile_n
    t_pad = jnp.zeros((npad, 1), jnp.float32).at[:n, :].set(t.astype(jnp.float32))

    # ---- one-time O(H) precompute in plain XLA (outside the kernel hot path) ----
    sw1 = _softplus(jnp.asarray(params["w1"], jnp.float32))                  # ()
    b1 = jnp.asarray(params["b1"], jnp.float32)
    b3 = jnp.asarray(params["b3"], jnp.float32)
    g0 = jnp.asarray(params["gamma_0"], jnp.float32)
    g1 = jnp.asarray(params["gamma_1"], jnp.float32)

    sw2 = _softplus(params["w2"].astype(jnp.float32))                        # (H,1)
    sw3 = _softplus(params["w3"].astype(jnp.float32))                        # (1,H)

    # sigmoid(z) = 0.5 + 0.5*tanh(0.5*z) folded into the weights:
    sw2h = (0.5 * sw2).reshape(1, HIDDEN)              # 0.5 * softplus(w2)
    b2h = (0.5 * params["b2"].astype(jnp.float32)).reshape(1, HIDDEN)
    sw3h = (0.5 * sw3).reshape(HIDDEN, 1)              # 0.5 * softplus(w3)
    b3f = b3 + 0.5 * jnp.sum(sw3)                      # b3 + 0.5*sum(softplus(w3))

    def gamma_tilde_scalar(x):
        # identical folded tanh formulation as the kernel -> consistent endpoint
        # cancellation (gamma(0) ~= gamma_0, gamma(1) ~= gamma_1).
        l1 = x * sw1 + b1
        proj = (jnp.tanh(l1 * sw2h + b2h) @ sw3h)[0, 0]
        return l1 + proj + b3f

    gt0 = gamma_tilde_scalar(jnp.float32(0.0))
    gt1 = gamma_tilde_scalar(jnp.float32(1.0))
    scale = (g1 - g0) / (gt1 - gt0)       # strictly positive denominator (softplus weights)
    offset = g0 + scale * (b3f - gt0)

    scalars = jnp.stack([sw1, b1, scale, offset]).astype(jnp.float32)        # SMEM f32[4]

    grid = (npad // tile_n,)
    out = pl.pallas_call(
        gamma_kernel,
        out_shape=jax.ShapeDtypeStruct((npad, 1), jnp.float32),
        grid=grid,
        in_specs=[
            pl.BlockSpec(memory_space=pltpu.MemorySpace.SMEM),       # folded scalars
            pl.BlockSpec((tile_n, 1), lambda i: (i, 0)),             # t row tile
            pl.BlockSpec((1, HIDDEN), lambda i: (0, 0)),             # 0.5*softplus(w2)
            pl.BlockSpec((1, HIDDEN), lambda i: (0, 0)),             # 0.5*b2
            pl.BlockSpec((HIDDEN, 1), lambda i: (0, 0)),             # 0.5*softplus(w3)
        ],
        out_specs=pl.BlockSpec((tile_n, 1), lambda i: (i, 0)),
        compiler_params=pltpu.CompilerParams(
            dimension_semantics=("parallel",),         # shard row tiles across TCs (v7x)
            vmem_limit_bytes=40 * 1024 * 1024,         # explicit budget (v7x-safe)
        ),
    )(scalars, t_pad, sw2h, b2h, sw3h)
    return out[:n, :]


def init_params(key):
    """Deterministic init mirroring PositiveLinear.reset_parameters shapes/bounds
    (kaiming-uniform with a=sqrt(5) => U(-1/sqrt(fan_in), 1/sqrt(fan_in)), then -2)."""
    ks = jax.random.split(key, 6)
    # l1: (1 -> 1), fan_in = 1
    w1 = jax.random.uniform(ks[0], (1, 1), minval=-1.0, maxval=1.0) - 2.0
    b1 = jax.random.uniform(ks[1], (1,), minval=-1.0, maxval=1.0)
    # l2: (1 -> 1024), fan_in = 1
    w2 = jax.random.uniform(ks[2], (HIDDEN, 1), minval=-1.0, maxval=1.0) - 2.0
    b2 = jax.random.uniform(ks[3], (HIDDEN,), minval=-1.0, maxval=1.0)
    # l3: (1024 -> 1), fan_in = 1024
    bnd = 1.0 / math.sqrt(HIDDEN)
    w3 = jax.random.uniform(ks[4], (1, HIDDEN), minval=-bnd, maxval=bnd) - 2.0
    b3 = jax.random.uniform(ks[5], (1,), minval=-bnd, maxval=bnd)
    return dict(
        w1=jnp.reshape(w1, ()), b1=jnp.reshape(b1, ()),
        w2=w2, b2=b2,
        w3=w3, b3=jnp.reshape(b3, ()),
        gamma_0=jnp.float32(-5.0), gamma_1=jnp.float32(10.0),
    )


def gamma_network_ref(t, p):
    """Pure-JAX f32 reference: direct port of the PyTorch forward (exp-sigmoid,
    unfolded weights) for an independent correctness check."""
    sp = _softplus
    sig = lambda x: 1.0 / (1.0 + jnp.exp(-x))

    def l1(x):
        return x * sp(p["w1"]) + p["b1"]

    def l2(x):
        return x @ sp(p["w2"]).T + p["b2"]

    def l3(x):
        return x @ sp(p["w3"]).T + p["b3"]

    def gamma_tilde(x):
        l1x = l1(x)
        return l1x + l3(sig(l2(l1x)))

    gt0 = gamma_tilde(jnp.zeros_like(t))
    gt1 = gamma_tilde(jnp.ones_like(t))
    gtt = gamma_tilde(t)
    norm = (gtt - gt0) / (gt1 - gt0)
    return p["gamma_0"] + (p["gamma_1"] - p["gamma_0"]) * norm


if __name__ == "__main__":
    key = jax.random.PRNGKey(0)
    pkey, tkey = jax.random.split(key)
    params = init_params(pkey)

    # Tolerance: the (gt_t-gt_0)/(gt_1-gt_0) normalization amplifies f32 summation-order
    # differences (MXU multi-pass vs XLA matvec) to a few 1e-4 in gamma; 5e-3 abs /
    # 1e-3 rel is a tight-but-safe f32 bound.
    ATOL, RTOL = 5e-3, 1e-3

    # Small demo batch: t in [0, 1], shape (8, 1), as the gamma network expects.
    t = jax.random.uniform(tkey, (8, 1), dtype=jnp.float32)
    gamma = jax.block_until_ready(gamma_network(t, params))
    ref = gamma_network_ref(t, params)
    assert gamma.shape == (8, 1)
    assert jnp.allclose(gamma, ref, atol=ATOL, rtol=RTOL), (gamma, ref)

    # Exercise the multi-tile grid path (grid > 1, ragged N with padding).
    t2 = jax.random.uniform(jax.random.PRNGKey(1), (300, 1), dtype=jnp.float32)
    gamma2 = jax.block_until_ready(gamma_network(t2, params, tile_n=128))
    ref2 = gamma_network_ref(t2, params)
    assert gamma2.shape == (300, 1)
    assert jnp.allclose(gamma2, ref2, atol=ATOL, rtol=RTOL), (
        float(jnp.max(jnp.abs(gamma2 - ref2))))

    # Endpoint sanity: gamma(0) ~ gamma_0, gamma(1) ~ gamma_1 (consistent folded
    # formulation for gt0/gt1 keeps the cancellation tight).
    te = jnp.array([[0.0], [1.0]], jnp.float32)
    ge = jax.block_until_ready(gamma_network(te, params))
    assert jnp.allclose(ge[:, 0], jnp.array([-5.0, 10.0]), atol=ATOL), ge

    print("KERNEL_OK")
</pallas_src>

<mosaic_0001>
module attributes {stable_mosaic.version = 11 : i64} {
  func.func @gamma_kernel(%arg0: i32, %arg1: memref<4xf32, #tpu.memory_space<smem>>, %arg2: memref<8x1xf32, #tpu.memory_space<vmem>>, %arg3: memref<1x1024xf32, #tpu.memory_space<vmem>>, %arg4: memref<1x1024xf32, #tpu.memory_space<vmem>>, %arg5: memref<1024x1xf32, #tpu.memory_space<vmem>>, %arg6: memref<8x1xf32, #tpu.memory_space<vmem>>) attributes {dimension_semantics = [#tpu.dimension_semantics<parallel>], iteration_bounds = array<i64: 1>, scalar_prefetch = 0 : i64, scratch_operands = 0 : i64, tpu.core_type = #tpu.core_type<tc>, window_params = [{transform_indices = @transform_0, window_bounds = array<i64: 4>}, {transform_indices = @transform_1, window_bounds = array<i64: 8, 1>}, {pipeline_mode = #tpu.pipeline_mode<synchronous>, transform_indices = @transform_2, window_bounds = array<i64: 1, 1024>}, {pipeline_mode = #tpu.pipeline_mode<synchronous>, transform_indices = @transform_3, window_bounds = array<i64: 1, 1024>}, {pipeline_mode = #tpu.pipeline_mode<synchronous>, transform_indices = @transform_4, window_bounds = array<i64: 1024, 1>}, {transform_indices = @transform_5, window_bounds = array<i64: 8, 1>}]} {
    %c0 = arith.constant 0 : index
    %0 = memref.load %arg1[%c0] : memref<4xf32, #tpu.memory_space<smem>>
    %c1 = arith.constant 1 : index
    %1 = memref.load %arg1[%c1] : memref<4xf32, #tpu.memory_space<smem>>
    %c2 = arith.constant 2 : index
    %2 = memref.load %arg1[%c2] : memref<4xf32, #tpu.memory_space<smem>>
    %c3 = arith.constant 3 : index
    %3 = memref.load %arg1[%c3] : memref<4xf32, #tpu.memory_space<smem>>
    %c0_0 = arith.constant 0 : index
    %c0_1 = arith.constant 0 : index
    %4 = vector.load %arg2[%c0_0, %c0_1] : memref<8x1xf32, #tpu.memory_space<vmem>>, vector<8x1xf32>
    %5 = vector.broadcast %0 : f32 to vector<8x1xf32>
    %6 = arith.mulf %4, %5 : vector<8x1xf32>
    %7 = vector.broadcast %1 : f32 to vector<8x1xf32>
    %8 = arith.addf %6, %7 : vector<8x1xf32>
    %c0_2 = arith.constant 0 : index
    %c0_3 = arith.constant 0 : index
    %9 = vector.load %arg3[%c0_2, %c0_3] : memref<1x1024xf32, #tpu.memory_space<vmem>>, vector<1x1024xf32>
    %10 = vector.broadcast %8 : vector<8x1xf32> to vector<8x1024xf32>
    %11 = vector.broadcast %9 : vector<1x1024xf32> to vector<8x1024xf32>
    %12 = arith.mulf %10, %11 : vector<8x1024xf32>
    %c0_4 = arith.constant 0 : index
    %c0_5 = arith.constant 0 : index
    %13 = vector.load %arg4[%c0_4, %c0_5] : memref<1x1024xf32, #tpu.memory_space<vmem>>, vector<1x1024xf32>
    %14 = vector.broadcast %13 : vector<1x1024xf32> to vector<8x1024xf32>
    %15 = arith.addf %12, %14 : vector<8x1024xf32>
    %16 = math.tanh %15 : vector<8x1024xf32>
    %c0_6 = arith.constant 0 : index
    %c0_7 = arith.constant 0 : index
    %17 = vector.load %arg5[%c0_6, %c0_7] : memref<1024x1xf32, #tpu.memory_space<vmem>>, vector<1024x1xf32>
    %cst = arith.constant dense<0.000000e+00> : vector<8x1xf32>
    %18 = tpu.matmul %16, %17, %cst {dimension_numbers = #tpu.dot_dimension_numbers<[1], [0], [0], [1], [0, 0, 1, 1], [], []>, precision = #tpu.contract_precision<fp32>} : vector<8x1024xf32>, vector<1024x1xf32>, vector<8x1xf32> -> vector<8x1xf32>
    %19 = arith.addf %8, %18 : vector<8x1xf32>
    %20 = vector.broadcast %2 : f32 to vector<8x1xf32>
    %21 = arith.mulf %20, %19 : vector<8x1xf32>
    %22 = vector.broadcast %3 : f32 to vector<8x1xf32>
    %23 = arith.addf %22, %21 : vector<8x1xf32>
    %c0_8 = arith.constant 0 : index
    %c0_9 = arith.constant 0 : index
    %24 = vector.load %arg6[%c0_8, %c0_9] : memref<8x1xf32, #tpu.memory_space<vmem>>, vector<8x1xf32>
    tpu.vector_store %arg6[%c0_8, %c0_9], %23 {strides = array<i32>} : memref<8x1xf32, #tpu.memory_space<vmem>>, vector<8x1xf32>,
    return
  }
  func.func @transform_0(%arg0: i32) -> i32 {
    %c0_i32 = arith.constant 0 : i32
    %c0_i32_0 = arith.constant 0 : i32
    return %c0_i32 : i32
  }
  func.func @transform_1(%arg0: i32) -> (i32, i32) {
    %c0_i32 = arith.constant 0 : i32
    %c0_i32_0 = arith.constant 0 : i32
    return %arg0, %c0_i32 : i32, i32
  }
  func.func @transform_2(%arg0: i32) -> (i32, i32) {
    %c0_i32 = arith.constant 0 : i32
    %c0_i32_0 = arith.constant 0 : i32
    %c0_i32_1 = arith.constant 0 : i32
    return %c0_i32, %c0_i32_0 : i32, i32
  }
  func.func @transform_3(%arg0: i32) -> (i32, i32) {
    %c0_i32 = arith.constant 0 : i32
    %c0_i32_0 = arith.constant 0 : i32
    %c0_i32_1 = arith.constant 0 : i32
    return %c0_i32, %c0_i32_0 : i32, i32
  }
  func.func @transform_4(%arg0: i32) -> (i32, i32) {
    %c0_i32 = arith.constant 0 : i32
    %c0_i32_0 = arith.constant 0 : i32
    %c0_i32_1 = arith.constant 0 : i32
    return %c0_i32, %c0_i32_0 : i32, i32
  }
  func.func @transform_5(%arg0: i32) -> (i32, i32) {
    %c0_i32 = arith.constant 0 : i32
    %c0_i32_0 = arith.constant 0 : i32
    return %arg0, %c0_i32 : i32, i32
  }
}

</mosaic_0001>

<llo_original>
// kernel: tpu_custom_call.1
$region0: #{tpu_custom_call.1}
  #allocation0 [shape = 'u32[]', space=smem, size = 0x4, offset = 0x4, fixed_abs, tag = 'smem constant byte address 0x4 - core index']
  #allocation1 [shape = 'u32[144,128]{1,0:T(1,128)}', space=vmem, size = 0x12000, scoped, tag = 'internal scratch']
  %s0 = inlined_call_operand.vmem [shape: f32[4], index: 0, kind: input, shape index: {}]
  %s1 = inlined_call_operand.vmem [shape: f32[8,1], index: 1, kind: input, shape index: {}]
  %s2 = inlined_call_operand.vmem [shape: f32[1,1024], index: 2, kind: input, shape index: {}]
  %s3 = inlined_call_operand.vmem [shape: f32[1,1024], index: 3, kind: input, shape index: {}]
  %s4 = inlined_call_operand.vmem [shape: f32[1024,1], index: 4, kind: input, shape index: {}]
  %s5 = inlined_call_operand.vmem [shape: f32[8,1], index: 5, kind: output, shape index: {}]
  %s6 = sld [smem:[#allocation0]]
  $region34: #{tpu_custom_call.1} parent=0
    _
  %s8 = ssub.s32 1, %s6
  %s9 = scalar_select 0, %s8, %s6
  $region1: #{tpu_custom_call.1} parent=0
    #allocation2 [shape = 'u8[512]{0}', space=smem, size = 0x200, scoped, tag = 'input window, operand 0, single buffered']
    #allocation3 [shape = 's32[1]{0}', space=sflag, size = 0x4, scoped, tag = 'scoped memory for tpu_custom_call.1']
    %10 = vsyncpa [#allocation3], 0
    // Predicated region
    $region2: #{tpu_custom_call.1} parent=1 // pred_check
      _
    $region3: #{tpu_custom_call.1} parent=1 // pred_check_branch
      %12 = sbr.rel (0) target = $region5
    $region4: #{tpu_custom_call.1} parent=1 // pred_region
      %s14 = ssub.s32 16, 16
      %15 = vsyncadd [#allocation3], %s14
      %s17 = sshll.u32 %s0, 4
      %s18 = int_to_ptr.vmem [resolvable:$true] %s17
      %20 = dma.vmem_to_smem %s18, 16, [#allocation2], [#allocation3]
    $region5: #{tpu_custom_call.1} parent=1 // pred_fallthru
      _
    // Predicated region
    $region6: #{tpu_custom_call.1} parent=1 // pred_check
      _
    $region7: #{tpu_custom_call.1} parent=1 // pred_check_branch
      %22 = sbr.rel (0) target = $region9
    $region8: #{tpu_custom_call.1} parent=1 // pred_region
      _
    $region9: #{tpu_custom_call.1} parent=1 // pred_fallthru
      _
    // Predicated region
    $region10: #{tpu_custom_call.1} parent=1 // pred_check
      _
    $region11: #{tpu_custom_call.1} parent=1 // pred_check_branch
      %24 = sbr.rel (0) target = $region13
    $region12: #{tpu_custom_call.1} parent=1 // pred_region
      _
    $region13: #{tpu_custom_call.1} parent=1 // pred_fallthru
      _
    // Predicated region
    $region14: #{tpu_custom_call.1} parent=1 // pred_check
      _
    $region15: #{tpu_custom_call.1} parent=1 // pred_check_branch
      %26 = sbr.rel (0) target = $region17
    $region16: #{tpu_custom_call.1} parent=1 // pred_region
      _
    $region17: #{tpu_custom_call.1} parent=1 // pred_fallthru
      _
    // Predicated region
    $region18: #{tpu_custom_call.1} parent=1 // pred_check
      _
    $region19: #{tpu_custom_call.1} parent=1 // pred_check_branch
      %28 = sbr.rel (0) target = $region21
    $region20: #{tpu_custom_call.1} parent=1 // pred_region
      _
    $region21: #{tpu_custom_call.1} parent=1 // pred_fallthru
      _
    // Predicated region
    $region22: #{tpu_custom_call.1} parent=1 // pred_check
      _
    $region23: #{tpu_custom_call.1} parent=1 // pred_check_branch
      %30 = sbr.rel (0) target = $region25
    $region24: #{tpu_custom_call.1} parent=1 // pred_region
      %31 = dma.done [#allocation3], 16
    $region25: #{tpu_custom_call.1} parent=1 // pred_fallthru
      _
    %32 = sfence
    %s33 = sld [smem:[#allocation2]]
    %s34 = sld [smem:[#allocation2 + $0x1]]
    %s35 = sld [smem:[#allocation2 + $0x2]]
    %s36 = sld [smem:[#allocation2 + $0x3]]
    %v37 = vld [vmem:[%s1] sm:$0xff]
    %v38 = vstv %s33
    %v39 = vmul.f32 %v37, %v38
    %v40 = vstv %s34
    %v41 = vadd.f32 %v39, %v40
    %v42 = vld [vmem:[%s2] sm:$0xff]
    %44 = vset.pattern.permute.xlu0 0
    %45 = vperm.xlu0 %44, %v41
    %v46 = vpop.permute.xlu0 %45
    %v49 = vlaneseq
    %v50 = vshrl.u32 %v49, 7
    %v51 = vsub.s32 0, %v50
    %v52 = vrot.slane %v42, %v51
    %v53 = vlaneseq
    %v54 = vshrl.u32 %v53, 7
    %v55 = vsub.s32 1, %v54
    %v56 = vrot.slane %v42, %v55
    %v57 = vlaneseq
    %v58 = vshrl.u32 %v57, 7
    %v59 = vsub.s32 2, %v58
    %v60 = vrot.slane %v42, %v59
    %v61 = vlaneseq
    %v62 = vshrl.u32 %v61, 7
    %v63 = vsub.s32 3, %v62
    %v64 = vrot.slane %v42, %v63
    %v65 = vlaneseq
    %v66 = vshrl.u32 %v65, 7
    %v67 = vsub.s32 4, %v66
    %v68 = vrot.slane %v42, %v67
    %v69 = vlaneseq
    %v70 = vshrl.u32 %v69, 7
    %v71 = vsub.s32 5, %v70
    %v72 = vrot.slane %v42, %v71
    %v73 = vlaneseq
    %v74 = vshrl.u32 %v73, 7
    %v75 = vsub.s32 6, %v74
    %v76 = vrot.slane %v42, %v75
    %v77 = vlaneseq
    %v78 = vshrl.u32 %v77, 7
    %v79 = vsub.s32 7, %v78
    %v80 = vrot.slane %v42, %v79
    %v89 = vmul.f32 %v46, %v52
    %v90 = vmul.f32 %v46, %v56
    %v91 = vmul.f32 %v46, %v60
    %v92 = vmul.f32 %v46, %v64
    %v93 = vmul.f32 %v46, %v68
    %v94 = vmul.f32 %v46, %v72
    %v95 = vmul.f32 %v46, %v76
    %v96 = vmul.f32 %v46, %v80
    %v97 = vld [vmem:[%s3] sm:$0xff]
    %v99 = vlaneseq
    %v100 = vshrl.u32 %v99, 7
    %v101 = vsub.s32 0, %v100
    %v102 = vrot.slane %v97, %v101
    %v103 = vlaneseq
    %v104 = vshrl.u32 %v103, 7
    %v105 = vsub.s32 1, %v104
    %v106 = vrot.slane %v97, %v105
    %v107 = vlaneseq
    %v108 = vshrl.u32 %v107, 7
    %v109 = vsub.s32 2, %v108
    %v110 = vrot.slane %v97, %v109
    %v111 = vlaneseq
    %v112 = vshrl.u32 %v111, 7
    %v113 = vsub.s32 3, %v112
    %v114 = vrot.slane %v97, %v113
    %v115 = vlaneseq
    %v116 = vshrl.u32 %v115, 7
    %v117 = vsub.s32 4, %v116
    %v118 = vrot.slane %v97, %v117
    %v119 = vlaneseq
    %v120 = vshrl.u32 %v119, 7
    %v121 = vsub.s32 5, %v120
    %v122 = vrot.slane %v97, %v121
    %v123 = vlaneseq
    %v124 = vshrl.u32 %v123, 7
    %v125 = vsub.s32 6, %v124
    %v126 = vrot.slane %v97, %v125
    %v127 = vlaneseq
    %v128 = vshrl.u32 %v127, 7
    %v129 = vsub.s32 7, %v128
    %v130 = vrot.slane %v97, %v129
    %v139 = vadd.f32 %v89, %v102
    %v140 = vadd.f32 %v90, %v106
    %v141 = vadd.f32 %v91, %v110
    %v142 = vadd.f32 %v92, %v114
    %v143 = vadd.f32 %v93, %v118
    %v144 = vadd.f32 %v94, %v122
    %v145 = vadd.f32 %v95, %v126
    %v146 = vadd.f32 %v96, %v130
    %v147 = vtanh.pop %v139
    %v148 = vtanh.pop %v140
    %v149 = vtanh.pop %v141
    %v150 = vtanh.pop %v142
    %v151 = vtanh.pop %v143
    %v152 = vtanh.pop %v144
    %v153 = vtanh.pop %v145
    %v154 = vtanh.pop %v146
    %v155 = vld [vmem:[%s4] sm:$0xff]
    %v156 = vld [vmem:[%s4 + $0x8] sm:$0xff]
    %v157 = vld [vmem:[%s4 + $0x10] sm:$0xff]
    %v158 = vld [vmem:[%s4 + $0x18] sm:$0xff]
    %v159 = vld [vmem:[%s4 + $0x20] sm:$0xff]
    %v160 = vld [vmem:[%s4 + $0x28] sm:$0xff]
    %v161 = vld [vmem:[%s4 + $0x30] sm:$0xff]
    %v162 = vld [vmem:[%s4 + $0x38] sm:$0xff]
    %v163 = vld [vmem:[%s4 + $0x40] sm:$0xff]
    %v164 = vld [vmem:[%s4 + $0x48] sm:$0xff]
    %v165 = vld [vmem:[%s4 + $0x50] sm:$0xff]
    %v166 = vld [vmem:[%s4 + $0x58] sm:$0xff]
    %v167 = vld [vmem:[%s4 + $0x60] sm:$0xff]
    %v168 = vld [vmem:[%s4 + $0x68] sm:$0xff]
    %v169 = vld [vmem:[%s4 + $0x70] sm:$0xff]
    %v170 = vld [vmem:[%s4 + $0x78] sm:$0xff]
    %v171 = vld [vmem:[%s4 + $0x80] sm:$0xff]
    %v172 = vld [vmem:[%s4 + $0x88] sm:$0xff]
    %v173 = vld [vmem:[%s4 + $0x90] sm:$0xff]
    %v174 = vld [vmem:[%s4 + $0x98] sm:$0xff]
    %v175 = vld [vmem:[%s4 + $0xa0] sm:$0xff]
    %v176 = vld [vmem:[%s4 + $0xa8] sm:$0xff]
    %v177 = vld [vmem:[%s4 + $0xb0] sm:$0xff]
    %v178 = vld [vmem:[%s4 + $0xb8] sm:$0xff]
    %v179 = vld [vmem:[%s4 + $0xc0] sm:$0xff]
    %v180 = vld [vmem:[%s4 + $0xc8] sm:$0xff]
    %v181 = vld [vmem:[%s4 + $0xd0] sm:$0xff]
    %v182 = vld [vmem:[%s4 + $0xd8] sm:$0xff]
    %v183 = vld [vmem:[%s4 + $0xe0] sm:$0xff]
    %v184 = vld [vmem:[%s4 + $0xe8] sm:$0xff]
    %v185 = vld [vmem:[%s4 + $0xf0] sm:$0xff]
    %v186 = vld [vmem:[%s4 + $0xf8] sm:$0xff]
    %v187 = vld [vmem:[%s4 + $0x100] sm:$0xff]
    %v188 = vld [vmem:[%s4 + $0x108] sm:$0xff]
    %v189 = vld [vmem:[%s4 + $0x110] sm:$0xff]
    %v190 = vld [vmem:[%s4 + $0x118] sm:$0xff]
    %v191 = vld [vmem:[%s4 + $0x120] sm:$0xff]
    %v192 = vld [vmem:[%s4 + $0x128] sm:$0xff]
    %v193 = vld [vmem:[%s4 + $0x130] sm:$0xff]
    %v194 = vld [vmem:[%s4 + $0x138] sm:$0xff]
    %v195 = vld [vmem:[%s4 + $0x140] sm:$0xff]
    %v196 = vld [vmem:[%s4 + $0x148] sm:$0xff]
    %v197 = vld [vmem:[%s4 + $0x150] sm:$0xff]
    %v198 = vld [vmem:[%s4 + $0x158] sm:$0xff]
    %v199 = vld [vmem:[%s4 + $0x160] sm:$0xff]
    %v200 = vld [vmem:[%s4 + $0x168] sm:$0xff]
    %v201 = vld [vmem:[%s4 + $0x170] sm:$0xff]
    %v202 = vld [vmem:[%s4 + $0x178] sm:$0xff]
    %v203 = vld [vmem:[%s4 + $0x180] sm:$0xff]
    %v204 = vld [vmem:[%s4 + $0x188] sm:$0xff]
    %v205 = vld [vmem:[%s4 + $0x190] sm:$0xff]
    %v206 = vld [vmem:[%s4 + $0x198] sm:$0xff]
    %v207 = vld [vmem:[%s4 + $0x1a0] sm:$0xff]
    %v208 = vld [vmem:[%s4 + $0x1a8] sm:$0xff]
    %v209 = vld [vmem:[%s4 + $0x1b0] sm:$0xff]
    %v210 = vld [vmem:[%s4 + $0x1b8] sm:$0xff]
    %v211 = vld [vmem:[%s4 + $0x1c0] sm:$0xff]
    %v212 = vld [vmem:[%s4 + $0x1c8] sm:$0xff]
    %v213 = vld [vmem:[%s4 + $0x1d0] sm:$0xff]
    %v214 = vld [vmem:[%s4 + $0x1d8] sm:$0xff]
    %v215 = vld [vmem:[%s4 + $0x1e0] sm:$0xff]
    %v216 = vld [vmem:[%s4 + $0x1e8] sm:$0xff]
    %v217 = vld [vmem:[%s4 + $0x1f0] sm:$0xff]
    %v218 = vld [vmem:[%s4 + $0x1f8] sm:$0xff]
    %v219 = vld [vmem:[%s4 + $0x200] sm:$0xff]
    %v220 = vld [vmem:[%s4 + $0x208] sm:$0xff]
    %v221 = vld [vmem:[%s4 + $0x210] sm:$0xff]
    %v222 = vld [vmem:[%s4 + $0x218] sm:$0xff]
    %v223 = vld [vmem:[%s4 + $0x220] sm:$0xff]
    %v224 = vld [vmem:[%s4 + $0x228] sm:$0xff]
    %v225 = vld [vmem:[%s4 + $0x230] sm:$0xff]
    %v226 = vld [vmem:[%s4 + $0x238] sm:$0xff]
    %v227 = vld [vmem:[%s4 + $0x240] sm:$0xff]
    %v228 = vld [vmem:[%s4 + $0x248] sm:$0xff]
    %v229 = vld [vmem:[%s4 + $0x250] sm:$0xff]
    %v230 = vld [vmem:[%s4 + $0x258] sm:$0xff]
    %v231 = vld [vmem:[%s4 + $0x260] sm:$0xff]
    %v232 = vld [vmem:[%s4 + $0x268] sm:$0xff]
    %v233 = vld [vmem:[%s4 + $0x270] sm:$0xff]
    %v234 = vld [vmem:[%s4 + $0x278] sm:$0xff]
    %v235 = vld [vmem:[%s4 + $0x280] sm:$0xff]
    %v236 = vld [vmem:[%s4 + $0x288] sm:$0xff]
    %v237 = vld [vmem:[%s4 + $0x290] sm:$0xff]
    %v238 = vld [vmem:[%s4 + $0x298] sm:$0xff]
    %v239 = vld [vmem:[%s4 + $0x2a0] sm:$0xff]
    %v240 = vld [vmem:[%s4 + $0x2a8] sm:$0xff]
    %v241 = vld [vmem:[%s4 + $0x2b0] sm:$0xff]
    %v242 = vld [vmem:[%s4 + $0x2b8] sm:$0xff]
    %v243 = vld [vmem:[%s4 + $0x2c0] sm:$0xff]
    %v244 = vld [vmem:[%s4 + $0x2c8] sm:$0xff]
    %v245 = vld [vmem:[%s4 + $0x2d0] sm:$0xff]
    %v246 = vld [vmem:[%s4 + $0x2d8] sm:$0xff]
    %v247 = vld [vmem:[%s4 + $0x2e0] sm:$0xff]
    %v248 = vld [vmem:[%s4 + $0x2e8] sm:$0xff]
    %v249 = vld [vmem:[%s4 + $0x2f0] sm:$0xff]
    %v250 = vld [vmem:[%s4 + $0x2f8] sm:$0xff]
    %v251 = vld [vmem:[%s4 + $0x300] sm:$0xff]
    %v252 = vld [vmem:[%s4 + $0x308] sm:$0xff]
    %v253 = vld [vmem:[%s4 + $0x310] sm:$0xff]
    %v254 = vld [vmem:[%s4 + $0x318] sm:$0xff]
    %v255 = vld [vmem:[%s4 + $0x320] sm:$0xff]
    %v256 = vld [vmem:[%s4 + $0x328] sm:$0xff]
    %v257 = vld [vmem:[%s4 + $0x330] sm:$0xff]
    %v258 = vld [vmem:[%s4 + $0x338] sm:$0xff]
    %v259 = vld [vmem:[%s4 + $0x340] sm:$0xff]
    %v260 = vld [vmem:[%s4 + $0x348] sm:$0xff]
    %v261 = vld [vmem:[%s4 + $0x350] sm:$0xff]
    %v262 = vld [vmem:[%s4 + $0x358] sm:$0xff]
    %v263 = vld [vmem:[%s4 + $0x360] sm:$0xff]
    %v264 = vld [vmem:[%s4 + $0x368] sm:$0xff]
    %v265 = vld [vmem:[%s4 + $0x370] sm:$0xff]
    %v266 = vld [vmem:[%s4 + $0x378] sm:$0xff]
    %v267 = vld [vmem:[%s4 + $0x380] sm:$0xff]
    %v268 = vld [vmem:[%s4 + $0x388] sm:$0xff]
    %v269 = vld [vmem:[%s4 + $0x390] sm:$0xff]
    %v270 = vld [vmem:[%s4 + $0x398] sm:$0xff]
    %v271 = vld [vmem:[%s4 + $0x3a0] sm:$0xff]
    %v272 = vld [vmem:[%s4 + $0x3a8] sm:$0xff]
    %v273 = vld [vmem:[%s4 + $0x3b0] sm:$0xff]
    %v274 = vld [vmem:[%s4 + $0x3b8] sm:$0xff]
    %v275 = vld [vmem:[%s4 + $0x3c0] sm:$0xff]
    %v276 = vld [vmem:[%s4 + $0x3c8] sm:$0xff]
    %v277 = vld [vmem:[%s4 + $0x3d0] sm:$0xff]
    %v278 = vld [vmem:[%s4 + $0x3d8] sm:$0xff]
    %v279 = vld [vmem:[%s4 + $0x3e0] sm:$0xff]
    %v280 = vld [vmem:[%s4 + $0x3e8] sm:$0xff]
    %v281 = vld [vmem:[%s4 + $0x3f0] sm:$0xff]
    %v282 = vld [vmem:[%s4 + $0x3f8] sm:$0xff]
    %283 = vmatprep.subr.mxu0 0.0
    %v284 = vand.u32 %v170, 4294901760
    %285 = vmatpush1.msra.mxu0 %v284
    %286 = vmatprep.subr.mxu0 0.0
    %v287 = vand.u32 %v169, 4294901760
    %288 = vmatpush1.msra.mxu0 %v287
    %289 = vmatprep.subr.mxu0 0.0
    %v290 = vand.u32 %v168, 4294901760
    %291 = vmatpush1.msra.mxu0 %v290
    %292 = vmatprep.subr.mxu0 0.0
    %v293 = vand.u32 %v167, 4294901760
    %294 = vmatpush1.msra.mxu0 %v293
    %295 = vmatprep.subr.mxu0 0.0
    %v296 = vand.u32 %v166, 4294901760
    %297 = vmatpush1.msra.mxu0 %v296
    %298 = vmatprep.subr.mxu0 0.0
    %v299 = vand.u32 %v165, 4294901760
    %300 = vmatpush1.msra.mxu0 %v299
    %301 = vmatprep.subr.mxu0 0.0
    %v302 = vand.u32 %v164, 4294901760
    %303 = vmatpush1.msra.mxu0 %v302
    %304 = vmatprep.subr.mxu0 0.0
    %v305 = vand.u32 %v163, 4294901760
    %306 = vmatpush1.msra.mxu0 %v305
    %307 = vmatprep.subr.mxu0 0.0
    %v308 = vand.u32 %v162, 4294901760
    %309 = vmatpush1.msra.mxu0 %v308
    %310 = vmatprep.subr.mxu0 0.0
    %v311 = vand.u32 %v161, 4294901760
    %312 = vmatpush1.msra.mxu0 %v311
    %313 = vmatprep.subr.mxu0 0.0
    %v314 = vand.u32 %v160, 4294901760
    %315 = vmatpush1.msra.mxu0 %v314
    %316 = vmatprep.subr.mxu0 0.0
    %v317 = vand.u32 %v159, 4294901760
    %318 = vmatpush1.msra.mxu0 %v317
    %319 = vmatprep.subr.mxu0 0.0
    %v320 = vand.u32 %v158, 4294901760
    %321 = vmatpush1.msra.mxu0 %v320
    %322 = vmatprep.subr.mxu0 0.0
    %v323 = vand.u32 %v157, 4294901760
    %324 = vmatpush1.msra.mxu0 %v323
    %325 = vmatprep.subr.mxu0 0.0
    %v326 = vand.u32 %v156, 4294901760
    %327 = vmatpush1.msra.mxu0 %v326
    %328 = vmatprep.subr.mxu0 0.0
    %v329 = vand.u32 %v155, 4294901760
    %330 = vmatpush1.msra.mxu0 %v329
    %331 = vmatprep.subr.mxu0 0.0
    %v332 = vand.u32 %v186, 4294901760
    %333 = vmatpush2.msra.mxu0 %v332
    %334 = vmatprep.subr.mxu0 0.0
    %v335 = vand.u32 %v185, 4294901760
    %336 = vmatpush2.msra.mxu0 %v335
    %337 = vmatprep.subr.mxu0 0.0
    %v338 = vand.u32 %v184, 4294901760
    %339 = vmatpush2.msra.mxu0 %v338
    %340 = vmatprep.subr.mxu0 0.0
    %v341 = vand.u32 %v183, 4294901760
    %342 = vmatpush2.msra.mxu0 %v341
    %343 = vmatprep.subr.mxu0 0.0
    %v344 = vand.u32 %v182, 4294901760
    %345 = vmatpush2.msra.mxu0 %v344
    %346 = vmatprep.subr.mxu0 0.0
    %v347 = vand.u32 %v181, 4294901760
    %348 = vmatpush2.msra.mxu0 %v347
    %349 = vmatprep.subr.mxu0 0.0
    %v350 = vand.u32 %v180, 4294901760
    %351 = vmatpush2.msra.mxu0 %v350
    %352 = vmatprep.subr.mxu0 0.0
    %v353 = vand.u32 %v179, 4294901760
    %354 = vmatpush2.msra.mxu0 %v353
    %355 = vmatprep.subr.mxu0 0.0
    %v356 = vand.u32 %v178, 4294901760
    %357 = vmatpush2.msra.mxu0 %v356
    %358 = vmatprep.subr.mxu0 0.0
    %v359 = vand.u32 %v177, 4294901760
    %360 = vmatpush2.msra.mxu0 %v359
    %361 = vmatprep.subr.mxu0 0.0
    %v362 = vand.u32 %v176, 4294901760
    %363 = vmatpush2.msra.mxu0 %v362
    %364 = vmatprep.subr.mxu0 0.0
    %v365 = vand.u32 %v175, 4294901760
    %366 = vmatpush2.msra.mxu0 %v365
    %367 = vmatprep.subr.mxu0 0.0
    %v368 = vand.u32 %v174, 4294901760
    %369 = vmatpush2.msra.mxu0 %v368
    %370 = vmatprep.subr.mxu0 0.0
    %v371 = vand.u32 %v173, 4294901760
    %372 = vmatpush2.msra.mxu0 %v371
    %373 = vmatprep.subr.mxu0 0.0
    %v374 = vand.u32 %v172, 4294901760
    %375 = vmatpush2.msra.mxu0 %v374
    %376 = vmatprep.subr.mxu0 0.0
    %v377 = vand.u32 %v171, 4294901760
    %378 = vmatpush2.msra.mxu0 %v377
    %v379 = vand.u32 %v148, 4294901760
    %v380 = vsub.f32 %v148, %v379
    %v381 = vand.u32 %v380, 4294901760
    %v382 = vsub.f32 %v380, %v381
    %v383 = vand.u32 %v382, 4294901760
    %384 = vmatprep.mubr.f32.mxu0 %v383
    %v385 = vand.u32 %v147, 4294901760
    %v386 = vsub.f32 %v147, %v385
    %v387 = vand.u32 %v386, 4294901760
    %v388 = vsub.f32 %v386, %v387
    %v389 = vand.u32 %v388, 4294901760
    %390 = vmatmul.mubr.f32.gmra.mxu0 %v389
    %v391 = vpop.f32.mrf.mxu0
    %v392 = vadd.f32 0.0, %v391
    %v393 = vpop.f32.mrf.mxu0
    %394 = vdwg.mxu0
    %395 = vmatprep.subr.mxu0 0.0
    %v396 = vand.u32 %v170, 4294901760
    %v397 = vsub.f32 %v170, %v396
    %v398 = vand.u32 %v397, 4294901760
    %v399 = vsub.f32 %v397, %v398
    %v400 = vand.u32 %v399, 4294901760
    %401 = vmatpush1.msra.mxu0 %v400
    %402 = vmatprep.subr.mxu0 0.0
    %v403 = vand.u32 %v169, 4294901760
    %v404 = vsub.f32 %v169, %v403
    %v405 = vand.u32 %v404, 4294901760
    %v406 = vsub.f32 %v404, %v405
    %v407 = vand.u32 %v406, 4294901760
    %408 = vmatpush1.msra.mxu0 %v407
    %409 = vmatprep.subr.mxu0 0.0
    %v410 = vand.u32 %v168, 4294901760
    %v411 = vsub.f32 %v168, %v410
    %v412 = vand.u32 %v411, 4294901760
    %v413 = vsub.f32 %v411, %v412
    %v414 = vand.u32 %v413, 4294901760
    %415 = vmatpush1.msra.mxu0 %v414
    %416 = vmatprep.subr.mxu0 0.0
    %v417 = vand.u32 %v167, 4294901760
    %v418 = vsub.f32 %v167, %v417
    %v419 = vand.u32 %v418, 4294901760
    %v420 = vsub.f32 %v418, %v419
    %v421 = vand.u32 %v420, 4294901760
    %422 = vmatpush1.msra.mxu0 %v421
    %423 = vmatprep.subr.mxu0 0.0
    %v424 = vand.u32 %v166, 4294901760
    %v425 = vsub.f32 %v166, %v424
    %v426 = vand.u32 %v425, 4294901760
    %v427 = vsub.f32 %v425, %v426
    %v428 = vand.u32 %v427, 4294901760
    %429 = vmatpush1.msra.mxu0 %v428
    %430 = vmatprep.subr.mxu0 0.0
    %v431 = vand.u32 %v165, 4294901760
    %v432 = vsub.f32 %v165, %v431
    %v433 = vand.u32 %v432, 4294901760
    %v434 = vsub.f32 %v432, %v433
    %v435 = vand.u32 %v434, 4294901760
    %436 = vmatpush1.msra.mxu0 %v435
    %437 = vmatprep.subr.mxu0 0.0
    %v438 = vand.u32 %v164, 4294901760
    %v439 = vsub.f32 %v164, %v438
    %v440 = vand.u32 %v439, 4294901760
    %v441 = vsub.f32 %v439, %v440
    %v442 = vand.u32 %v441, 4294901760
    %443 = vmatpush1.msra.mxu0 %v442
    %444 = vmatprep.subr.mxu0 0.0
    %v445 = vand.u32 %v163, 4294901760
    %v446 = vsub.f32 %v163, %v445
    %v447 = vand.u32 %v446, 4294901760
    %v448 = vsub.f32 %v446, %v447
    %v449 = vand.u32 %v448, 4294901760
    %450 = vmatpush1.msra.mxu0 %v449
    %451 = vmatprep.subr.mxu0 0.0
    %v452 = vand.u32 %v162, 4294901760
    %v453 = vsub.f32 %v162, %v452
    %v454 = vand.u32 %v453, 4294901760
    %v455 = vsub.f32 %v453, %v454
    %v456 = vand.u32 %v455, 4294901760
    %457 = vmatpush1.msra.mxu0 %v456
    %458 = vmatprep.subr.mxu0 0.0
    %v459 = vand.u32 %v161, 4294901760
    %v460 = vsub.f32 %v161, %v459
    %v461 = vand.u32 %v460, 4294901760
    %v462 = vsub.f32 %v460, %v461
    %v463 = vand.u32 %v462, 4294901760
    %464 = vmatpush1.msra.mxu0 %v463
    %465 = vmatprep.subr.mxu0 0.0
    %v466 = vand.u32 %v160, 4294901760
    %v467 = vsub.f32 %v160, %v466
    %v468 = vand.u32 %v467, 4294901760
    %v469 = vsub.f32 %v467, %v468
    %v470 = vand.u32 %v469, 4294901760
    %471 = vmatpush1.msra.mxu0 %v470
    %472 = vmatprep.subr.mxu0 0.0
    %v473 = vand.u32 %v159, 4294901760
    %v474 = vsub.f32 %v159, %v473
    %v475 = vand.u32 %v474, 4294901760
    %v476 = vsub.f32 %v474, %v475
    %v477 = vand.u32 %v476, 4294901760
    %478 = vmatpush1.msra.mxu0 %v477
    %479 = vmatprep.subr.mxu0 0.0
    %v480 = vand.u32 %v158, 4294901760
    %v481 = vsub.f32 %v158, %v480
    %v482 = vand.u32 %v481, 4294901760
    %v483 = vsub.f32 %v481, %v482
    %v484 = vand.u32 %v483, 4294901760
    %485 = vmatpush1.msra.mxu0 %v484
    %486 = vmatprep.subr.mxu0 0.0
    %v487 = vand.u32 %v157, 4294901760
    %v488 = vsub.f32 %v157, %v487
    %v489 = vand.u32 %v488, 4294901760
    %v490 = vsub.f32 %v488, %v489
    %v491 = vand.u32 %v490, 4294901760
    %492 = vmatpush1.msra.mxu0 %v491
    %493 = vmatprep.subr.mxu0 0.0
    %v494 = vand.u32 %v156, 4294901760
    %v495 = vsub.f32 %v156, %v494
    %v496 = vand.u32 %v495, 4294901760
    %v497 = vsub.f32 %v495, %v496
    %v498 = vand.u32 %v497, 4294901760
    %499 = vmatpush1.msra.mxu0 %v498
    %500 = vmatprep.subr.mxu0 0.0
    %v501 = vand.u32 %v155, 4294901760
    %v502 = vsub.f32 %v155, %v501
    %v503 = vand.u32 %v502, 4294901760
    %v504 = vsub.f32 %v502, %v503
    %v505 = vand.u32 %v504, 4294901760
    %506 = vmatpush1.msra.mxu0 %v505
    %507 = vmatprep.subr.mxu0 0.0
    %v508 = vand.u32 %v186, 4294901760
    %v509 = vsub.f32 %v186, %v508
    %v510 = vand.u32 %v509, 4294901760
    %v511 = vsub.f32 %v509, %v510
    %v512 = vand.u32 %v511, 4294901760
    %513 = vmatpush2.msra.mxu0 %v512
    %514 = vmatprep.subr.mxu0 0.0
    %v515 = vand.u32 %v185, 4294901760
    %v516 = vsub.f32 %v185, %v515
    %v517 = vand.u32 %v516, 4294901760
    %v518 = vsub.f32 %v516, %v517
    %v519 = vand.u32 %v518, 4294901760
    %520 = vmatpush2.msra.mxu0 %v519
    %521 = vmatprep.subr.mxu0 0.0
    %v522 = vand.u32 %v184, 4294901760
    %v523 = vsub.f32 %v184, %v522
    %v524 = vand.u32 %v523, 4294901760
    %v525 = vsub.f32 %v523, %v524
    %v526 = vand.u32 %v525, 4294901760
    %527 = vmatpush2.msra.mxu0 %v526
    %528 = vmatprep.subr.mxu0 0.0
    %v529 = vand.u32 %v183, 4294901760
    %v530 = vsub.f32 %v183, %v529
    %v531 = vand.u32 %v530, 4294901760
    %v532 = vsub.f32 %v530, %v531
    %v533 = vand.u32 %v532, 4294901760
    %534 = vmatpush2.msra.mxu0 %v533
    %535 = vmatprep.subr.mxu0 0.0
    %v536 = vand.u32 %v182, 4294901760
    %v537 = vsub.f32 %v182, %v536
    %v538 = vand.u32 %v537, 4294901760
    %v539 = vsub.f32 %v537, %v538
    %v540 = vand.u32 %v539, 4294901760
    %541 = vmatpush2.msra.mxu0 %v540
    %542 = vmatprep.subr.mxu0 0.0
    %v543 = vand.u32 %v181, 4294901760
    %v544 = vsub.f32 %v181, %v543
    %v545 = vand.u32 %v544, 4294901760
    %v546 = vsub.f32 %v544, %v545
    %v547 = vand.u32 %v546, 4294901760
    %548 = vmatpush2.msra.mxu0 %v547
    %549 = vmatprep.subr.mxu0 0.0
    %v550 = vand.u32 %v180, 4294901760
    %v551 = vsub.f32 %v180, %v550
    %v552 = vand.u32 %v551, 4294901760
    %v553 = vsub.f32 %v551, %v552
    %v554 = vand.u32 %v553, 4294901760
    %555 = vmatpush2.msra.mxu0 %v554
    %556 = vmatprep.subr.mxu0 0.0
    %v557 = vand.u32 %v179, 4294901760
    %v558 = vsub.f32 %v179, %v557
    %v559 = vand.u32 %v558, 4294901760
    %v560 = vsub.f32 %v558, %v559
    %v561 = vand.u32 %v560, 4294901760
    %562 = vmatpush2.msra.mxu0 %v561
    %563 = vmatprep.subr.mxu0 0.0
    %v564 = vand.u32 %v178, 4294901760
    %v565 = vsub.f32 %v178, %v564
    %v566 = vand.u32 %v565, 4294901760
    %v567 = vsub.f32 %v565, %v566
    %v568 = vand.u32 %v567, 4294901760
    %569 = vmatpush2.msra.mxu0 %v568
    %570 = vmatprep.subr.mxu0 0.0
    %v571 = vand.u32 %v177, 4294901760
    %v572 = vsub.f32 %v177, %v571
    %v573 = vand.u32 %v572, 4294901760
    %v574 = vsub.f32 %v572, %v573
    %v575 = vand.u32 %v574, 4294901760
    %576 = vmatpush2.msra.mxu0 %v575
    %577 = vmatprep.subr.mxu0 0.0
    %v578 = vand.u32 %v176, 4294901760
    %v579 = vsub.f32 %v176, %v578
    %v580 = vand.u32 %v579, 4294901760
    %v581 = vsub.f32 %v579, %v580
    %v582 = vand.u32 %v581, 4294901760
    %583 = vmatpush2.msra.mxu0 %v582
    %584 = vmatprep.subr.mxu0 0.0
    %v585 = vand.u32 %v175, 4294901760
    %v586 = vsub.f32 %v175, %v585
    %v587 = vand.u32 %v586, 4294901760
    %v588 = vsub.f32 %v586, %v587
    %v589 = vand.u32 %v588, 4294901760
    %590 = vmatpush2.msra.mxu0 %v589
    %591 = vmatprep.subr.mxu0 0.0
    %v592 = vand.u32 %v174, 4294901760
    %v593 = vsub.f32 %v174, %v592
    %v594 = vand.u32 %v593, 4294901760
    %v595 = vsub.f32 %v593, %v594
    %v596 = vand.u32 %v595, 4294901760
    %597 = vmatpush2.msra.mxu0 %v596
    %598 = vmatprep.subr.mxu0 0.0
    %v599 = vand.u32 %v173, 4294901760
    %v600 = vsub.f32 %v173, %v599
    %v601 = vand.u32 %v600, 4294901760
    %v602 = vsub.f32 %v600, %v601
    %v603 = vand.u32 %v602, 4294901760
    %604 = vmatpush2.msra.mxu0 %v603
    %605 = vmatprep.subr.mxu0 0.0
    %v606 = vand.u32 %v172, 4294901760
    %v607 = vsub.f32 %v172, %v606
    %v608 = vand.u32 %v607, 4294901760
    %v609 = vsub.f32 %v607, %v608
    %v610 = vand.u32 %v609, 4294901760
    %611 = vmatpush2.msra.mxu0 %v610
    %612 = vmatprep.subr.mxu0 0.0
    %v613 = vand.u32 %v171, 4294901760
    %v614 = vsub.f32 %v171, %v613
    %v615 = vand.u32 %v614, 4294901760
    %v616 = vsub.f32 %v614, %v615
    %v617 = vand.u32 %v616, 4294901760
    %618 = vmatpush2.msra.mxu0 %v617
    %v619 = vand.u32 %v148, 4294901760
    %620 = vmatprep.mubr.f32.mxu0 %v619
    %v621 = vand.u32 %v147, 4294901760
    %622 = vmatmul.mubr.f32.gmra.mxu0 %v621
    %v623 = vpop.f32.mrf.mxu0
    %v624 = vadd.f32 %v392, %v623
    %v625 = vpop.f32.mrf.mxu0
    %626 = vdwg.mxu0
    %627 = vmatprep.subr.mxu0 0.0
    %v628 = vand.u32 %v170, 4294901760
    %v629 = vsub.f32 %v170, %v628
    %630 = vmatpush1.msra.mxu0 %v629
    %631 = vmatprep.subr.mxu0 0.0
    %v632 = vand.u32 %v169, 4294901760
    %v633 = vsub.f32 %v169, %v632
    %634 = vmatpush1.msra.mxu0 %v633
    %635 = vmatprep.subr.mxu0 0.0
    %v636 = vand.u32 %v168, 4294901760
    %v637 = vsub.f32 %v168, %v636
    %638 = vmatpush1.msra.mxu0 %v637
    %639 = vmatprep.subr.mxu0 0.0
    %v640 = vand.u32 %v167, 4294901760
    %v641 = vsub.f32 %v167, %v640
    %642 = vmatpush1.msra.mxu0 %v641
    %643 = vmatprep.subr.mxu0 0.0
    %v644 = vand.u32 %v166, 4294901760
    %v645 = vsub.f32 %v166, %v644
    %646 = vmatpush1.msra.mxu0 %v645
    %647 = vmatprep.subr.mxu0 0.0
    %v648 = vand.u32 %v165, 4294901760
    %v649 = vsub.f32 %v165, %v648
    %650 = vmatpush1.msra.mxu0 %v649
    %651 = vmatprep.subr.mxu0 0.0
    %v652 = vand.u32 %v164, 4294901760
    %v653 = vsub.f32 %v164, %v652
    %654 = vmatpush1.msra.mxu0 %v653
    %655 = vmatprep.subr.mxu0 0.0
    %v656 = vand.u32 %v163, 4294901760
    %v657 = vsub.f32 %v163, %v656
    %658 = vmatpush1.msra.mxu0 %v657
    %659 = vmatprep.subr.mxu0 0.0
    %v660 = vand.u32 %v162, 4294901760
    %v661 = vsub.f32 %v162, %v660
    %662 = vmatpush1.msra.mxu0 %v661
    %663 = vmatprep.subr.mxu0 0.0
    %v664 = vand.u32 %v161, 4294901760
    %v665 = vsub.f32 %v161, %v664
    %666 = vmatpush1.msra.mxu0 %v665
    %667 = vmatprep.subr.mxu0 0.0
    %v668 = vand.u32 %v160, 4294901760
    %v669 = vsub.f32 %v160, %v668
    %670 = vmatpush1.msra.mxu0 %v669
    %671 = vmatprep.subr.mxu0 0.0
    %v672 = vand.u32 %v159, 4294901760
    %v673 = vsub.f32 %v159, %v672
    %674 = vmatpush1.msra.mxu0 %v673
    %675 = vmatprep.subr.mxu0 0.0
    %v676 = vand.u32 %v158, 4294901760
    %v677 = vsub.f32 %v158, %v676
    %678 = vmatpush1.msra.mxu0 %v677
    %679 = vmatprep.subr.mxu0 0.0
    %v680 = vand.u32 %v157, 4294901760
    %v681 = vsub.f32 %v157, %v680
    %682 = vmatpush1.msra.mxu0 %v681
    %683 = vmatprep.subr.mxu0 0.0
    %v684 = vand.u32 %v156, 4294901760
    %v685 = vsub.f32 %v156, %v684
    %686 = vmatpush1.msra.mxu0 %v685
    %687 = vmatprep.subr.mxu0 0.0
    %v688 = vand.u32 %v155, 4294901760
    %v689 = vsub.f32 %v155, %v688
    %690 = vmatpush1.msra.mxu0 %v689
    %691 = vmatprep.subr.mxu0 0.0
    %v692 = vand.u32 %v186, 4294901760
    %v693 = vsub.f32 %v186, %v692
    %694 = vmatpush2.msra.mxu0 %v693
    %695 = vmatprep.subr.mxu0 0.0
    %v696 = vand.u32 %v185, 4294901760
    %v697 = vsub.f32 %v185, %v696
    %698 = vmatpush2.msra.mxu0 %v697
    %699 = vmatprep.subr.mxu0 0.0
    %v700 = vand.u32 %v184, 4294901760
    %v701 = vsub.f32 %v184, %v700
    %702 = vmatpush2.msra.mxu0 %v701
    %703 = vmatprep.subr.mxu0 0.0
    %v704 = vand.u32 %v183, 4294901760
    %v705 = vsub.f32 %v183, %v704
    %706 = vmatpush2.msra.mxu0 %v705
    %707 = vmatprep.subr.mxu0 0.0
    %v708 = vand.u32 %v182, 4294901760
    %v709 = vsub.f32 %v182, %v708
    %710 = vmatpush2.msra.mxu0 %v709
    %711 = vmatprep.subr.mxu0 0.0
    %v712 = vand.u32 %v181, 4294901760
    %v713 = vsub.f32 %v181, %v712
    %714 = vmatpush2.msra.mxu0 %v713
    %715 = vmatprep.subr.mxu0 0.0
    %v716 = vand.u32 %v180, 4294901760
    %v717 = vsub.f32 %v180, %v716
    %718 = vmatpush2.msra.mxu0 %v717
    %719 = vmatprep.subr.mxu0 0.0
    %v720 = vand.u32 %v179, 4294901760
    %v721 = vsub.f32 %v179, %v720
    %722 = vmatpush2.msra.mxu0 %v721
    %723 = vmatprep.subr.mxu0 0.0
    %v724 = vand.u32 %v178, 4294901760
    %v725 = vsub.f32 %v178, %v724
    %726 = vmatpush2.msra.mxu0 %v725
    %727 = vmatprep.subr.mxu0 0.0
    %v728 = vand.u32 %v177, 4294901760
    %v729 = vsub.f32 %v177, %v728
    %730 = vmatpush2.msra.mxu0 %v729
    %731 = vmatprep.subr.mxu0 0.0
    %v732 = vand.u32 %v176, 4294901760
    %v733 = vsub.f32 %v176, %v732
    %734 = vmatpush2.msra.mxu0 %v733
    %735 = vmatprep.subr.mxu0 0.0
    %v736 = vand.u32 %v175, 4294901760
    %v737 = vsub.f32 %v175, %v736
    %738 = vmatpush2.msra.mxu0 %v737
    %739 = vmatprep.subr.mxu0 0.0
    %v740 = vand.u32 %v174, 4294901760
    %v741 = vsub.f32 %v174, %v740
    %742 = vmatpush2.msra.mxu0 %v741
    %743 = vmatprep.subr.mxu0 0.0
    %v744 = vand.u32 %v173, 4294901760
    %v745 = vsub.f32 %v173, %v744
    %746 = vmatpush2.msra.mxu0 %v745
    %747 = vmatprep.subr.mxu0 0.0
    %v748 = vand.u32 %v172, 4294901760
    %v749 = vsub.f32 %v172, %v748
    %750 = vmatpush2.msra.mxu0 %v749
    %751 = vmatprep.subr.mxu0 0.0
    %v752 = vand.u32 %v171, 4294901760
    %v753 = vsub.f32 %v171, %v752
    %754 = vmatpush2.msra.mxu0 %v753
    %v755 = vand.u32 %v148, 4294901760
    %v756 = vsub.f32 %v148, %v755
    %757 = vmatprep.mubr.f32.mxu0 %v756
    %v758 = vand.u32 %v147, 4294901760
    %v759 = vsub.f32 %v147, %v758
    %760 = vmatmul.mubr.f32.gmra.mxu0 %v759
    %v761 = vpop.f32.mrf.mxu0
    %v762 = vadd.f32 %v624, %v761
    %v763 = vpop.f32.mrf.mxu0
    %764 = vdwg.mxu0
    %765 = vmatprep.subr.mxu0 0.0
    %v766 = vand.u32 %v170, 4294901760
    %767 = vmatpush1.msra.mxu0 %v766
    %768 = vmatprep.subr.mxu0 0.0
    %v769 = vand.u32 %v169, 4294901760
    %770 = vmatpush1.msra.mxu0 %v769
    %771 = vmatprep.subr.mxu0 0.0
    %v772 = vand.u32 %v168, 4294901760
    %773 = vmatpush1.msra.mxu0 %v772
    %774 = vmatprep.subr.mxu0 0.0
    %v775 = vand.u32 %v167, 4294901760
    %776 = vmatpush1.msra.mxu0 %v775
    %777 = vmatprep.subr.mxu0 0.0
    %v778 = vand.u32 %v166, 4294901760
    %779 = vmatpush1.msra.mxu0 %v778
    %780 = vmatprep.subr.mxu0 0.0
    %v781 = vand.u32 %v165, 4294901760
    %782 = vmatpush1.msra.mxu0 %v781
    %783 = vmatprep.subr.mxu0 0.0
    %v784 = vand.u32 %v164, 4294901760
    %785 = vmatpush1.msra.mxu0 %v784
    %786 = vmatprep.subr.mxu0 0.0
    %v787 = vand.u32 %v163, 4294901760
    %788 = vmatpush1.msra.mxu0 %v787
    %789 = vmatprep.subr.mxu0 0.0
    %v790 = vand.u32 %v162, 4294901760
    %791 = vmatpush1.msra.mxu0 %v790
    %792 = vmatprep.subr.mxu0 0.0
    %v793 = vand.u32 %v161, 4294901760
    %794 = vmatpush1.msra.mxu0 %v793
    %795 = vmatprep.subr.mxu0 0.0
    %v796 = vand.u32 %v160, 4294901760
    %797 = vmatpush1.msra.mxu0 %v796
    %798 = vmatprep.subr.mxu0 0.0
    %v799 = vand.u32 %v159, 4294901760
    %800 = vmatpush1.msra.mxu0 %v799
    %801 = vmatprep.subr.mxu0 0.0
    %v802 = vand.u32 %v158, 4294901760
    %803 = vmatpush1.msra.mxu0 %v802
    %804 = vmatprep.subr.mxu0 0.0
    %v805 = vand.u32 %v157, 4294901760
    %806 = vmatpush1.msra.mxu0 %v805
    %807 = vmatprep.subr.mxu0 0.0
    %v808 = vand.u32 %v156, 4294901760
    %809 = vmatpush1.msra.mxu0 %v808
    %810 = vmatprep.subr.mxu0 0.0
    %v811 = vand.u32 %v155, 4294901760
    %812 = vmatpush1.msra.mxu0 %v811
    %813 = vmatprep.subr.mxu0 0.0
    %v814 = vand.u32 %v186, 4294901760
    %815 = vmatpush2.msra.mxu0 %v814
    %816 = vmatprep.subr.mxu0 0.0
    %v817 = vand.u32 %v185, 4294901760
    %818 = vmatpush2.msra.mxu0 %v817
    %819 = vmatprep.subr.mxu0 0.0
    %v820 = vand.u32 %v184, 4294901760
    %821 = vmatpush2.msra.mxu0 %v820
    %822 = vmatprep.subr.mxu0 0.0
    %v823 = vand.u32 %v183, 4294901760
    %824 = vmatpush2.msra.mxu0 %v823
    %825 = vmatprep.subr.mxu0 0.0
    %v826 = vand.u32 %v182, 4294901760
    %827 = vmatpush2.msra.mxu0 %v826
    %828 = vmatprep.subr.mxu0 0.0
    %v829 = vand.u32 %v181, 4294901760
    %830 = vmatpush2.msra.mxu0 %v829
    %831 = vmatprep.subr.mxu0 0.0
    %v832 = vand.u32 %v180, 4294901760
    %833 = vmatpush2.msra.mxu0 %v832
    %834 = vmatprep.subr.mxu0 0.0
    %v835 = vand.u32 %v179, 4294901760
    %836 = vmatpush2.msra.mxu0 %v835
    %837 = vmatprep.subr.mxu0 0.0
    %v838 = vand.u32 %v178, 4294901760
    %839 = vmatpush2.msra.mxu0 %v838
    %840 = vmatprep.subr.mxu0 0.0
    %v841 = vand.u32 %v177, 4294901760
    %842 = vmatpush2.msra.mxu0 %v841
    %843 = vmatprep.subr.mxu0 0.0
    %v844 = vand.u32 %v176, 4294901760
    %845 = vmatpush2.msra.mxu0 %v844
    %846 = vmatprep.subr.mxu0 0.0
    %v847 = vand.u32 %v175, 4294901760
    %848 = vmatpush2.msra.mxu0 %v847
    %849 = vmatprep.subr.mxu0 0.0
    %v850 = vand.u32 %v174, 4294901760
    %851 = vmatpush2.msra.mxu0 %v850
    %852 = vmatprep.subr.mxu0 0.0
    %v853 = vand.u32 %v173, 4294901760
    %854 = vmatpush2.msra.mxu0 %v853
    %855 = vmatprep.subr.mxu0 0.0
    %v856 = vand.u32 %v172, 4294901760
    %857 = vmatpush2.msra.mxu0 %v856
    %858 = vmatprep.subr.mxu0 0.0
    %v859 = vand.u32 %v171, 4294901760
    %860 = vmatpush2.msra.mxu0 %v859
    %v861 = vand.u32 %v148, 4294901760
    %v862 = vsub.f32 %v148, %v861
    %v863 = vand.u32 %v862, 4294901760
    %864 = vmatprep.mubr.f32.mxu0 %v863
    %v865 = vand.u32 %v147, 4294901760
    %v866 = vsub.f32 %v147, %v865
    %v867 = vand.u32 %v866, 4294901760
    %868 = vmatmul.mubr.f32.gmra.mxu0 %v867
    %v869 = vpop.f32.mrf.mxu0
    %v870 = vadd.f32 %v762, %v869
    %v871 = vpop.f32.mrf.mxu0
    %872 = vdwg.mxu0
    %873 = vmatprep.subr.mxu0 0.0
    %v874 = vand.u32 %v170, 4294901760
    %v875 = vsub.f32 %v170, %v874
    %v876 = vand.u32 %v875, 4294901760
    %877 = vmatpush1.msra.mxu0 %v876
    %878 = vmatprep.subr.mxu0 0.0
    %v879 = vand.u32 %v169, 4294901760
    %v880 = vsub.f32 %v169, %v879
    %v881 = vand.u32 %v880, 4294901760
    %882 = vmatpush1.msra.mxu0 %v881
    %883 = vmatprep.subr.mxu0 0.0
    %v884 = vand.u32 %v168, 4294901760
    %v885 = vsub.f32 %v168, %v884
    %v886 = vand.u32 %v885, 4294901760
    %887 = vmatpush1.msra.mxu0 %v886
    %888 = vmatprep.subr.mxu0 0.0
    %v889 = vand.u32 %v167, 4294901760
    %v890 = vsub.f32 %v167, %v889
    %v891 = vand.u32 %v890, 4294901760
    %892 = vmatpush1.msra.mxu0 %v891
    %893 = vmatprep.subr.mxu0 0.0
    %v894 = vand.u32 %v166, 4294901760
    %v895 = vsub.f32 %v166, %v894
    %v896 = vand.u32 %v895, 4294901760
    %897 = vmatpush1.msra.mxu0 %v896
    %898 = vmatprep.subr.mxu0 0.0
    %v899 = vand.u32 %v165, 4294901760
    %v900 = vsub.f32 %v165, %v899
    %v901 = vand.u32 %v900, 4294901760
    %902 = vmatpush1.msra.mxu0 %v901
    %903 = vmatprep.subr.mxu0 0.0
    %v904 = vand.u32 %v164, 4294901760
    %v905 = vsub.f32 %v164, %v904
    %v906 = vand.u32 %v905, 4294901760
    %907 = vmatpush1.msra.mxu0 %v906
    %908 = vmatprep.subr.mxu0 0.0
    %v909 = vand.u32 %v163, 4294901760
    %v910 = vsub.f32 %v163, %v909
    %v911 = vand.u32 %v910, 4294901760
    %912 = vmatpush1.msra.mxu0 %v911
    %913 = vmatprep.subr.mxu0 0.0
    %v914 = vand.u32 %v162, 4294901760
    %v915 = vsub.f32 %v162, %v914
    %v916 = vand.u32 %v915, 4294901760
    %917 = vmatpush1.msra.mxu0 %v916
    %918 = vmatprep.subr.mxu0 0.0
    %v919 = vand.u32 %v161, 4294901760
    %v920 = vsub.f32 %v161, %v919
    %v921 = vand.u32 %v920, 4294901760
    %922 = vmatpush1.msra.mxu0 %v921
    %923 = vmatprep.subr.mxu0 0.0
    %v924 = vand.u32 %v160, 4294901760
    %v925 = vsub.f32 %v160, %v924
    %v926 = vand.u32 %v925, 4294901760
    %927 = vmatpush1.msra.mxu0 %v926
    %928 = vmatprep.subr.mxu0 0.0
    %v929 = vand.u32 %v159, 4294901760
    %v930 = vsub.f32 %v159, %v929
    %v931 = vand.u32 %v930, 4294901760
    %932 = vmatpush1.msra.mxu0 %v931
    %933 = vmatprep.subr.mxu0 0.0
    %v934 = vand.u32 %v158, 4294901760
    %v935 = vsub.f32 %v158, %v934
    %v936 = vand.u32 %v935, 4294901760
    %937 = vmatpush1.msra.mxu0 %v936
    %938 = vmatprep.subr.mxu0 0.0
    %v939 = vand.u32 %v157, 4294901760
    %v940 = vsub.f32 %v157, %v939
    %v941 = vand.u32 %v940, 4294901760
    %942 = vmatpush1.msra.mxu0 %v941
    %943 = vmatprep.subr.mxu0 0.0
    %v944 = vand.u32 %v156, 4294901760
    %v945 = vsub.f32 %v156, %v944
    %v946 = vand.u32 %v945, 4294901760
    %947 = vmatpush1.msra.mxu0 %v946
    %948 = vmatprep.subr.mxu0 0.0
    %v949 = vand.u32 %v155, 4294901760
    %v950 = vsub.f32 %v155, %v949
    %v951 = vand.u32 %v950, 4294901760
    %952 = vmatpush1.msra.mxu0 %v951
    %953 = vmatprep.subr.mxu0 0.0
    %v954 = vand.u32 %v186, 4294901760
    %v955 = vsub.f32 %v186, %v954
    %v956 = vand.u32 %v955, 4294901760
    %957 = vmatpush2.msra.mxu0 %v956
    %958 = vmatprep.subr.mxu0 0.0
    %v959 = vand.u32 %v185, 4294901760
    %v960 = vsub.f32 %v185, %v959
    %v961 = vand.u32 %v960, 4294901760
    %962 = vmatpush2.msra.mxu0 %v961
    %963 = vmatprep.subr.mxu0 0.0
    %v964 = vand.u32 %v184, 4294901760
    %v965 = vsub.f32 %v184, %v964
    %v966 = vand.u32 %v965, 4294901760
    %967 = vmatpush2.msra.mxu0 %v966
    %968 = vmatprep.subr.mxu0 0.0
    %v969 = vand.u32 %v183, 4294901760
    %v970 = vsub.f32 %v183, %v969
    %v971 = vand.u32 %v970, 4294901760
    %972 = vmatpush2.msra.mxu0 %v971
    %973 = vmatprep.subr.mxu0 0.0
    %v974 = vand.u32 %v182, 4294901760
    %v975 = vsub.f32 %v182, %v974
    %v976 = vand.u32 %v975, 4294901760
    %977 = vmatpush2.msra.mxu0 %v976
    %978 = vmatprep.subr.mxu0 0.0
    %v979 = vand.u32 %v181, 4294901760
    %v980 = vsub.f32 %v181, %v979
    %v981 = vand.u32 %v980, 4294901760
    %982 = vmatpush2.msra.mxu0 %v981
    %983 = vmatprep.subr.mxu0 0.0
    %v984 = vand.u32 %v180, 4294901760
    %v985 = vsub.f32 %v180, %v984
    %v986 = vand.u32 %v985, 4294901760
    %987 = vmatpush2.msra.mxu0 %v986
    %988 = vmatprep.subr.mxu0 0.0
    %v989 = vand.u32 %v179, 4294901760
    %v990 = vsub.f32 %v179, %v989
    %v991 = vand.u32 %v990, 4294901760
    %992 = vmatpush2.msra.mxu0 %v991
    %993 = vmatprep.subr.mxu0 0.0
    %v994 = vand.u32 %v178, 4294901760
    %v995 = vsub.f32 %v178, %v994
    %v996 = vand.u32 %v995, 4294901760
    %997 = vmatpush2.msra.mxu0 %v996
    %998 = vmatprep.subr.mxu0 0.0
    %v999 = vand.u32 %v177, 4294901760
    %v1000 = vsub.f32 %v177, %v999
    %v1001 = vand.u32 %v1000, 4294901760
    %1002 = vmatpush2.msra.mxu0 %v1001
    %1003 = vmatprep.subr.mxu0 0.0
    %v1004 = vand.u32 %v176, 4294901760
    %v1005 = vsub.f32 %v176, %v1004
    %v1006 = vand.u32 %v1005, 4294901760
    %1007 = vmatpush2.msra.mxu0 %v1006
    %1008 = vmatprep.subr.mxu0 0.0
    %v1009 = vand.u32 %v175, 4294901760
    %v1010 = vsub.f32 %v175, %v1009
    %v1011 = vand.u32 %v1010, 4294901760
    %1012 = vmatpush2.msra.mxu0 %v1011
    %1013 = vmatprep.subr.mxu0 0.0
    %v1014 = vand.u32 %v174, 4294901760
    %v1015 = vsub.f32 %v174, %v1014
    %v1016 = vand.u32 %v1015, 4294901760
    %1017 = vmatpush2.msra.mxu0 %v1016
    %1018 = vmatprep.subr.mxu0 0.0
    %v1019 = vand.u32 %v173, 4294901760
    %v1020 = vsub.f32 %v173, %v1019
    %v1021 = vand.u32 %v1020, 4294901760
    %1022 = vmatpush2.msra.mxu0 %v1021
    %1023 = vmatprep.subr.mxu0 0.0
    %v1024 = vand.u32 %v172, 4294901760
    %v1025 = vsub.f32 %v172, %v1024
    %v1026 = vand.u32 %v1025, 4294901760
    %1027 = vmatpush2.msra.mxu0 %v1026
    %1028 = vmatprep.subr.mxu0 0.0
    %v1029 = vand.u32 %v171, 4294901760
    %v1030 = vsub.f32 %v171, %v1029
    %v1031 = vand.u32 %v1030, 4294901760
    %1032 = vmatpush2.msra.mxu0 %v1031
    %v1033 = vand.u32 %v148, 4294901760
    %1034 = vmatprep.mubr.f32.mxu0 %v1033
    %v1035 = vand.u32 %v147, 4294901760
    %1036 = vmatmul.mubr.f32.gmra.mxu0 %v1035
    %v1037 = vpop.f32.mrf.mxu0
    %v1038 = vadd.f32 %v870, %v1037
    %v1039 = vpop.f32.mrf.mxu0
    %1040 = vdwg.mxu0
    %1041 = vmatprep.subr.mxu0 0.0
    %v1042 = vand.u32 %v170, 4294901760
    %1043 = vmatpush1.msra.mxu0 %v1042
    %1044 = vmatprep.subr.mxu0 0.0
    %v1045 = vand.u32 %v169, 4294901760
    %1046 = vmatpush1.msra.mxu0 %v1045
    %1047 = vmatprep.subr.mxu0 0.0
    %v1048 = vand.u32 %v168, 4294901760
    %1049 = vmatpush1.msra.mxu0 %v1048
    %1050 = vmatprep.subr.mxu0 0.0
    %v1051 = vand.u32 %v167, 4294901760
    %1052 = vmatpush1.msra.mxu0 %v1051
    %1053 = vmatprep.subr.mxu0 0.0
    %v1054 = vand.u32 %v166, 4294901760
    %1055 = vmatpush1.msra.mxu0 %v1054
    %1056 = vmatprep.subr.mxu0 0.0
    %v1057 = vand.u32 %v165, 4294901760
    %1058 = vmatpush1.msra.mxu0 %v1057
    %1059 = vmatprep.subr.mxu0 0.0
    %v1060 = vand.u32 %v164, 4294901760
    %1061 = vmatpush1.msra.mxu0 %v1060
    %1062 = vmatprep.subr.mxu0 0.0
    %v1063 = vand.u32 %v163, 4294901760
    %1064 = vmatpush1.msra.mxu0 %v1063
    %1065 = vmatprep.subr.mxu0 0.0
    %v1066 = vand.u32 %v162, 4294901760
    %1067 = vmatpush1.msra.mxu0 %v1066
    %1068 = vmatprep.subr.mxu0 0.0
    %v1069 = vand.u32 %v161, 4294901760
    %1070 = vmatpush1.msra.mxu0 %v1069
    %1071 = vmatprep.subr.mxu0 0.0
    %v1072 = vand.u32 %v160, 4294901760
    %1073 = vmatpush1.msra.mxu0 %v1072
    %1074 = vmatprep.subr.mxu0 0.0
    %v1075 = vand.u32 %v159, 4294901760
    %1076 = vmatpush1.msra.mxu0 %v1075
    %1077 = vmatprep.subr.mxu0 0.0
    %v1078 = vand.u32 %v158, 4294901760
    %1079 = vmatpush1.msra.mxu0 %v1078
    %1080 = vmatprep.subr.mxu0 0.0
    %v1081 = vand.u32 %v157, 4294901760
    %1082 = vmatpush1.msra.mxu0 %v1081
    %1083 = vmatprep.subr.mxu0 0.0
    %v1084 = vand.u32 %v156, 4294901760
    %1085 = vmatpush1.msra.mxu0 %v1084
    %1086 = vmatprep.subr.mxu0 0.0
    %v1087 = vand.u32 %v155, 4294901760
    %1088 = vmatpush1.msra.mxu0 %v1087
    %1089 = vmatprep.subr.mxu0 0.0
    %v1090 = vand.u32 %v186, 4294901760
    %1091 = vmatpush2.msra.mxu0 %v1090
    %1092 = vmatprep.subr.mxu0 0.0
    %v1093 = vand.u32 %v185, 4294901760
    %1094 = vmatpush2.msra.mxu0 %v1093
    %1095 = vmatprep.subr.mxu0 0.0
    %v1096 = vand.u32 %v184, 4294901760
    %1097 = vmatpush2.msra.mxu0 %v1096
    %1098 = vmatprep.subr.mxu0 0.0
    %v1099 = vand.u32 %v183, 4294901760
    %1100 = vmatpush2.msra.mxu0 %v1099
    %1101 = vmatprep.subr.mxu0 0.0
    %v1102 = vand.u32 %v182, 4294901760
    %1103 = vmatpush2.msra.mxu0 %v1102
    %1104 = vmatprep.subr.mxu0 0.0
    %v1105 = vand.u32 %v181, 4294901760
    %1106 = vmatpush2.msra.mxu0 %v1105
    %1107 = vmatprep.subr.mxu0 0.0
    %v1108 = vand.u32 %v180, 4294901760
    %1109 = vmatpush2.msra.mxu0 %v1108
    %1110 = vmatprep.subr.mxu0 0.0
    %v1111 = vand.u32 %v179, 4294901760
    %1112 = vmatpush2.msra.mxu0 %v1111
    %1113 = vmatprep.subr.mxu0 0.0
    %v1114 = vand.u32 %v178, 4294901760
    %1115 = vmatpush2.msra.mxu0 %v1114
    %1116 = vmatprep.subr.mxu0 0.0
    %v1117 = vand.u32 %v177, 4294901760
    %1118 = vmatpush2.msra.mxu0 %v1117
    %1119 = vmatprep.subr.mxu0 0.0
    %v1120 = vand.u32 %v176, 4294901760
    %1121 = vmatpush2.msra.mxu0 %v1120
    %1122 = vmatprep.subr.mxu0 0.0
    %v1123 = vand.u32 %v175, 4294901760
    %1124 = vmatpush2.msra.mxu0 %v1123
    %1125 = vmatprep.subr.mxu0 0.0
    %v1126 = vand.u32 %v174, 4294901760
    %1127 = vmatpush2.msra.mxu0 %v1126
    %1128 = vmatprep.subr.mxu0 0.0
    %v1129 = vand.u32 %v173, 4294901760
    %1130 = vmatpush2.msra.mxu0 %v1129
    %1131 = vmatprep.subr.mxu0 0.0
    %v1132 = vand.u32 %v172, 4294901760
    %1133 = vmatpush2.msra.mxu0 %v1132
    %1134 = vmatprep.subr.mxu0 0.0
    %v1135 = vand.u32 %v171, 4294901760
    %1136 = vmatpush2.msra.mxu0 %v1135
    %v1137 = vand.u32 %v148, 4294901760
    %1138 = vmatprep.mubr.f32.mxu0 %v1137
    %v1139 = vand.u32 %v147, 4294901760
    %1140 = vmatmul.mubr.f32.gmra.mxu0 %v1139
    %v1141 = vpop.f32.mrf.mxu0
    %v1142 = vadd.f32 %v1038, %v1141
    %v1143 = vpop.f32.mrf.mxu0
    %1144 = vdwg.mxu0
    %1145 = vmatprep.subr.mxu0 0.0
    %v1146 = vand.u32 %v202, 4294901760
    %1147 = vmatpush1.msra.mxu0 %v1146
    %1148 = vmatprep.subr.mxu0 0.0
    %v1149 = vand.u32 %v201, 4294901760
    %1150 = vmatpush1.msra.mxu0 %v1149
    %1151 = vmatprep.subr.mxu0 0.0
    %v1152 = vand.u32 %v200, 4294901760
    %1153 = vmatpush1.msra.mxu0 %v1152
    %1154 = vmatprep.subr.mxu0 0.0
    %v1155 = vand.u32 %v199, 4294901760
    %1156 = vmatpush1.msra.mxu0 %v1155
    %1157 = vmatprep.subr.mxu0 0.0
    %v1158 = vand.u32 %v198, 4294901760
    %1159 = vmatpush1.msra.mxu0 %v1158
    %1160 = vmatprep.subr.mxu0 0.0
    %v1161 = vand.u32 %v197, 4294901760
    %1162 = vmatpush1.msra.mxu0 %v1161
    %1163 = vmatprep.subr.mxu0 0.0
    %v1164 = vand.u32 %v196, 4294901760
    %1165 = vmatpush1.msra.mxu0 %v1164
    %1166 = vmatprep.subr.mxu0 0.0
    %v1167 = vand.u32 %v195, 4294901760
    %1168 = vmatpush1.msra.mxu0 %v1167
    %1169 = vmatprep.subr.mxu0 0.0
    %v1170 = vand.u32 %v194, 4294901760
    %1171 = vmatpush1.msra.mxu0 %v1170
    %1172 = vmatprep.subr.mxu0 0.0
    %v1173 = vand.u32 %v193, 4294901760
    %1174 = vmatpush1.msra.mxu0 %v1173
    %1175 = vmatprep.subr.mxu0 0.0
    %v1176 = vand.u32 %v192, 4294901760
    %1177 = vmatpush1.msra.mxu0 %v1176
    %1178 = vmatprep.subr.mxu0 0.0
    %v1179 = vand.u32 %v191, 4294901760
    %1180 = vmatpush1.msra.mxu0 %v1179
    %1181 = vmatprep.subr.mxu0 0.0
    %v1182 = vand.u32 %v190, 4294901760
    %1183 = vmatpush1.msra.mxu0 %v1182
    %1184 = vmatprep.subr.mxu0 0.0
    %v1185 = vand.u32 %v189, 4294901760
    %1186 = vmatpush1.msra.mxu0 %v1185
    %1187 = vmatprep.subr.mxu0 0.0
    %v1188 = vand.u32 %v188, 4294901760
    %1189 = vmatpush1.msra.mxu0 %v1188
    %1190 = vmatprep.subr.mxu0 0.0
    %v1191 = vand.u32 %v187, 4294901760
    %1192 = vmatpush1.msra.mxu0 %v1191
    %1193 = vmatprep.subr.mxu0 0.0
    %v1194 = vand.u32 %v218, 4294901760
    %1195 = vmatpush2.msra.mxu0 %v1194
    %1196 = vmatprep.subr.mxu0 0.0
    %v1197 = vand.u32 %v217, 4294901760
    %1198 = vmatpush2.msra.mxu0 %v1197
    %1199 = vmatprep.subr.mxu0 0.0
    %v1200 = vand.u32 %v216, 4294901760
    %1201 = vmatpush2.msra.mxu0 %v1200
    %1202 = vmatprep.subr.mxu0 0.0
    %v1203 = vand.u32 %v215, 4294901760
    %1204 = vmatpush2.msra.mxu0 %v1203
    %1205 = vmatprep.subr.mxu0 0.0
    %v1206 = vand.u32 %v214, 4294901760
    %1207 = vmatpush2.msra.mxu0 %v1206
    %1208 = vmatprep.subr.mxu0 0.0
    %v1209 = vand.u32 %v213, 4294901760
    %1210 = vmatpush2.msra.mxu0 %v1209
    %1211 = vmatprep.subr.mxu0 0.0
    %v1212 = vand.u32 %v212, 4294901760
    %1213 = vmatpush2.msra.mxu0 %v1212
    %1214 = vmatprep.subr.mxu0 0.0
    %v1215 = vand.u32 %v211, 4294901760
    %1216 = vmatpush2.msra.mxu0 %v1215
    %1217 = vmatprep.subr.mxu0 0.0
    %v1218 = vand.u32 %v210, 4294901760
    %1219 = vmatpush2.msra.mxu0 %v1218
    %1220 = vmatprep.subr.mxu0 0.0
    %v1221 = vand.u32 %v209, 4294901760
    %1222 = vmatpush2.msra.mxu0 %v1221
    %1223 = vmatprep.subr.mxu0 0.0
    %v1224 = vand.u32 %v208, 4294901760
    %1225 = vmatpush2.msra.mxu0 %v1224
    %1226 = vmatprep.subr.mxu0 0.0
    %v1227 = vand.u32 %v207, 4294901760
    %1228 = vmatpush2.msra.mxu0 %v1227
    %1229 = vmatprep.subr.mxu0 0.0
    %v1230 = vand.u32 %v206, 4294901760
    %1231 = vmatpush2.msra.mxu0 %v1230
    %1232 = vmatprep.subr.mxu0 0.0
    %v1233 = vand.u32 %v205, 4294901760
    %1234 = vmatpush2.msra.mxu0 %v1233
    %1235 = vmatprep.subr.mxu0 0.0
    %v1236 = vand.u32 %v204, 4294901760
    %1237 = vmatpush2.msra.mxu0 %v1236
    %1238 = vmatprep.subr.mxu0 0.0
    %v1239 = vand.u32 %v203, 4294901760
    %1240 = vmatpush2.msra.mxu0 %v1239
    %v1241 = vand.u32 %v150, 4294901760
    %v1242 = vsub.f32 %v150, %v1241
    %v1243 = vand.u32 %v1242, 4294901760
    %v1244 = vsub.f32 %v1242, %v1243
    %v1245 = vand.u32 %v1244, 4294901760
    %1246 = vmatprep.mubr.f32.mxu0 %v1245
    %v1247 = vand.u32 %v149, 4294901760
    %v1248 = vsub.f32 %v149, %v1247
    %v1249 = vand.u32 %v1248, 4294901760
    %v1250 = vsub.f32 %v1248, %v1249
    %v1251 = vand.u32 %v1250, 4294901760
    %1252 = vmatmul.mubr.f32.gmra.mxu0 %v1251
    %v1253 = vpop.f32.mrf.mxu0
    %v1254 = vadd.f32 %v1142, %v1253
    %v1255 = vpop.f32.mrf.mxu0
    %1256 = vdwg.mxu0
    %1257 = vmatprep.subr.mxu0 0.0
    %v1258 = vand.u32 %v202, 4294901760
    %v1259 = vsub.f32 %v202, %v1258
    %v1260 = vand.u32 %v1259, 4294901760
    %v1261 = vsub.f32 %v1259, %v1260
    %v1262 = vand.u32 %v1261, 4294901760
    %1263 = vmatpush1.msra.mxu0 %v1262
    %1264 = vmatprep.subr.mxu0 0.0
    %v1265 = vand.u32 %v201, 4294901760
    %v1266 = vsub.f32 %v201, %v1265
    %v1267 = vand.u32 %v1266, 4294901760
    %v1268 = vsub.f32 %v1266, %v1267
    %v1269 = vand.u32 %v1268, 4294901760
    %1270 = vmatpush1.msra.mxu0 %v1269
    %1271 = vmatprep.subr.mxu0 0.0
    %v1272 = vand.u32 %v200, 4294901760
    %v1273 = vsub.f32 %v200, %v1272
    %v1274 = vand.u32 %v1273, 4294901760
    %v1275 = vsub.f32 %v1273, %v1274
    %v1276 = vand.u32 %v1275, 4294901760
    %1277 = vmatpush1.msra.mxu0 %v1276
    %1278 = vmatprep.subr.mxu0 0.0
    %v1279 = vand.u32 %v199, 4294901760
    %v1280 = vsub.f32 %v199, %v1279
    %v1281 = vand.u32 %v1280, 4294901760
    %v1282 = vsub.f32 %v1280, %v1281
    %v1283 = vand.u32 %v1282, 4294901760
    %1284 = vmatpush1.msra.mxu0 %v1283
    %1285 = vmatprep.subr.mxu0 0.0
    %v1286 = vand.u32 %v198, 4294901760
    %v1287 = vsub.f32 %v198, %v1286
    %v1288 = vand.u32 %v1287, 4294901760
    %v1289 = vsub.f32 %v1287, %v1288
    %v1290 = vand.u32 %v1289, 4294901760
    %1291 = vmatpush1.msra.mxu0 %v1290
    %1292 = vmatprep.subr.mxu0 0.0
    %v1293 = vand.u32 %v197, 4294901760
    %v1294 = vsub.f32 %v197, %v1293
    %v1295 = vand.u32 %v1294, 4294901760
    %v1296 = vsub.f32 %v1294, %v1295
    %v1297 = vand.u32 %v1296, 4294901760
    %1298 = vmatpush1.msra.mxu0 %v1297
    %1299 = vmatprep.subr.mxu0 0.0
    %v1300 = vand.u32 %v196, 4294901760
    %v1301 = vsub.f32 %v196, %v1300
    %v1302 = vand.u32 %v1301, 4294901760
    %v1303 = vsub.f32 %v1301, %v1302
    %v1304 = vand.u32 %v1303, 4294901760
    %1305 = vmatpush1.msra.mxu0 %v1304
    %1306 = vmatprep.subr.mxu0 0.0
    %v1307 = vand.u32 %v195, 4294901760
    %v1308 = vsub.f32 %v195, %v1307
    %v1309 = vand.u32 %v1308, 4294901760
    %v1310 = vsub.f32 %v1308, %v1309
    %v1311 = vand.u32 %v1310, 4294901760
    %1312 = vmatpush1.msra.mxu0 %v1311
    %1313 = vmatprep.subr.mxu0 0.0
    %v1314 = vand.u32 %v194, 4294901760
    %v1315 = vsub.f32 %v194, %v1314
    %v1316 = vand.u32 %v1315, 4294901760
    %v1317 = vsub.f32 %v1315, %v1316
    %v1318 = vand.u32 %v1317, 4294901760
    %1319 = vmatpush1.msra.mxu0 %v1318
    %1320 = vmatprep.subr.mxu0 0.0
    %v1321 = vand.u32 %v193, 4294901760
    %v1322 = vsub.f32 %v193, %v1321
    %v1323 = vand.u32 %v1322, 4294901760
    %v1324 = vsub.f32 %v1322, %v1323
    %v1325 = vand.u32 %v1324, 4294901760
    %1326 = vmatpush1.msra.mxu0 %v1325
    %1327 = vmatprep.subr.mxu0 0.0
    %v1328 = vand.u32 %v192, 4294901760
    %v1329 = vsub.f32 %v192, %v1328
    %v1330 = vand.u32 %v1329, 4294901760
    %v1331 = vsub.f32 %v1329, %v1330
    %v1332 = vand.u32 %v1331, 4294901760
    %1333 = vmatpush1.msra.mxu0 %v1332
    %1334 = vmatprep.subr.mxu0 0.0
    %v1335 = vand.u32 %v191, 4294901760
    %v1336 = vsub.f32 %v191, %v1335
    %v1337 = vand.u32 %v1336, 4294901760
    %v1338 = vsub.f32 %v1336, %v1337
    %v1339 = vand.u32 %v1338, 4294901760
    %1340 = vmatpush1.msra.mxu0 %v1339
    %1341 = vmatprep.subr.mxu0 0.0
    %v1342 = vand.u32 %v190, 4294901760
    %v1343 = vsub.f32 %v190, %v1342
    %v1344 = vand.u32 %v1343, 4294901760
    %v1345 = vsub.f32 %v1343, %v1344
    %v1346 = vand.u32 %v1345, 4294901760
    %1347 = vmatpush1.msra.mxu0 %v1346
    %1348 = vmatprep.subr.mxu0 0.0
    %v1349 = vand.u32 %v189, 4294901760
    %v1350 = vsub.f32 %v189, %v1349
    %v1351 = vand.u32 %v1350, 4294901760
    %v1352 = vsub.f32 %v1350, %v1351
    %v1353 = vand.u32 %v1352, 4294901760
    %1354 = vmatpush1.msra.mxu0 %v1353
    %1355 = vmatprep.subr.mxu0 0.0
    %v1356 = vand.u32 %v188, 4294901760
    %v1357 = vsub.f32 %v188, %v1356
    %v1358 = vand.u32 %v1357, 4294901760
    %v1359 = vsub.f32 %v1357, %v1358
    %v1360 = vand.u32 %v1359, 4294901760
    %1361 = vmatpush1.msra.mxu0 %v1360
    %1362 = vmatprep.subr.mxu0 0.0
    %v1363 = vand.u32 %v187, 4294901760
    %v1364 = vsub.f32 %v187, %v1363
    %v1365 = vand.u32 %v1364, 4294901760
    %v1366 = vsub.f32 %v1364, %v1365
    %v1367 = vand.u32 %v1366, 4294901760
    %1368 = vmatpush1.msra.mxu0 %v1367
    %1369 = vmatprep.subr.mxu0 0.0
    %v1370 = vand.u32 %v218, 4294901760
    %v1371 = vsub.f32 %v218, %v1370
    %v1372 = vand.u32 %v1371, 4294901760
    %v1373 = vsub.f32 %v1371, %v1372
    %v1374 = vand.u32 %v1373, 4294901760
    %1375 = vmatpush2.msra.mxu0 %v1374
    %1376 = vmatprep.subr.mxu0 0.0
    %v1377 = vand.u32 %v217, 4294901760
    %v1378 = vsub.f32 %v217, %v1377
    %v1379 = vand.u32 %v1378, 4294901760
    %v1380 = vsub.f32 %v1378, %v1379
    %v1381 = vand.u32 %v1380, 4294901760
    %1382 = vmatpush2.msra.mxu0 %v1381
    %1383 = vmatprep.subr.mxu0 0.0
    %v1384 = vand.u32 %v216, 4294901760
    %v1385 = vsub.f32 %v216, %v1384
    %v1386 = vand.u32 %v1385, 4294901760
    %v1387 = vsub.f32 %v1385, %v1386
    %v1388 = vand.u32 %v1387, 4294901760
    %1389 = vmatpush2.msra.mxu0 %v1388
    %1390 = vmatprep.subr.mxu0 0.0
    %v1391 = vand.u32 %v215, 4294901760
    %v1392 = vsub.f32 %v215, %v1391
    %v1393 = vand.u32 %v1392, 4294901760
    %v1394 = vsub.f32 %v1392, %v1393
    %v1395 = vand.u32 %v1394, 4294901760
    %1396 = vmatpush2.msra.mxu0 %v1395
    %1397 = vmatprep.subr.mxu0 0.0
    %v1398 = vand.u32 %v214, 4294901760
    %v1399 = vsub.f32 %v214, %v1398
    %v1400 = vand.u32 %v1399, 4294901760
    %v1401 = vsub.f32 %v1399, %v1400
    %v1402 = vand.u32 %v1401, 4294901760
    %1403 = vmatpush2.msra.mxu0 %v1402
    %1404 = vmatprep.subr.mxu0 0.0
    %v1405 = vand.u32 %v213, 4294901760
    %v1406 = vsub.f32 %v213, %v1405
    %v1407 = vand.u32 %v1406, 4294901760
    %v1408 = vsub.f32 %v1406, %v1407
    %v1409 = vand.u32 %v1408, 4294901760
    %1410 = vmatpush2.msra.mxu0 %v1409
    %1411 = vmatprep.subr.mxu0 0.0
    %v1412 = vand.u32 %v212, 4294901760
    %v1413 = vsub.f32 %v212, %v1412
    %v1414 = vand.u32 %v1413, 4294901760
    %v1415 = vsub.f32 %v1413, %v1414
    %v1416 = vand.u32 %v1415, 4294901760
    %1417 = vmatpush2.msra.mxu0 %v1416
    %1418 = vmatprep.subr.mxu0 0.0
    %v1419 = vand.u32 %v211, 4294901760
    %v1420 = vsub.f32 %v211, %v1419
    %v1421 = vand.u32 %v1420, 4294901760
    %v1422 = vsub.f32 %v1420, %v1421
    %v1423 = vand.u32 %v1422, 4294901760
    %1424 = vmatpush2.msra.mxu0 %v1423
    %1425 = vmatprep.subr.mxu0 0.0
    %v1426 = vand.u32 %v210, 4294901760
    %v1427 = vsub.f32 %v210, %v1426
    %v1428 = vand.u32 %v1427, 4294901760
    %v1429 = vsub.f32 %v1427, %v1428
    %v1430 = vand.u32 %v1429, 4294901760
    %1431 = vmatpush2.msra.mxu0 %v1430
    %1432 = vmatprep.subr.mxu0 0.0
    %v1433 = vand.u32 %v209, 4294901760
    %v1434 = vsub.f32 %v209, %v1433
    %v1435 = vand.u32 %v1434, 4294901760
    %v1436 = vsub.f32 %v1434, %v1435
    %v1437 = vand.u32 %v1436, 4294901760
    %1438 = vmatpush2.msra.mxu0 %v1437
    %1439 = vmatprep.subr.mxu0 0.0
    %v1440 = vand.u32 %v208, 4294901760
    %v1441 = vsub.f32 %v208, %v1440
    %v1442 = vand.u32 %v1441, 4294901760
    %v1443 = vsub.f32 %v1441, %v1442
    %v1444 = vand.u32 %v1443, 4294901760
    %1445 = vmatpush2.msra.mxu0 %v1444
    %1446 = vmatprep.subr.mxu0 0.0
    %v1447 = vand.u32 %v207, 4294901760
    %v1448 = vsub.f32 %v207, %v1447
    %v1449 = vand.u32 %v1448, 4294901760
    %v1450 = vsub.f32 %v1448, %v1449
    %v1451 = vand.u32 %v1450, 4294901760
    %1452 = vmatpush2.msra.mxu0 %v1451
    %1453 = vmatprep.subr.mxu0 0.0
    %v1454 = vand.u32 %v206, 4294901760
    %v1455 = vsub.f32 %v206, %v1454
    %v1456 = vand.u32 %v1455, 4294901760
    %v1457 = vsub.f32 %v1455, %v1456
    %v1458 = vand.u32 %v1457, 4294901760
    %1459 = vmatpush2.msra.mxu0 %v1458
    %1460 = vmatprep.subr.mxu0 0.0
    %v1461 = vand.u32 %v205, 4294901760
    %v1462 = vsub.f32 %v205, %v1461
    %v1463 = vand.u32 %v1462, 4294901760
    %v1464 = vsub.f32 %v1462, %v1463
    %v1465 = vand.u32 %v1464, 4294901760
    %1466 = vmatpush2.msra.mxu0 %v1465
    %1467 = vmatprep.subr.mxu0 0.0
    %v1468 = vand.u32 %v204, 4294901760
    %v1469 = vsub.f32 %v204, %v1468
    %v1470 = vand.u32 %v1469, 4294901760
    %v1471 = vsub.f32 %v1469, %v1470
    %v1472 = vand.u32 %v1471, 4294901760
    %1473 = vmatpush2.msra.mxu0 %v1472
    %1474 = vmatprep.subr.mxu0 0.0
    %v1475 = vand.u32 %v203, 4294901760
    %v1476 = vsub.f32 %v203, %v1475
    %v1477 = vand.u32 %v1476, 4294901760
    %v1478 = vsub.f32 %v1476, %v1477
    %v1479 = vand.u32 %v1478, 4294901760
    %1480 = vmatpush2.msra.mxu0 %v1479
    %v1481 = vand.u32 %v150, 4294901760
    %1482 = vmatprep.mubr.f32.mxu0 %v1481
    %v1483 = vand.u32 %v149, 4294901760
    %1484 = vmatmul.mubr.f32.gmra.mxu0 %v1483
    %v1485 = vpop.f32.mrf.mxu0
    %v1486 = vadd.f32 %v1254, %v1485
    %v1487 = vpop.f32.mrf.mxu0
    %1488 = vdwg.mxu0
    %1489 = vmatprep.subr.mxu0 0.0
    %v1490 = vand.u32 %v202, 4294901760
    %v1491 = vsub.f32 %v202, %v1490
    %1492 = vmatpush1.msra.mxu0 %v1491
    %1493 = vmatprep.subr.mxu0 0.0
    %v1494 = vand.u32 %v201, 4294901760
    %v1495 = vsub.f32 %v201, %v1494
    %1496 = vmatpush1.msra.mxu0 %v1495
    %1497 = vmatprep.subr.mxu0 0.0
    %v1498 = vand.u32 %v200, 4294901760
    %v1499 = vsub.f32 %v200, %v1498
    %1500 = vmatpush1.msra.mxu0 %v1499
    %1501 = vmatprep.subr.mxu0 0.0
    %v1502 = vand.u32 %v199, 4294901760
    %v1503 = vsub.f32 %v199, %v1502
    %1504 = vmatpush1.msra.mxu0 %v1503
    %1505 = vmatprep.subr.mxu0 0.0
    %v1506 = vand.u32 %v198, 4294901760
    %v1507 = vsub.f32 %v198, %v1506
    %1508 = vmatpush1.msra.mxu0 %v1507
    %1509 = vmatprep.subr.mxu0 0.0
    %v1510 = vand.u32 %v197, 4294901760
    %v1511 = vsub.f32 %v197, %v1510
    %1512 = vmatpush1.msra.mxu0 %v1511
    %1513 = vmatprep.subr.mxu0 0.0
    %v1514 = vand.u32 %v196, 4294901760
    %v1515 = vsub.f32 %v196, %v1514
    %1516 = vmatpush1.msra.mxu0 %v1515
    %1517 = vmatprep.subr.mxu0 0.0
    %v1518 = vand.u32 %v195, 4294901760
    %v1519 = vsub.f32 %v195, %v1518
    %1520 = vmatpush1.msra.mxu0 %v1519
    %1521 = vmatprep.subr.mxu0 0.0
    %v1522 = vand.u32 %v194, 4294901760
    %v1523 = vsub.f32 %v194, %v1522
    %1524 = vmatpush1.msra.mxu0 %v1523
    %1525 = vmatprep.subr.mxu0 0.0
    %v1526 = vand.u32 %v193, 4294901760
    %v1527 = vsub.f32 %v193, %v1526
    %1528 = vmatpush1.msra.mxu0 %v1527
    %1529 = vmatprep.subr.mxu0 0.0
    %v1530 = vand.u32 %v192, 4294901760
    %v1531 = vsub.f32 %v192, %v1530
    %1532 = vmatpush1.msra.mxu0 %v1531
    %1533 = vmatprep.subr.mxu0 0.0
    %v1534 = vand.u32 %v191, 4294901760
    %v1535 = vsub.f32 %v191, %v1534
    %1536 = vmatpush1.msra.mxu0 %v1535
    %1537 = vmatprep.subr.mxu0 0.0
    %v1538 = vand.u32 %v190, 4294901760
    %v1539 = vsub.f32 %v190, %v1538
    %1540 = vmatpush1.msra.mxu0 %v1539
    %1541 = vmatprep.subr.mxu0 0.0
    %v1542 = vand.u32 %v189, 4294901760
    %v1543 = vsub.f32 %v189, %v1542
    %1544 = vmatpush1.msra.mxu0 %v1543
    %1545 = vmatprep.subr.mxu0 0.0
    %v1546 = vand.u32 %v188, 4294901760
    %v1547 = vsub.f32 %v188, %v1546
    %1548 = vmatpush1.msra.mxu0 %v1547
    %1549 = vmatprep.subr.mxu0 0.0
    %v1550 = vand.u32 %v187, 4294901760
    %v1551 = vsub.f32 %v187, %v1550
    %1552 = vmatpush1.msra.mxu0 %v1551
    %1553 = vmatprep.subr.mxu0 0.0
    %v1554 = vand.u32 %v218, 4294901760
    %v1555 = vsub.f32 %v218, %v1554
    %1556 = vmatpush2.msra.mxu0 %v1555
    %1557 = vmatprep.subr.mxu0 0.0
    %v1558 = vand.u32 %v217, 4294901760
    %v1559 = vsub.f32 %v217, %v1558
    %1560 = vmatpush2.msra.mxu0 %v1559
    %1561 = vmatprep.subr.mxu0 0.0
    %v1562 = vand.u32 %v216, 4294901760
    %v1563 = vsub.f32 %v216, %v1562
    %1564 = vmatpush2.msra.mxu0 %v1563
    %1565 = vmatprep.subr.mxu0 0.0
    %v1566 = vand.u32 %v215, 4294901760
    %v1567 = vsub.f32 %v215, %v1566
    %1568 = vmatpush2.msra.mxu0 %v1567
    %1569 = vmatprep.subr.mxu0 0.0
    %v1570 = vand.u32 %v214, 4294901760
    %v1571 = vsub.f32 %v214, %v1570
    %1572 = vmatpush2.msra.mxu0 %v1571
    %1573 = vmatprep.subr.mxu0 0.0
    %v1574 = vand.u32 %v213, 4294901760
    %v1575 = vsub.f32 %v213, %v1574
    %1576 = vmatpush2.msra.mxu0 %v1575
    %1577 = vmatprep.subr.mxu0 0.0
    %v1578 = vand.u32 %v212, 4294901760
    %v1579 = vsub.f32 %v212, %v1578
    %1580 = vmatpush2.msra.mxu0 %v1579
    %1581 = vmatprep.subr.mxu0 0.0
    %v1582 = vand.u32 %v211, 4294901760
    %v1583 = vsub.f32 %v211, %v1582
    %1584 = vmatpush2.msra.mxu0 %v1583
    %1585 = vmatprep.subr.mxu0 0.0
    %v1586 = vand.u32 %v210, 4294901760
    %v1587 = vsub.f32 %v210, %v1586
    %1588 = vmatpush2.msra.mxu0 %v1587
    %1589 = vmatprep.subr.mxu0 0.0
    %v1590 = vand.u32 %v209, 4294901760
    %v1591 = vsub.f32 %v209, %v1590
    %1592 = vmatpush2.msra.mxu0 %v1591
    %1593 = vmatprep.subr.mxu0 0.0
    %v1594 = vand.u32 %v208, 4294901760
    %v1595 = vsub.f32 %v208, %v1594
    %1596 = vmatpush2.msra.mxu0 %v1595
    %1597 = vmatprep.subr.mxu0 0.0
    %v1598 = vand.u32 %v207, 4294901760
    %v1599 = vsub.f32 %v207, %v1598
    %1600 = vmatpush2.msra.mxu0 %v1599
    %1601 = vmatprep.subr.mxu0 0.0
    %v1602 = vand.u32 %v206, 4294901760
    %v1603 = vsub.f32 %v206, %v1602
    %1604 = vmatpush2.msra.mxu0 %v1603
    %1605 = vmatprep.subr.mxu0 0.0
    %v1606 = vand.u32 %v205, 4294901760
    %v1607 = vsub.f32 %v205, %v1606
    %1608 = vmatpush2.msra.mxu0 %v1607
    %1609 = vmatprep.subr.mxu0 0.0
    %v1610 = vand.u32 %v204, 4294901760
    %v1611 = vsub.f32 %v204, %v1610
    %1612 = vmatpush2.msra.mxu0 %v1611
    %1613 = vmatprep.subr.mxu0 0.0
    %v1614 = vand.u32 %v203, 4294901760
    %v1615 = vsub.f32 %v203, %v1614
    %1616 = vmatpush2.msra.mxu0 %v1615
    %v1617 = vand.u32 %v150, 4294901760
    %v1618 = vsub.f32 %v150, %v1617
    %1619 = vmatprep.mubr.f32.mxu0 %v1618
    %v1620 = vand.u32 %v149, 4294901760
    %v1621 = vsub.f32 %v149, %v1620
    %1622 = vmatmul.mubr.f32.gmra.mxu0 %v1621
    %v1623 = vpop.f32.mrf.mxu0
    %v1624 = vadd.f32 %v1486, %v1623
    %v1625 = vpop.f32.mrf.mxu0
    %1626 = vdwg.mxu0
    %1627 = vmatprep.subr.mxu0 0.0
    %v1628 = vand.u32 %v202, 4294901760
    %1629 = vmatpush1.msra.mxu0 %v1628
    %1630 = vmatprep.subr.mxu0 0.0
    %v1631 = vand.u32 %v201, 4294901760
    %1632 = vmatpush1.msra.mxu0 %v1631
    %1633 = vmatprep.subr.mxu0 0.0
    %v1634 = vand.u32 %v200, 4294901760
    %1635 = vmatpush1.msra.mxu0 %v1634
    %1636 = vmatprep.subr.mxu0 0.0
    %v1637 = vand.u32 %v199, 4294901760
    %1638 = vmatpush1.msra.mxu0 %v1637
    %1639 = vmatprep.subr.mxu0 0.0
    %v1640 = vand.u32 %v198, 4294901760
    %1641 = vmatpush1.msra.mxu0 %v1640
    %1642 = vmatprep.subr.mxu0 0.0
    %v1643 = vand.u32 %v197, 4294901760
    %1644 = vmatpush1.msra.mxu0 %v1643
    %1645 = vmatprep.subr.mxu0 0.0
    %v1646 = vand.u32 %v196, 4294901760
    %1647 = vmatpush1.msra.mxu0 %v1646
    %1648 = vmatprep.subr.mxu0 0.0
    %v1649 = vand.u32 %v195, 4294901760
    %1650 = vmatpush1.msra.mxu0 %v1649
    %1651 = vmatprep.subr.mxu0 0.0
    %v1652 = vand.u32 %v194, 4294901760
    %1653 = vmatpush1.msra.mxu0 %v1652
    %1654 = vmatprep.subr.mxu0 0.0
    %v1655 = vand.u32 %v193, 4294901760
    %1656 = vmatpush1.msra.mxu0 %v1655
    %1657 = vmatprep.subr.mxu0 0.0
    %v1658 = vand.u32 %v192, 4294901760
    %1659 = vmatpush1.msra.mxu0 %v1658
    %1660 = vmatprep.subr.mxu0 0.0
    %v1661 = vand.u32 %v191, 4294901760
    %1662 = vmatpush1.msra.mxu0 %v1661
    %1663 = vmatprep.subr.mxu0 0.0
    %v1664 = vand.u32 %v190, 4294901760
    %1665 = vmatpush1.msra.mxu0 %v1664
    %1666 = vmatprep.subr.mxu0 0.0
    %v1667 = vand.u32 %v189, 4294901760
    %1668 = vmatpush1.msra.mxu0 %v1667
    %1669 = vmatprep.subr.mxu0 0.0
    %v1670 = vand.u32 %v188, 4294901760
    %1671 = vmatpush1.msra.mxu0 %v1670
    %1672 = vmatprep.subr.mxu0 0.0
    %v1673 = vand.u32 %v187, 4294901760
    %1674 = vmatpush1.msra.mxu0 %v1673
    %1675 = vmatprep.subr.mxu0 0.0
    %v1676 = vand.u32 %v218, 4294901760
    %1677 = vmatpush2.msra.mxu0 %v1676
    %1678 = vmatprep.subr.mxu0 0.0
    %v1679 = vand.u32 %v217, 4294901760
    %1680 = vmatpush2.msra.mxu0 %v1679
    %1681 = vmatprep.subr.mxu0 0.0
    %v1682 = vand.u32 %v216, 4294901760
    %1683 = vmatpush2.msra.mxu0 %v1682
    %1684 = vmatprep.subr.mxu0 0.0
    %v1685 = vand.u32 %v215, 4294901760
    %1686 = vmatpush2.msra.mxu0 %v1685
    %1687 = vmatprep.subr.mxu0 0.0
    %v1688 = vand.u32 %v214, 4294901760
    %1689 = vmatpush2.msra.mxu0 %v1688
    %1690 = vmatprep.subr.mxu0 0.0
    %v1691 = vand.u32 %v213, 4294901760
    %1692 = vmatpush2.msra.mxu0 %v1691
    %1693 = vmatprep.subr.mxu0 0.0
    %v1694 = vand.u32 %v212, 4294901760
    %1695 = vmatpush2.msra.mxu0 %v1694
    %1696 = vmatprep.subr.mxu0 0.0
    %v1697 = vand.u32 %v211, 4294901760
    %1698 = vmatpush2.msra.mxu0 %v1697
    %1699 = vmatprep.subr.mxu0 0.0
    %v1700 = vand.u32 %v210, 4294901760
    %1701 = vmatpush2.msra.mxu0 %v1700
    %1702 = vmatprep.subr.mxu0 0.0
    %v1703 = vand.u32 %v209, 4294901760
    %1704 = vmatpush2.msra.mxu0 %v1703
    %1705 = vmatprep.subr.mxu0 0.0
    %v1706 = vand.u32 %v208, 4294901760
    %1707 = vmatpush2.msra.mxu0 %v1706
    %1708 = vmatprep.subr.mxu0 0.0
    %v1709 = vand.u32 %v207, 4294901760
    %1710 = vmatpush2.msra.mxu0 %v1709
    %1711 = vmatprep.subr.mxu0 0.0
    %v1712 = vand.u32 %v206, 4294901760
    %1713 = vmatpush2.msra.mxu0 %v1712
    %1714 = vmatprep.subr.mxu0 0.0
    %v1715 = vand.u32 %v205, 4294901760
    %1716 = vmatpush2.msra.mxu0 %v1715
    %1717 = vmatprep.subr.mxu0 0.0
    %v1718 = vand.u32 %v204, 4294901760
    %1719 = vmatpush2.msra.mxu0 %v1718
    %1720 = vmatprep.subr.mxu0 0.0
    %v1721 = vand.u32 %v203, 4294901760
    %1722 = vmatpush2.msra.mxu0 %v1721
    %v1723 = vand.u32 %v150, 4294901760
    %v1724 = vsub.f32 %v150, %v1723
    %v1725 = vand.u32 %v1724, 4294901760
    %1726 = vmatprep.mubr.f32.mxu0 %v1725
    %v1727 = vand.u32 %v149, 4294901760
    %v1728 = vsub.f32 %v149, %v1727
    %v1729 = vand.u32 %v1728, 4294901760
    %1730 = vmatmul.mubr.f32.gmra.mxu0 %v1729
    %v1731 = vpop.f32.mrf.mxu0
    %v1732 = vadd.f32 %v1624, %v1731
    %v1733 = vpop.f32.mrf.mxu0
    %1734 = vdwg.mxu0
    %1735 = vmatprep.subr.mxu0 0.0
    %v1736 = vand.u32 %v202, 4294901760
    %v1737 = vsub.f32 %v202, %v1736
    %v1738 = vand.u32 %v1737, 4294901760
    %1739 = vmatpush1.msra.mxu0 %v1738
    %1740 = vmatprep.subr.mxu0 0.0
    %v1741 = vand.u32 %v201, 4294901760
    %v1742 = vsub.f32 %v201, %v1741
    %v1743 = vand.u32 %v1742, 4294901760
    %1744 = vmatpush1.msra.mxu0 %v1743
    %1745 = vmatprep.subr.mxu0 0.0
    %v1746 = vand.u32 %v200, 4294901760
    %v1747 = vsub.f32 %v200, %v1746
    %v1748 = vand.u32 %v1747, 4294901760
    %1749 = vmatpush1.msra.mxu0 %v1748
    %1750 = vmatprep.subr.mxu0 0.0
    %v1751 = vand.u32 %v199, 4294901760
    %v1752 = vsub.f32 %v199, %v1751
    %v1753 = vand.u32 %v1752, 4294901760
    %1754 = vmatpush1.msra.mxu0 %v1753
    %1755 = vmatprep.subr.mxu0 0.0
    %v1756 = vand.u32 %v198, 4294901760
    %v1757 = vsub.f32 %v198, %v1756
    %v1758 = vand.u32 %v1757, 4294901760
    %1759 = vmatpush1.msra.mxu0 %v1758
    %1760 = vmatprep.subr.mxu0 0.0
    %v1761 = vand.u32 %v197, 4294901760
    %v1762 = vsub.f32 %v197, %v1761
    %v1763 = vand.u32 %v1762, 4294901760
    %1764 = vmatpush1.msra.mxu0 %v1763
    %1765 = vmatprep.subr.mxu0 0.0
    %v1766 = vand.u32 %v196, 4294901760
    %v1767 = vsub.f32 %v196, %v1766
    %v1768 = vand.u32 %v1767, 4294901760
    %1769 = vmatpush1.msra.mxu0 %v1768
    %1770 = vmatprep.subr.mxu0 0.0
    %v1771 = vand.u32 %v195, 4294901760
    %v1772 = vsub.f32 %v195, %v1771
    %v1773 = vand.u32 %v1772, 4294901760
    %1774 = vmatpush1.msra.mxu0 %v1773
    %1775 = vmatprep.subr.mxu0 0.0
    %v1776 = vand.u32 %v194, 4294901760
    %v1777 = vsub.f32 %v194, %v1776
    %v1778 = vand.u32 %v1777, 4294901760
    %1779 = vmatpush1.msra.mxu0 %v1778
    %1780 = vmatprep.subr.mxu0 0.0
    %v1781 = vand.u32 %v193, 4294901760
    %v1782 = vsub.f32 %v193, %v1781
    %v1783 = vand.u32 %v1782, 4294901760
    %1784 = vmatpush1.msra.mxu0 %v1783
    %1785 = vmatprep.subr.mxu0 0.0
    %v1786 = vand.u32 %v192, 4294901760
    %v1787 = vsub.f32 %v192, %v1786
    %v1788 = vand.u32 %v1787, 4294901760
    %1789 = vmatpush1.msra.mxu0 %v1788
    %1790 = vmatprep.subr.mxu0 0.0
    %v1791 = vand.u32 %v191, 4294901760
    %v1792 = vsub.f32 %v191, %v1791
    %v1793 = vand.u32 %v1792, 4294901760
    %1794 = vmatpush1.msra.mxu0 %v1793
    %1795 = vmatprep.subr.mxu0 0.0
    %v1796 = vand.u32 %v190, 4294901760
    %v1797 = vsub.f32 %v190, %v1796
    %v1798 = vand.u32 %v1797, 4294901760
    %1799 = vmatpush1.msra.mxu0 %v1798
    %1800 = vmatprep.subr.mxu0 0.0
    %v1801 = vand.u32 %v189, 4294901760
    %v1802 = vsub.f32 %v189, %v1801
    %v1803 = vand.u32 %v1802, 4294901760
    %1804 = vmatpush1.msra.mxu0 %v1803
    %1805 = vmatprep.subr.mxu0 0.0
    %v1806 = vand.u32 %v188, 4294901760
    %v1807 = vsub.f32 %v188, %v1806
    %v1808 = vand.u32 %v1807, 4294901760
    %1809 = vmatpush1.msra.mxu0 %v1808
    %1810 = vmatprep.subr.mxu0 0.0
    %v1811 = vand.u32 %v187, 4294901760
    %v1812 = vsub.f32 %v187, %v1811
    %v1813 = vand.u32 %v1812, 4294901760
    %1814 = vmatpush1.msra.mxu0 %v1813
    %1815 = vmatprep.subr.mxu0 0.0
    %v1816 = vand.u32 %v218, 4294901760
    %v1817 = vsub.f32 %v218, %v1816
    %v1818 = vand.u32 %v1817, 4294901760
    %1819 = vmatpush2.msra.mxu0 %v1818
    %1820 = vmatprep.subr.mxu0 0.0
    %v1821 = vand.u32 %v217, 4294901760
    %v1822 = vsub.f32 %v217, %v1821
    %v1823 = vand.u32 %v1822, 4294901760
    %1824 = vmatpush2.msra.mxu0 %v1823
    %1825 = vmatprep.subr.mxu0 0.0
    %v1826 = vand.u32 %v216, 4294901760
    %v1827 = vsub.f32 %v216, %v1826
    %v1828 = vand.u32 %v1827, 4294901760
    %1829 = vmatpush2.msra.mxu0 %v1828
    %1830 = vmatprep.subr.mxu0 0.0
    %v1831 = vand.u32 %v215, 4294901760
    %v1832 = vsub.f32 %v215, %v1831
    %v1833 = vand.u32 %v1832, 4294901760
    %1834 = vmatpush2.msra.mxu0 %v1833
    %1835 = vmatprep.subr.mxu0 0.0
    %v1836 = vand.u32 %v214, 4294901760
    %v1837 = vsub.f32 %v214, %v1836
    %v1838 = vand.u32 %v1837, 4294901760
    %1839 = vmatpush2.msra.mxu0 %v1838
    %1840 = vmatprep.subr.mxu0 0.0
    %v1841 = vand.u32 %v213, 4294901760
    %v1842 = vsub.f32 %v213, %v1841
    %v1843 = vand.u32 %v1842, 4294901760
    %1844 = vmatpush2.msra.mxu0 %v1843
    %1845 = vmatprep.subr.mxu0 0.0
    %v1846 = vand.u32 %v212, 4294901760
    %v1847 = vsub.f32 %v212, %v1846
    %v1848 = vand.u32 %v1847, 4294901760
    %1849 = vmatpush2.msra.mxu0 %v1848
    %1850 = vmatprep.subr.mxu0 0.0
    %v1851 = vand.u32 %v211, 4294901760
    %v1852 = vsub.f32 %v211, %v1851
    %v1853 = vand.u32 %v1852, 4294901760
    %1854 = vmatpush2.msra.mxu0 %v1853
    %1855 = vmatprep.subr.mxu0 0.0
    %v1856 = vand.u32 %v210, 4294901760
    %v1857 = vsub.f32 %v210, %v1856
    %v1858 = vand.u32 %v1857, 4294901760
    %1859 = vmatpush2.msra.mxu0 %v1858
    %1860 = vmatprep.subr.mxu0 0.0
    %v1861 = vand.u32 %v209, 4294901760
    %v1862 = vsub.f32 %v209, %v1861
    %v1863 = vand.u32 %v1862, 4294901760
    %1864 = vmatpush2.msra.mxu0 %v1863
    %1865 = vmatprep.subr.mxu0 0.0
    %v1866 = vand.u32 %v208, 4294901760
    %v1867 = vsub.f32 %v208, %v1866
    %v1868 = vand.u32 %v1867, 4294901760
    %1869 = vmatpush2.msra.mxu0 %v1868
    %1870 = vmatprep.subr.mxu0 0.0
    %v1871 = vand.u32 %v207, 4294901760
    %v1872 = vsub.f32 %v207, %v1871
    %v1873 = vand.u32 %v1872, 4294901760
    %1874 = vmatpush2.msra.mxu0 %v1873
    %1875 = vmatprep.subr.mxu0 0.0
    %v1876 = vand.u32 %v206, 4294901760
    %v1877 = vsub.f32 %v206, %v1876
    %v1878 = vand.u32 %v1877, 4294901760
    %1879 = vmatpush2.msra.mxu0 %v1878
    %1880 = vmatprep.subr.mxu0 0.0
    %v1881 = vand.u32 %v205, 4294901760
    %v1882 = vsub.f32 %v205, %v1881
    %v1883 = vand.u32 %v1882, 4294901760
    %1884 = vmatpush2.msra.mxu0 %v1883
    %1885 = vmatprep.subr.mxu0 0.0
    %v1886 = vand.u32 %v204, 4294901760
    %v1887 = vsub.f32 %v204, %v1886
    %v1888 = vand.u32 %v1887, 4294901760
    %1889 = vmatpush2.msra.mxu0 %v1888
    %1890 = vmatprep.subr.mxu0 0.0
    %v1891 = vand.u32 %v203, 4294901760
    %v1892 = vsub.f32 %v203, %v1891
    %v1893 = vand.u32 %v1892, 4294901760
    %1894 = vmatpush2.msra.mxu0 %v1893
    %v1895 = vand.u32 %v150, 4294901760
    %1896 = vmatprep.mubr.f32.mxu0 %v1895
    %v1897 = vand.u32 %v149, 4294901760
    %1898 = vmatmul.mubr.f32.gmra.mxu0 %v1897
    %v1899 = vpop.f32.mrf.mxu0
    %v1900 = vadd.f32 %v1732, %v1899
    %v1901 = vpop.f32.mrf.mxu0
    %1902 = vdwg.mxu0
    %1903 = vmatprep.subr.mxu0 0.0
    %v1904 = vand.u32 %v202, 4294901760
    %1905 = vmatpush1.msra.mxu0 %v1904
    %1906 = vmatprep.subr.mxu0 0.0
    %v1907 = vand.u32 %v201, 4294901760
    %1908 = vmatpush1.msra.mxu0 %v1907
    %1909 = vmatprep.subr.mxu0 0.0
    %v1910 = vand.u32 %v200, 4294901760
    %1911 = vmatpush1.msra.mxu0 %v1910
    %1912 = vmatprep.subr.mxu0 0.0
    %v1913 = vand.u32 %v199, 4294901760
    %1914 = vmatpush1.msra.mxu0 %v1913
    %1915 = vmatprep.subr.mxu0 0.0
    %v1916 = vand.u32 %v198, 4294901760
    %1917 = vmatpush1.msra.mxu0 %v1916
    %1918 = vmatprep.subr.mxu0 0.0
    %v1919 = vand.u32 %v197, 4294901760
    %1920 = vmatpush1.msra.mxu0 %v1919
    %1921 = vmatprep.subr.mxu0 0.0
    %v1922 = vand.u32 %v196, 4294901760
    %1923 = vmatpush1.msra.mxu0 %v1922
    %1924 = vmatprep.subr.mxu0 0.0
    %v1925 = vand.u32 %v195, 4294901760
    %1926 = vmatpush1.msra.mxu0 %v1925
    %1927 = vmatprep.subr.mxu0 0.0
    %v1928 = vand.u32 %v194, 4294901760
    %1929 = vmatpush1.msra.mxu0 %v1928
    %1930 = vmatprep.subr.mxu0 0.0
    %v1931 = vand.u32 %v193, 4294901760
    %1932 = vmatpush1.msra.mxu0 %v1931
    %1933 = vmatprep.subr.mxu0 0.0
    %v1934 = vand.u32 %v192, 4294901760
    %1935 = vmatpush1.msra.mxu0 %v1934
    %1936 = vmatprep.subr.mxu0 0.0
    %v1937 = vand.u32 %v191, 4294901760
    %1938 = vmatpush1.msra.mxu0 %v1937
    %1939 = vmatprep.subr.mxu0 0.0
    %v1940 = vand.u32 %v190, 4294901760
    %1941 = vmatpush1.msra.mxu0 %v1940
    %1942 = vmatprep.subr.mxu0 0.0
    %v1943 = vand.u32 %v189, 4294901760
    %1944 = vmatpush1.msra.mxu0 %v1943
    %1945 = vmatprep.subr.mxu0 0.0
    %v1946 = vand.u32 %v188, 4294901760
    %1947 = vmatpush1.msra.mxu0 %v1946
    %1948 = vmatprep.subr.mxu0 0.0
    %v1949 = vand.u32 %v187, 4294901760
    %1950 = vmatpush1.msra.mxu0 %v1949
    %1951 = vmatprep.subr.mxu0 0.0
    %v1952 = vand.u32 %v218, 4294901760
    %1953 = vmatpush2.msra.mxu0 %v1952
    %1954 = vmatprep.subr.mxu0 0.0
    %v1955 = vand.u32 %v217, 4294901760
    %1956 = vmatpush2.msra.mxu0 %v1955
    %1957 = vmatprep.subr.mxu0 0.0
    %v1958 = vand.u32 %v216, 4294901760
    %1959 = vmatpush2.msra.mxu0 %v1958
    %1960 = vmatprep.subr.mxu0 0.0
    %v1961 = vand.u32 %v215, 4294901760
    %1962 = vmatpush2.msra.mxu0 %v1961
    %1963 = vmatprep.subr.mxu0 0.0
    %v1964 = vand.u32 %v214, 4294901760
    %1965 = vmatpush2.msra.mxu0 %v1964
    %1966 = vmatprep.subr.mxu0 0.0
    %v1967 = vand.u32 %v213, 4294901760
    %1968 = vmatpush2.msra.mxu0 %v1967
    %1969 = vmatprep.subr.mxu0 0.0
    %v1970 = vand.u32 %v212, 4294901760
    %1971 = vmatpush2.msra.mxu0 %v1970
    %1972 = vmatprep.subr.mxu0 0.0
    %v1973 = vand.u32 %v211, 4294901760
    %1974 = vmatpush2.msra.mxu0 %v1973
    %1975 = vmatprep.subr.mxu0 0.0
    %v1976 = vand.u32 %v210, 4294901760
    %1977 = vmatpush2.msra.mxu0 %v1976
    %1978 = vmatprep.subr.mxu0 0.0
    %v1979 = vand.u32 %v209, 4294901760
    %1980 = vmatpush2.msra.mxu0 %v1979
    %1981 = vmatprep.subr.mxu0 0.0
    %v1982 = vand.u32 %v208, 4294901760
    %1983 = vmatpush2.msra.mxu0 %v1982
    %1984 = vmatprep.subr.mxu0 0.0
    %v1985 = vand.u32 %v207, 4294901760
    %1986 = vmatpush2.msra.mxu0 %v1985
    %1987 = vmatprep.subr.mxu0 0.0
    %v1988 = vand.u32 %v206, 4294901760
    %1989 = vmatpush2.msra.mxu0 %v1988
    %1990 = vmatprep.subr.mxu0 0.0
    %v1991 = vand.u32 %v205, 4294901760
    %1992 = vmatpush2.msra.mxu0 %v1991
    %1993 = vmatprep.subr.mxu0 0.0
    %v1994 = vand.u32 %v204, 4294901760
    %1995 = vmatpush2.msra.mxu0 %v1994
    %1996 = vmatprep.subr.mxu0 0.0
    %v1997 = vand.u32 %v203, 4294901760
    %1998 = vmatpush2.msra.mxu0 %v1997
    %v1999 = vand.u32 %v150, 4294901760
    %2000 = vmatprep.mubr.f32.mxu0 %v1999
    %v2001 = vand.u32 %v149, 4294901760
    %2002 = vmatmul.mubr.f32.gmra.mxu0 %v2001
    %v2003 = vpop.f32.mrf.mxu0
    %v2004 = vadd.f32 %v1900, %v2003
    %v2005 = vpop.f32.mrf.mxu0
    %2006 = vdwg.mxu0
    %2007 = vmatprep.subr.mxu0 0.0
    %v2008 = vand.u32 %v234, 4294901760
    %2009 = vmatpush1.msra.mxu0 %v2008
    %2010 = vmatprep.subr.mxu0 0.0
    %v2011 = vand.u32 %v233, 4294901760
    %2012 = vmatpush1.msra.mxu0 %v2011
    %2013 = vmatprep.subr.mxu0 0.0
    %v2014 = vand.u32 %v232, 4294901760
    %2015 = vmatpush1.msra.mxu0 %v2014
    %2016 = vmatprep.subr.mxu0 0.0
    %v2017 = vand.u32 %v231, 4294901760
    %2018 = vmatpush1.msra.mxu0 %v2017
    %2019 = vmatprep.subr.mxu0 0.0
    %v2020 = vand.u32 %v230, 4294901760
    %2021 = vmatpush1.msra.mxu0 %v2020
    %2022 = vmatprep.subr.mxu0 0.0
    %v2023 = vand.u32 %v229, 4294901760
    %2024 = vmatpush1.msra.mxu0 %v2023
    %2025 = vmatprep.subr.mxu0 0.0
    %v2026 = vand.u32 %v228, 4294901760
    %2027 = vmatpush1.msra.mxu0 %v2026
    %2028 = vmatprep.subr.mxu0 0.0
    %v2029 = vand.u32 %v227, 4294901760
    %2030 = vmatpush1.msra.mxu0 %v2029
    %2031 = vmatprep.subr.mxu0 0.0
    %v2032 = vand.u32 %v226, 4294901760
    %2033 = vmatpush1.msra.mxu0 %v2032
    %2034 = vmatprep.subr.mxu0 0.0
    %v2035 = vand.u32 %v225, 4294901760
    %2036 = vmatpush1.msra.mxu0 %v2035
    %2037 = vmatprep.subr.mxu0 0.0
    %v2038 = vand.u32 %v224, 4294901760
    %2039 = vmatpush1.msra.mxu0 %v2038
    %2040 = vmatprep.subr.mxu0 0.0
    %v2041 = vand.u32 %v223, 4294901760
    %2042 = vmatpush1.msra.mxu0 %v2041
    %2043 = vmatprep.subr.mxu0 0.0
    %v2044 = vand.u32 %v222, 4294901760
    %2045 = vmatpush1.msra.mxu0 %v2044
    %2046 = vmatprep.subr.mxu0 0.0
    %v2047 = vand.u32 %v221, 4294901760
    %2048 = vmatpush1.msra.mxu0 %v2047
    %2049 = vmatprep.subr.mxu0 0.0
    %v2050 = vand.u32 %v220, 4294901760
    %2051 = vmatpush1.msra.mxu0 %v2050
    %2052 = vmatprep.subr.mxu0 0.0
    %v2053 = vand.u32 %v219, 4294901760
    %2054 = vmatpush1.msra.mxu0 %v2053
    %2055 = vmatprep.subr.mxu0 0.0
    %v2056 = vand.u32 %v250, 4294901760
    %2057 = vmatpush2.msra.mxu0 %v2056
    %2058 = vmatprep.subr.mxu0 0.0
    %v2059 = vand.u32 %v249, 4294901760
    %2060 = vmatpush2.msra.mxu0 %v2059
    %2061 = vmatprep.subr.mxu0 0.0
    %v2062 = vand.u32 %v248, 4294901760
    %2063 = vmatpush2.msra.mxu0 %v2062
    %2064 = vmatprep.subr.mxu0 0.0
    %v2065 = vand.u32 %v247, 4294901760
    %2066 = vmatpush2.msra.mxu0 %v2065
    %2067 = vmatprep.subr.mxu0 0.0
    %v2068 = vand.u32 %v246, 4294901760
    %2069 = vmatpush2.msra.mxu0 %v2068
    %2070 = vmatprep.subr.mxu0 0.0
    %v2071 = vand.u32 %v245, 4294901760
    %2072 = vmatpush2.msra.mxu0 %v2071
    %2073 = vmatprep.subr.mxu0 0.0
    %v2074 = vand.u32 %v244, 4294901760
    %2075 = vmatpush2.msra.mxu0 %v2074
    %2076 = vmatprep.subr.mxu0 0.0
    %v2077 = vand.u32 %v243, 4294901760
    %2078 = vmatpush2.msra.mxu0 %v2077
    %2079 = vmatprep.subr.mxu0 0.0
    %v2080 = vand.u32 %v242, 4294901760
    %2081 = vmatpush2.msra.mxu0 %v2080
    %2082 = vmatprep.subr.mxu0 0.0
    %v2083 = vand.u32 %v241, 4294901760
    %2084 = vmatpush2.msra.mxu0 %v2083
    %2085 = vmatprep.subr.mxu0 0.0
    %v2086 = vand.u32 %v240, 4294901760
    %2087 = vmatpush2.msra.mxu0 %v2086
    %2088 = vmatprep.subr.mxu0 0.0
    %v2089 = vand.u32 %v239, 4294901760
    %2090 = vmatpush2.msra.mxu0 %v2089
    %2091 = vmatprep.subr.mxu0 0.0
    %v2092 = vand.u32 %v238, 4294901760
    %2093 = vmatpush2.msra.mxu0 %v2092
    %2094 = vmatprep.subr.mxu0 0.0
    %v2095 = vand.u32 %v237, 4294901760
    %2096 = vmatpush2.msra.mxu0 %v2095
    %2097 = vmatprep.subr.mxu0 0.0
    %v2098 = vand.u32 %v236, 4294901760
    %2099 = vmatpush2.msra.mxu0 %v2098
    %2100 = vmatprep.subr.mxu0 0.0
    %v2101 = vand.u32 %v235, 4294901760
    %2102 = vmatpush2.msra.mxu0 %v2101
    %v2103 = vand.u32 %v152, 4294901760
    %v2104 = vsub.f32 %v152, %v2103
    %v2105 = vand.u32 %v2104, 4294901760
    %v2106 = vsub.f32 %v2104, %v2105
    %v2107 = vand.u32 %v2106, 4294901760
    %2108 = vmatprep.mubr.f32.mxu0 %v2107
    %v2109 = vand.u32 %v151, 4294901760
    %v2110 = vsub.f32 %v151, %v2109
    %v2111 = vand.u32 %v2110, 4294901760
    %v2112 = vsub.f32 %v2110, %v2111
    %v2113 = vand.u32 %v2112, 4294901760
    %2114 = vmatmul.mubr.f32.gmra.mxu0 %v2113
    %v2115 = vpop.f32.mrf.mxu0
    %v2116 = vadd.f32 %v2004, %v2115
    %v2117 = vpop.f32.mrf.mxu0
    %2118 = vdwg.mxu0
    %2119 = vmatprep.subr.mxu0 0.0
    %v2120 = vand.u32 %v234, 4294901760
    %v2121 = vsub.f32 %v234, %v2120
    %v2122 = vand.u32 %v2121, 4294901760
    %v2123 = vsub.f32 %v2121, %v2122
    %v2124 = vand.u32 %v2123, 4294901760
    %2125 = vmatpush1.msra.mxu0 %v2124
    %2126 = vmatprep.subr.mxu0 0.0
    %v2127 = vand.u32 %v233, 4294901760
    %v2128 = vsub.f32 %v233, %v2127
    %v2129 = vand.u32 %v2128, 4294901760
    %v2130 = vsub.f32 %v2128, %v2129
    %v2131 = vand.u32 %v2130, 4294901760
    %2132 = vmatpush1.msra.mxu0 %v2131
    %2133 = vmatprep.subr.mxu0 0.0
    %v2134 = vand.u32 %v232, 4294901760
    %v2135 = vsub.f32 %v232, %v2134
    %v2136 = vand.u32 %v2135, 4294901760
    %v2137 = vsub.f32 %v2135, %v2136
    %v2138 = vand.u32 %v2137, 4294901760
    %2139 = vmatpush1.msra.mxu0 %v2138
    %2140 = vmatprep.subr.mxu0 0.0
    %v2141 = vand.u32 %v231, 4294901760
    %v2142 = vsub.f32 %v231, %v2141
    %v2143 = vand.u32 %v2142, 4294901760
    %v2144 = vsub.f32 %v2142, %v2143
    %v2145 = vand.u32 %v2144, 4294901760
    %2146 = vmatpush1.msra.mxu0 %v2145
    %2147 = vmatprep.subr.mxu0 0.0
    %v2148 = vand.u32 %v230, 4294901760
    %v2149 = vsub.f32 %v230, %v2148
    %v2150 = vand.u32 %v2149, 4294901760
    %v2151 = vsub.f32 %v2149, %v2150
    %v2152 = vand.u32 %v2151, 4294901760
    %2153 = vmatpush1.msra.mxu0 %v2152
    %2154 = vmatprep.subr.mxu0 0.0
    %v2155 = vand.u32 %v229, 4294901760
    %v2156 = vsub.f32 %v229, %v2155
    %v2157 = vand.u32 %v2156, 4294901760
    %v2158 = vsub.f32 %v2156, %v2157
    %v2159 = vand.u32 %v2158, 4294901760
    %2160 = vmatpush1.msra.mxu0 %v2159
    %2161 = vmatprep.subr.mxu0 0.0
    %v2162 = vand.u32 %v228, 4294901760
    %v2163 = vsub.f32 %v228, %v2162
    %v2164 = vand.u32 %v2163, 4294901760
    %v2165 = vsub.f32 %v2163, %v2164
    %v2166 = vand.u32 %v2165, 4294901760
    %2167 = vmatpush1.msra.mxu0 %v2166
    %2168 = vmatprep.subr.mxu0 0.0
    %v2169 = vand.u32 %v227, 4294901760
    %v2170 = vsub.f32 %v227, %v2169
    %v2171 = vand.u32 %v2170, 4294901760
    %v2172 = vsub.f32 %v2170, %v2171
    %v2173 = vand.u32 %v2172, 4294901760
    %2174 = vmatpush1.msra.mxu0 %v2173
    %2175 = vmatprep.subr.mxu0 0.0
    %v2176 = vand.u32 %v226, 4294901760
    %v2177 = vsub.f32 %v226, %v2176
    %v2178 = vand.u32 %v2177, 4294901760
    %v2179 = vsub.f32 %v2177, %v2178
    %v2180 = vand.u32 %v2179, 4294901760
    %2181 = vmatpush1.msra.mxu0 %v2180
    %2182 = vmatprep.subr.mxu0 0.0
    %v2183 = vand.u32 %v225, 4294901760
    %v2184 = vsub.f32 %v225, %v2183
    %v2185 = vand.u32 %v2184, 4294901760
    %v2186 = vsub.f32 %v2184, %v2185
    %v2187 = vand.u32 %v2186, 4294901760
    %2188 = vmatpush1.msra.mxu0 %v2187
    %2189 = vmatprep.subr.mxu0 0.0
    %v2190 = vand.u32 %v224, 4294901760
    %v2191 = vsub.f32 %v224, %v2190
    %v2192 = vand.u32 %v2191, 4294901760
    %v2193 = vsub.f32 %v2191, %v2192
    %v2194 = vand.u32 %v2193, 4294901760
    %2195 = vmatpush1.msra.mxu0 %v2194
    %2196 = vmatprep.subr.mxu0 0.0
    %v2197 = vand.u32 %v223, 4294901760
    %v2198 = vsub.f32 %v223, %v2197
    %v2199 = vand.u32 %v2198, 4294901760
    %v2200 = vsub.f32 %v2198, %v2199
    %v2201 = vand.u32 %v2200, 4294901760
    %2202 = vmatpush1.msra.mxu0 %v2201
    %2203 = vmatprep.subr.mxu0 0.0
    %v2204 = vand.u32 %v222, 4294901760
    %v2205 = vsub.f32 %v222, %v2204
    %v2206 = vand.u32 %v2205, 4294901760
    %v2207 = vsub.f32 %v2205, %v2206
    %v2208 = vand.u32 %v2207, 4294901760
    %2209 = vmatpush1.msra.mxu0 %v2208
    %2210 = vmatprep.subr.mxu0 0.0
    %v2211 = vand.u32 %v221, 4294901760
    %v2212 = vsub.f32 %v221, %v2211
    %v2213 = vand.u32 %v2212, 4294901760
    %v2214 = vsub.f32 %v2212, %v2213
    %v2215 = vand.u32 %v2214, 4294901760
    %2216 = vmatpush1.msra.mxu0 %v2215
    %2217 = vmatprep.subr.mxu0 0.0
    %v2218 = vand.u32 %v220, 4294901760
    %v2219 = vsub.f32 %v220, %v2218
    %v2220 = vand.u32 %v2219, 4294901760
    %v2221 = vsub.f32 %v2219, %v2220
    %v2222 = vand.u32 %v2221, 4294901760
    %2223 = vmatpush1.msra.mxu0 %v2222
    %2224 = vmatprep.subr.mxu0 0.0
    %v2225 = vand.u32 %v219, 4294901760
    %v2226 = vsub.f32 %v219, %v2225
    %v2227 = vand.u32 %v2226, 4294901760
    %v2228 = vsub.f32 %v2226, %v2227
    %v2229 = vand.u32 %v2228, 4294901760
    %2230 = vmatpush1.msra.mxu0 %v2229
    %2231 = vmatprep.subr.mxu0 0.0
    %v2232 = vand.u32 %v250, 4294901760
    %v2233 = vsub.f32 %v250, %v2232
    %v2234 = vand.u32 %v2233, 4294901760
    %v2235 = vsub.f32 %v2233, %v2234
    %v2236 = vand.u32 %v2235, 4294901760
    %2237 = vmatpush2.msra.mxu0 %v2236
    %2238 = vmatprep.subr.mxu0 0.0
    %v2239 = vand.u32 %v249, 4294901760
    %v2240 = vsub.f32 %v249, %v2239
    %v2241 = vand.u32 %v2240, 4294901760
    %v2242 = vsub.f32 %v2240, %v2241
    %v2243 = vand.u32 %v2242, 4294901760
    %2244 = vmatpush2.msra.mxu0 %v2243
    %2245 = vmatprep.subr.mxu0 0.0
    %v2246 = vand.u32 %v248, 4294901760
    %v2247 = vsub.f32 %v248, %v2246
    %v2248 = vand.u32 %v2247, 4294901760
    %v2249 = vsub.f32 %v2247, %v2248
    %v2250 = vand.u32 %v2249, 4294901760
    %2251 = vmatpush2.msra.mxu0 %v2250
    %2252 = vmatprep.subr.mxu0 0.0
    %v2253 = vand.u32 %v247, 4294901760
    %v2254 = vsub.f32 %v247, %v2253
    %v2255 = vand.u32 %v2254, 4294901760
    %v2256 = vsub.f32 %v2254, %v2255
    %v2257 = vand.u32 %v2256, 4294901760
    %2258 = vmatpush2.msra.mxu0 %v2257
    %2259 = vmatprep.subr.mxu0 0.0
    %v2260 = vand.u32 %v246, 4294901760
    %v2261 = vsub.f32 %v246, %v2260
    %v2262 = vand.u32 %v2261, 4294901760
    %v2263 = vsub.f32 %v2261, %v2262
    %v2264 = vand.u32 %v2263, 4294901760
    %2265 = vmatpush2.msra.mxu0 %v2264
    %2266 = vmatprep.subr.mxu0 0.0
    %v2267 = vand.u32 %v245, 4294901760
    %v2268 = vsub.f32 %v245, %v2267
    %v2269 = vand.u32 %v2268, 4294901760
    %v2270 = vsub.f32 %v2268, %v2269
    %v2271 = vand.u32 %v2270, 4294901760
    %2272 = vmatpush2.msra.mxu0 %v2271
    %2273 = vmatprep.subr.mxu0 0.0
    %v2274 = vand.u32 %v244, 4294901760
    %v2275 = vsub.f32 %v244, %v2274
    %v2276 = vand.u32 %v2275, 4294901760
    %v2277 = vsub.f32 %v2275, %v2276
    %v2278 = vand.u32 %v2277, 4294901760
    %2279 = vmatpush2.msra.mxu0 %v2278
    %2280 = vmatprep.subr.mxu0 0.0
    %v2281 = vand.u32 %v243, 4294901760
    %v2282 = vsub.f32 %v243, %v2281
    %v2283 = vand.u32 %v2282, 4294901760
    %v2284 = vsub.f32 %v2282, %v2283
    %v2285 = vand.u32 %v2284, 4294901760
    %2286 = vmatpush2.msra.mxu0 %v2285
    %2287 = vmatprep.subr.mxu0 0.0
    %v2288 = vand.u32 %v242, 4294901760
    %v2289 = vsub.f32 %v242, %v2288
    %v2290 = vand.u32 %v2289, 4294901760
    %v2291 = vsub.f32 %v2289, %v2290
    %v2292 = vand.u32 %v2291, 4294901760
    %2293 = vmatpush2.msra.mxu0 %v2292
    %2294 = vmatprep.subr.mxu0 0.0
    %v2295 = vand.u32 %v241, 4294901760
    %v2296 = vsub.f32 %v241, %v2295
    %v2297 = vand.u32 %v2296, 4294901760
    %v2298 = vsub.f32 %v2296, %v2297
    %v2299 = vand.u32 %v2298, 4294901760
    %2300 = vmatpush2.msra.mxu0 %v2299
    %2301 = vmatprep.subr.mxu0 0.0
    %v2302 = vand.u32 %v240, 4294901760
    %v2303 = vsub.f32 %v240, %v2302
    %v2304 = vand.u32 %v2303, 4294901760
    %v2305 = vsub.f32 %v2303, %v2304
    %v2306 = vand.u32 %v2305, 4294901760
    %2307 = vmatpush2.msra.mxu0 %v2306
    %2308 = vmatprep.subr.mxu0 0.0
    %v2309 = vand.u32 %v239, 4294901760
    %v2310 = vsub.f32 %v239, %v2309
    %v2311 = vand.u32 %v2310, 4294901760
    %v2312 = vsub.f32 %v2310, %v2311
    %v2313 = vand.u32 %v2312, 4294901760
    %2314 = vmatpush2.msra.mxu0 %v2313
    %2315 = vmatprep.subr.mxu0 0.0
    %v2316 = vand.u32 %v238, 4294901760
    %v2317 = vsub.f32 %v238, %v2316
    %v2318 = vand.u32 %v2317, 4294901760
    %v2319 = vsub.f32 %v2317, %v2318
    %v2320 = vand.u32 %v2319, 4294901760
    %2321 = vmatpush2.msra.mxu0 %v2320
    %2322 = vmatprep.subr.mxu0 0.0
    %v2323 = vand.u32 %v237, 4294901760
    %v2324 = vsub.f32 %v237, %v2323
    %v2325 = vand.u32 %v2324, 4294901760
    %v2326 = vsub.f32 %v2324, %v2325
    %v2327 = vand.u32 %v2326, 4294901760
    %2328 = vmatpush2.msra.mxu0 %v2327
    %2329 = vmatprep.subr.mxu0 0.0
    %v2330 = vand.u32 %v236, 4294901760
    %v2331 = vsub.f32 %v236, %v2330
    %v2332 = vand.u32 %v2331, 4294901760
    %v2333 = vsub.f32 %v2331, %v2332
    %v2334 = vand.u32 %v2333, 4294901760
    %2335 = vmatpush2.msra.mxu0 %v2334
    %2336 = vmatprep.subr.mxu0 0.0
    %v2337 = vand.u32 %v235, 4294901760
    %v2338 = vsub.f32 %v235, %v2337
    %v2339 = vand.u32 %v2338, 4294901760
    %v2340 = vsub.f32 %v2338, %v2339
    %v2341 = vand.u32 %v2340, 4294901760
    %2342 = vmatpush2.msra.mxu0 %v2341
    %v2343 = vand.u32 %v152, 4294901760
    %2344 = vmatprep.mubr.f32.mxu0 %v2343
    %v2345 = vand.u32 %v151, 4294901760
    %2346 = vmatmul.mubr.f32.gmra.mxu0 %v2345
    %v2347 = vpop.f32.mrf.mxu0
    %v2348 = vadd.f32 %v2116, %v2347
    %v2349 = vpop.f32.mrf.mxu0
    %2350 = vdwg.mxu0
    %2351 = vmatprep.subr.mxu0 0.0
    %v2352 = vand.u32 %v234, 4294901760
    %v2353 = vsub.f32 %v234, %v2352
    %2354 = vmatpush1.msra.mxu0 %v2353
    %2355 = vmatprep.subr.mxu0 0.0
    %v2356 = vand.u32 %v233, 4294901760
    %v2357 = vsub.f32 %v233, %v2356
    %2358 = vmatpush1.msra.mxu0 %v2357
    %2359 = vmatprep.subr.mxu0 0.0
    %v2360 = vand.u32 %v232, 4294901760
    %v2361 = vsub.f32 %v232, %v2360
    %2362 = vmatpush1.msra.mxu0 %v2361
    %2363 = vmatprep.subr.mxu0 0.0
    %v2364 = vand.u32 %v231, 4294901760
    %v2365 = vsub.f32 %v231, %v2364
    %2366 = vmatpush1.msra.mxu0 %v2365
    %2367 = vmatprep.subr.mxu0 0.0
    %v2368 = vand.u32 %v230, 4294901760
    %v2369 = vsub.f32 %v230, %v2368
    %2370 = vmatpush1.msra.mxu0 %v2369
    %2371 = vmatprep.subr.mxu0 0.0
    %v2372 = vand.u32 %v229, 4294901760
    %v2373 = vsub.f32 %v229, %v2372
    %2374 = vmatpush1.msra.mxu0 %v2373
    %2375 = vmatprep.subr.mxu0 0.0
    %v2376 = vand.u32 %v228, 4294901760
    %v2377 = vsub.f32 %v228, %v2376
    %2378 = vmatpush1.msra.mxu0 %v2377
    %2379 = vmatprep.subr.mxu0 0.0
    %v2380 = vand.u32 %v227, 4294901760
    %v2381 = vsub.f32 %v227, %v2380
    %2382 = vmatpush1.msra.mxu0 %v2381
    %2383 = vmatprep.subr.mxu0 0.0
    %v2384 = vand.u32 %v226, 4294901760
    %v2385 = vsub.f32 %v226, %v2384
    %2386 = vmatpush1.msra.mxu0 %v2385
    %2387 = vmatprep.subr.mxu0 0.0
    %v2388 = vand.u32 %v225, 4294901760
    %v2389 = vsub.f32 %v225, %v2388
    %2390 = vmatpush1.msra.mxu0 %v2389
    %2391 = vmatprep.subr.mxu0 0.0
    %v2392 = vand.u32 %v224, 4294901760
    %v2393 = vsub.f32 %v224, %v2392
    %2394 = vmatpush1.msra.mxu0 %v2393
    %2395 = vmatprep.subr.mxu0 0.0
    %v2396 = vand.u32 %v223, 4294901760
    %v2397 = vsub.f32 %v223, %v2396
    %2398 = vmatpush1.msra.mxu0 %v2397
    %2399 = vmatprep.subr.mxu0 0.0
    %v2400 = vand.u32 %v222, 4294901760
    %v2401 = vsub.f32 %v222, %v2400
    %2402 = vmatpush1.msra.mxu0 %v2401
    %2403 = vmatprep.subr.mxu0 0.0
    %v2404 = vand.u32 %v221, 4294901760
    %v2405 = vsub.f32 %v221, %v2404
    %2406 = vmatpush1.msra.mxu0 %v2405
    %2407 = vmatprep.subr.mxu0 0.0
    %v2408 = vand.u32 %v220, 4294901760
    %v2409 = vsub.f32 %v220, %v2408
    %2410 = vmatpush1.msra.mxu0 %v2409
    %2411 = vmatprep.subr.mxu0 0.0
    %v2412 = vand.u32 %v219, 4294901760
    %v2413 = vsub.f32 %v219, %v2412
    %2414 = vmatpush1.msra.mxu0 %v2413
    %2415 = vmatprep.subr.mxu0 0.0
    %v2416 = vand.u32 %v250, 4294901760
    %v2417 = vsub.f32 %v250, %v2416
    %2418 = vmatpush2.msra.mxu0 %v2417
    %2419 = vmatprep.subr.mxu0 0.0
    %v2420 = vand.u32 %v249, 4294901760
    %v2421 = vsub.f32 %v249, %v2420
    %2422 = vmatpush2.msra.mxu0 %v2421
    %2423 = vmatprep.subr.mxu0 0.0
    %v2424 = vand.u32 %v248, 4294901760
    %v2425 = vsub.f32 %v248, %v2424
    %2426 = vmatpush2.msra.mxu0 %v2425
    %2427 = vmatprep.subr.mxu0 0.0
    %v2428 = vand.u32 %v247, 4294901760
    %v2429 = vsub.f32 %v247, %v2428
    %2430 = vmatpush2.msra.mxu0 %v2429
    %2431 = vmatprep.subr.mxu0 0.0
    %v2432 = vand.u32 %v246, 4294901760
    %v2433 = vsub.f32 %v246, %v2432
    %2434 = vmatpush2.msra.mxu0 %v2433
    %2435 = vmatprep.subr.mxu0 0.0
    %v2436 = vand.u32 %v245, 4294901760
    %v2437 = vsub.f32 %v245, %v2436
    %2438 = vmatpush2.msra.mxu0 %v2437
    %2439 = vmatprep.subr.mxu0 0.0
    %v2440 = vand.u32 %v244, 4294901760
    %v2441 = vsub.f32 %v244, %v2440
    %2442 = vmatpush2.msra.mxu0 %v2441
    %2443 = vmatprep.subr.mxu0 0.0
    %v2444 = vand.u32 %v243, 4294901760
    %v2445 = vsub.f32 %v243, %v2444
    %2446 = vmatpush2.msra.mxu0 %v2445
    %2447 = vmatprep.subr.mxu0 0.0
    %v2448 = vand.u32 %v242, 4294901760
    %v2449 = vsub.f32 %v242, %v2448
    %2450 = vmatpush2.msra.mxu0 %v2449
    %2451 = vmatprep.subr.mxu0 0.0
    %v2452 = vand.u32 %v241, 4294901760
    %v2453 = vsub.f32 %v241, %v2452
    %2454 = vmatpush2.msra.mxu0 %v2453
    %2455 = vmatprep.subr.mxu0 0.0
    %v2456 = vand.u32 %v240, 4294901760
    %v2457 = vsub.f32 %v240, %v2456
    %2458 = vmatpush2.msra.mxu0 %v2457
    %2459 = vmatprep.subr.mxu0 0.0
    %v2460 = vand.u32 %v239, 4294901760
    %v2461 = vsub.f32 %v239, %v2460
    %2462 = vmatpush2.msra.mxu0 %v2461
    %2463 = vmatprep.subr.mxu0 0.0
    %v2464 = vand.u32 %v238, 4294901760
    %v2465 = vsub.f32 %v238, %v2464
    %2466 = vmatpush2.msra.mxu0 %v2465
    %2467 = vmatprep.subr.mxu0 0.0
    %v2468 = vand.u32 %v237, 4294901760
    %v2469 = vsub.f32 %v237, %v2468
    %2470 = vmatpush2.msra.mxu0 %v2469
    %2471 = vmatprep.subr.mxu0 0.0
    %v2472 = vand.u32 %v236, 4294901760
    %v2473 = vsub.f32 %v236, %v2472
    %2474 = vmatpush2.msra.mxu0 %v2473
    %2475 = vmatprep.subr.mxu0 0.0
    %v2476 = vand.u32 %v235, 4294901760
    %v2477 = vsub.f32 %v235, %v2476
    %2478 = vmatpush2.msra.mxu0 %v2477
    %v2479 = vand.u32 %v152, 4294901760
    %v2480 = vsub.f32 %v152, %v2479
    %2481 = vmatprep.mubr.f32.mxu0 %v2480
    %v2482 = vand.u32 %v151, 4294901760
    %v2483 = vsub.f32 %v151, %v2482
    %2484 = vmatmul.mubr.f32.gmra.mxu0 %v2483
    %v2485 = vpop.f32.mrf.mxu0
    %v2486 = vadd.f32 %v2348, %v2485
    %v2487 = vpop.f32.mrf.mxu0
    %2488 = vdwg.mxu0
    %2489 = vmatprep.subr.mxu0 0.0
    %v2490 = vand.u32 %v234, 4294901760
    %2491 = vmatpush1.msra.mxu0 %v2490
    %2492 = vmatprep.subr.mxu0 0.0
    %v2493 = vand.u32 %v233, 4294901760
    %2494 = vmatpush1.msra.mxu0 %v2493
    %2495 = vmatprep.subr.mxu0 0.0
    %v2496 = vand.u32 %v232, 4294901760
    %2497 = vmatpush1.msra.mxu0 %v2496
    %2498 = vmatprep.subr.mxu0 0.0
    %v2499 = vand.u32 %v231, 4294901760
    %2500 = vmatpush1.msra.mxu0 %v2499
    %2501 = vmatprep.subr.mxu0 0.0
    %v2502 = vand.u32 %v230, 4294901760
    %2503 = vmatpush1.msra.mxu0 %v2502
    %2504 = vmatprep.subr.mxu0 0.0
    %v2505 = vand.u32 %v229, 4294901760
    %2506 = vmatpush1.msra.mxu0 %v2505
    %2507 = vmatprep.subr.mxu0 0.0
    %v2508 = vand.u32 %v228, 4294901760
    %2509 = vmatpush1.msra.mxu0 %v2508
    %2510 = vmatprep.subr.mxu0 0.0
    %v2511 = vand.u32 %v227, 4294901760
    %2512 = vmatpush1.msra.mxu0 %v2511
    %2513 = vmatprep.subr.mxu0 0.0
    %v2514 = vand.u32 %v226, 4294901760
    %2515 = vmatpush1.msra.mxu0 %v2514
    %2516 = vmatprep.subr.mxu0 0.0
    %v2517 = vand.u32 %v225, 4294901760
    %2518 = vmatpush1.msra.mxu0 %v2517
    %2519 = vmatprep.subr.mxu0 0.0
    %v2520 = vand.u32 %v224, 4294901760
    %2521 = vmatpush1.msra.mxu0 %v2520
    %2522 = vmatprep.subr.mxu0 0.0
    %v2523 = vand.u32 %v223, 4294901760
    %2524 = vmatpush1.msra.mxu0 %v2523
    %2525 = vmatprep.subr.mxu0 0.0
    %v2526 = vand.u32 %v222, 4294901760
    %2527 = vmatpush1.msra.mxu0 %v2526
    %2528 = vmatprep.subr.mxu0 0.0
    %v2529 = vand.u32 %v221, 4294901760
    %2530 = vmatpush1.msra.mxu0 %v2529
    %2531 = vmatprep.subr.mxu0 0.0
    %v2532 = vand.u32 %v220, 4294901760
    %2533 = vmatpush1.msra.mxu0 %v2532
    %2534 = vmatprep.subr.mxu0 0.0
    %v2535 = vand.u32 %v219, 4294901760
    %2536 = vmatpush1.msra.mxu0 %v2535
    %2537 = vmatprep.subr.mxu0 0.0
    %v2538 = vand.u32 %v250, 4294901760
    %2539 = vmatpush2.msra.mxu0 %v2538
    %2540 = vmatprep.subr.mxu0 0.0
    %v2541 = vand.u32 %v249, 4294901760
    %2542 = vmatpush2.msra.mxu0 %v2541
    %2543 = vmatprep.subr.mxu0 0.0
    %v2544 = vand.u32 %v248, 4294901760
    %2545 = vmatpush2.msra.mxu0 %v2544
    %2546 = vmatprep.subr.mxu0 0.0
    %v2547 = vand.u32 %v247, 4294901760
    %2548 = vmatpush2.msra.mxu0 %v2547
    %2549 = vmatprep.subr.mxu0 0.0
    %v2550 = vand.u32 %v246, 4294901760
    %2551 = vmatpush2.msra.mxu0 %v2550
    %2552 = vmatprep.subr.mxu0 0.0
    %v2553 = vand.u32 %v245, 4294901760
    %2554 = vmatpush2.msra.mxu0 %v2553
    %2555 = vmatprep.subr.mxu0 0.0
    %v2556 = vand.u32 %v244, 4294901760
    %2557 = vmatpush2.msra.mxu0 %v2556
    %2558 = vmatprep.subr.mxu0 0.0
    %v2559 = vand.u32 %v243, 4294901760
    %2560 = vmatpush2.msra.mxu0 %v2559
    %2561 = vmatprep.subr.mxu0 0.0
    %v2562 = vand.u32 %v242, 4294901760
    %2563 = vmatpush2.msra.mxu0 %v2562
    %2564 = vmatprep.subr.mxu0 0.0
    %v2565 = vand.u32 %v241, 4294901760
    %2566 = vmatpush2.msra.mxu0 %v2565
    %2567 = vmatprep.subr.mxu0 0.0
    %v2568 = vand.u32 %v240, 4294901760
    %2569 = vmatpush2.msra.mxu0 %v2568
    %2570 = vmatprep.subr.mxu0 0.0
    %v2571 = vand.u32 %v239, 4294901760
    %2572 = vmatpush2.msra.mxu0 %v2571
    %2573 = vmatprep.subr.mxu0 0.0
    %v2574 = vand.u32 %v238, 4294901760
    %2575 = vmatpush2.msra.mxu0 %v2574
    %2576 = vmatprep.subr.mxu0 0.0
    %v2577 = vand.u32 %v237, 4294901760
    %2578 = vmatpush2.msra.mxu0 %v2577
    %2579 = vmatprep.subr.mxu0 0.0
    %v2580 = vand.u32 %v236, 4294901760
    %2581 = vmatpush2.msra.mxu0 %v2580
    %2582 = vmatprep.subr.mxu0 0.0
    %v2583 = vand.u32 %v235, 4294901760
    %2584 = vmatpush2.msra.mxu0 %v2583
    %v2585 = vand.u32 %v152, 4294901760
    %v2586 = vsub.f32 %v152, %v2585
    %v2587 = vand.u32 %v2586, 4294901760
    %2588 = vmatprep.mubr.f32.mxu0 %v2587
    %v2589 = vand.u32 %v151, 4294901760
    %v2590 = vsub.f32 %v151, %v2589
    %v2591 = vand.u32 %v2590, 4294901760
    %2592 = vmatmul.mubr.f32.gmra.mxu0 %v2591
    %v2593 = vpop.f32.mrf.mxu0
    %v2594 = vadd.f32 %v2486, %v2593
    %v2595 = vpop.f32.mrf.mxu0
    %2596 = vdwg.mxu0
    %2597 = vmatprep.subr.mxu0 0.0
    %v2598 = vand.u32 %v234, 4294901760
    %v2599 = vsub.f32 %v234, %v2598
    %v2600 = vand.u32 %v2599, 4294901760
    %2601 = vmatpush1.msra.mxu0 %v2600
    %2602 = vmatprep.subr.mxu0 0.0
    %v2603 = vand.u32 %v233, 4294901760
    %v2604 = vsub.f32 %v233, %v2603
    %v2605 = vand.u32 %v2604, 4294901760
    %2606 = vmatpush1.msra.mxu0 %v2605
    %2607 = vmatprep.subr.mxu0 0.0
    %v2608 = vand.u32 %v232, 4294901760
    %v2609 = vsub.f32 %v232, %v2608
    %v2610 = vand.u32 %v2609, 4294901760
    %2611 = vmatpush1.msra.mxu0 %v2610
    %2612 = vmatprep.subr.mxu0 0.0
    %v2613 = vand.u32 %v231, 4294901760
    %v2614 = vsub.f32 %v231, %v2613
    %v2615 = vand.u32 %v2614, 4294901760
    %2616 = vmatpush1.msra.mxu0 %v2615
    %2617 = vmatprep.subr.mxu0 0.0
    %v2618 = vand.u32 %v230, 4294901760
    %v2619 = vsub.f32 %v230, %v2618
    %v2620 = vand.u32 %v2619, 4294901760
    %2621 = vmatpush1.msra.mxu0 %v2620
    %2622 = vmatprep.subr.mxu0 0.0
    %v2623 = vand.u32 %v229, 4294901760
    %v2624 = vsub.f32 %v229, %v2623
    %v2625 = vand.u32 %v2624, 4294901760
    %2626 = vmatpush1.msra.mxu0 %v2625
    %2627 = vmatprep.subr.mxu0 0.0
    %v2628 = vand.u32 %v228, 4294901760
    %v2629 = vsub.f32 %v228, %v2628
    %v2630 = vand.u32 %v2629, 4294901760
    %2631 = vmatpush1.msra.mxu0 %v2630
    %2632 = vmatprep.subr.mxu0 0.0
    %v2633 = vand.u32 %v227, 4294901760
    %v2634 = vsub.f32 %v227, %v2633
    %v2635 = vand.u32 %v2634, 4294901760
    %2636 = vmatpush1.msra.mxu0 %v2635
    %2637 = vmatprep.subr.mxu0 0.0
    %v2638 = vand.u32 %v226, 4294901760
    %v2639 = vsub.f32 %v226, %v2638
    %v2640 = vand.u32 %v2639, 4294901760
    %2641 = vmatpush1.msra.mxu0 %v2640
    %2642 = vmatprep.subr.mxu0 0.0
    %v2643 = vand.u32 %v225, 4294901760
    %v2644 = vsub.f32 %v225, %v2643
    %v2645 = vand.u32 %v2644, 4294901760
    %2646 = vmatpush1.msra.mxu0 %v2645
    %2647 = vmatprep.subr.mxu0 0.0
    %v2648 = vand.u32 %v224, 4294901760
    %v2649 = vsub.f32 %v224, %v2648
    %v2650 = vand.u32 %v2649, 4294901760
    %2651 = vmatpush1.msra.mxu0 %v2650
    %2652 = vmatprep.subr.mxu0 0.0
    %v2653 = vand.u32 %v223, 4294901760
    %v2654 = vsub.f32 %v223, %v2653
    %v2655 = vand.u32 %v2654, 4294901760
    %2656 = vmatpush1.msra.mxu0 %v2655
    %2657 = vmatprep.subr.mxu0 0.0
    %v2658 = vand.u32 %v222, 4294901760
    %v2659 = vsub.f32 %v222, %v2658
    %v2660 = vand.u32 %v2659, 4294901760
    %2661 = vmatpush1.msra.mxu0 %v2660
    %2662 = vmatprep.subr.mxu0 0.0
    %v2663 = vand.u32 %v221, 4294901760
    %v2664 = vsub.f32 %v221, %v2663
    %v2665 = vand.u32 %v2664, 4294901760
    %2666 = vmatpush1.msra.mxu0 %v2665
    %2667 = vmatprep.subr.mxu0 0.0
    %v2668 = vand.u32 %v220, 4294901760
    %v2669 = vsub.f32 %v220, %v2668
    %v2670 = vand.u32 %v2669, 4294901760
    %2671 = vmatpush1.msra.mxu0 %v2670
    %2672 = vmatprep.subr.mxu0 0.0
    %v2673 = vand.u32 %v219, 4294901760
    %v2674 = vsub.f32 %v219, %v2673
    %v2675 = vand.u32 %v2674, 4294901760
    %2676 = vmatpush1.msra.mxu0 %v2675
    %2677 = vmatprep.subr.mxu0 0.0
    %v2678 = vand.u32 %v250, 4294901760
    %v2679 = vsub.f32 %v250, %v2678
    %v2680 = vand.u32 %v2679, 4294901760
    %2681 = vmatpush2.msra.mxu0 %v2680
    %2682 = vmatprep.subr.mxu0 0.0
    %v2683 = vand.u32 %v249, 4294901760
    %v2684 = vsub.f32 %v249, %v2683
    %v2685 = vand.u32 %v2684, 4294901760
    %2686 = vmatpush2.msra.mxu0 %v2685
    %2687 = vmatprep.subr.mxu0 0.0
    %v2688 = vand.u32 %v248, 4294901760
    %v2689 = vsub.f32 %v248, %v2688
    %v2690 = vand.u32 %v2689, 4294901760
    %2691 = vmatpush2.msra.mxu0 %v2690
    %2692 = vmatprep.subr.mxu0 0.0
    %v2693 = vand.u32 %v247, 4294901760
    %v2694 = vsub.f32 %v247, %v2693
    %v2695 = vand.u32 %v2694, 4294901760
    %2696 = vmatpush2.msra.mxu0 %v2695
    %2697 = vmatprep.subr.mxu0 0.0
    %v2698 = vand.u32 %v246, 4294901760
    %v2699 = vsub.f32 %v246, %v2698
    %v2700 = vand.u32 %v2699, 4294901760
    %2701 = vmatpush2.msra.mxu0 %v2700
    %2702 = vmatprep.subr.mxu0 0.0
    %v2703 = vand.u32 %v245, 4294901760
    %v2704 = vsub.f32 %v245, %v2703
    %v2705 = vand.u32 %v2704, 4294901760
    %2706 = vmatpush2.msra.mxu0 %v2705
    %2707 = vmatprep.subr.mxu0 0.0
    %v2708 = vand.u32 %v244, 4294901760
    %v2709 = vsub.f32 %v244, %v2708
    %v2710 = vand.u32 %v2709, 4294901760
    %2711 = vmatpush2.msra.mxu0 %v2710
    %2712 = vmatprep.subr.mxu0 0.0
    %v2713 = vand.u32 %v243, 4294901760
    %v2714 = vsub.f32 %v243, %v2713
    %v2715 = vand.u32 %v2714, 4294901760
    %2716 = vmatpush2.msra.mxu0 %v2715
    %2717 = vmatprep.subr.mxu0 0.0
    %v2718 = vand.u32 %v242, 4294901760
    %v2719 = vsub.f32 %v242, %v2718
    %v2720 = vand.u32 %v2719, 4294901760
    %2721 = vmatpush2.msra.mxu0 %v2720
    %2722 = vmatprep.subr.mxu0 0.0
    %v2723 = vand.u32 %v241, 4294901760
    %v2724 = vsub.f32 %v241, %v2723
    %v2725 = vand.u32 %v2724, 4294901760
    %2726 = vmatpush2.msra.mxu0 %v2725
    %2727 = vmatprep.subr.mxu0 0.0
    %v2728 = vand.u32 %v240, 4294901760
    %v2729 = vsub.f32 %v240, %v2728
    %v2730 = vand.u32 %v2729, 4294901760
    %2731 = vmatpush2.msra.mxu0 %v2730
    %2732 = vmatprep.subr.mxu0 0.0
    %v2733 = vand.u32 %v239, 4294901760
    %v2734 = vsub.f32 %v239, %v2733
    %v2735 = vand.u32 %v2734, 4294901760
    %2736 = vmatpush2.msra.mxu0 %v2735
    %2737 = vmatprep.subr.mxu0 0.0
    %v2738 = vand.u32 %v238, 4294901760
    %v2739 = vsub.f32 %v238, %v2738
    %v2740 = vand.u32 %v2739, 4294901760
    %2741 = vmatpush2.msra.mxu0 %v2740
    %2742 = vmatprep.subr.mxu0 0.0
    %v2743 = vand.u32 %v237, 4294901760
    %v2744 = vsub.f32 %v237, %v2743
    %v2745 = vand.u32 %v2744, 4294901760
    %2746 = vmatpush2.msra.mxu0 %v2745
    %2747 = vmatprep.subr.mxu0 0.0
    %v2748 = vand.u32 %v236, 4294901760
    %v2749 = vsub.f32 %v236, %v2748
    %v2750 = vand.u32 %v2749, 4294901760
    %2751 = vmatpush2.msra.mxu0 %v2750
    %2752 = vmatprep.subr.mxu0 0.0
    %v2753 = vand.u32 %v235, 4294901760
    %v2754 = vsub.f32 %v235, %v2753
    %v2755 = vand.u32 %v2754, 4294901760
    %2756 = vmatpush2.msra.mxu0 %v2755
    %v2757 = vand.u32 %v152, 4294901760
    %2758 = vmatprep.mubr.f32.mxu0 %v2757
    %v2759 = vand.u32 %v151, 4294901760
    %2760 = vmatmul.mubr.f32.gmra.mxu0 %v2759
    %v2761 = vpop.f32.mrf.mxu0
    %v2762 = vadd.f32 %v2594, %v2761
    %v2763 = vpop.f32.mrf.mxu0
    %2764 = vdwg.mxu0
    %2765 = vmatprep.subr.mxu0 0.0
    %v2766 = vand.u32 %v234, 4294901760
    %2767 = vmatpush1.msra.mxu0 %v2766
    %2768 = vmatprep.subr.mxu0 0.0
    %v2769 = vand.u32 %v233, 4294901760
    %2770 = vmatpush1.msra.mxu0 %v2769
    %2771 = vmatprep.subr.mxu0 0.0
    %v2772 = vand.u32 %v232, 4294901760
    %2773 = vmatpush1.msra.mxu0 %v2772
    %2774 = vmatprep.subr.mxu0 0.0
    %v2775 = vand.u32 %v231, 4294901760
    %2776 = vmatpush1.msra.mxu0 %v2775
    %2777 = vmatprep.subr.mxu0 0.0
    %v2778 = vand.u32 %v230, 4294901760
    %2779 = vmatpush1.msra.mxu0 %v2778
    %2780 = vmatprep.subr.mxu0 0.0
    %v2781 = vand.u32 %v229, 4294901760
    %2782 = vmatpush1.msra.mxu0 %v2781
    %2783 = vmatprep.subr.mxu0 0.0
    %v2784 = vand.u32 %v228, 4294901760
    %2785 = vmatpush1.msra.mxu0 %v2784
    %2786 = vmatprep.subr.mxu0 0.0
    %v2787 = vand.u32 %v227, 4294901760
    %2788 = vmatpush1.msra.mxu0 %v2787
    %2789 = vmatprep.subr.mxu0 0.0
    %v2790 = vand.u32 %v226, 4294901760
    %2791 = vmatpush1.msra.mxu0 %v2790
    %2792 = vmatprep.subr.mxu0 0.0
    %v2793 = vand.u32 %v225, 4294901760
    %2794 = vmatpush1.msra.mxu0 %v2793
    %2795 = vmatprep.subr.mxu0 0.0
    %v2796 = vand.u32 %v224, 4294901760
    %2797 = vmatpush1.msra.mxu0 %v2796
    %2798 = vmatprep.subr.mxu0 0.0
    %v2799 = vand.u32 %v223, 4294901760
    %2800 = vmatpush1.msra.mxu0 %v2799
    %2801 = vmatprep.subr.mxu0 0.0
    %v2802 = vand.u32 %v222, 4294901760
    %2803 = vmatpush1.msra.mxu0 %v2802
    %2804 = vmatprep.subr.mxu0 0.0
    %v2805 = vand.u32 %v221, 4294901760
    %2806 = vmatpush1.msra.mxu0 %v2805
    %2807 = vmatprep.subr.mxu0 0.0
    %v2808 = vand.u32 %v220, 4294901760
    %2809 = vmatpush1.msra.mxu0 %v2808
    %2810 = vmatprep.subr.mxu0 0.0
    %v2811 = vand.u32 %v219, 4294901760
    %2812 = vmatpush1.msra.mxu0 %v2811
    %2813 = vmatprep.subr.mxu0 0.0
    %v2814 = vand.u32 %v250, 4294901760
    %2815 = vmatpush2.msra.mxu0 %v2814
    %2816 = vmatprep.subr.mxu0 0.0
    %v2817 = vand.u32 %v249, 4294901760
    %2818 = vmatpush2.msra.mxu0 %v2817
    %2819 = vmatprep.subr.mxu0 0.0
    %v2820 = vand.u32 %v248, 4294901760
    %2821 = vmatpush2.msra.mxu0 %v2820
    %2822 = vmatprep.subr.mxu0 0.0
    %v2823 = vand.u32 %v247, 4294901760
    %2824 = vmatpush2.msra.mxu0 %v2823
    %2825 = vmatprep.subr.mxu0 0.0
    %v2826 = vand.u32 %v246, 4294901760
    %2827 = vmatpush2.msra.mxu0 %v2826
    %2828 = vmatprep.subr.mxu0 0.0
    %v2829 = vand.u32 %v245, 4294901760
    %2830 = vmatpush2.msra.mxu0 %v2829
    %2831 = vmatprep.subr.mxu0 0.0
    %v2832 = vand.u32 %v244, 4294901760
    %2833 = vmatpush2.msra.mxu0 %v2832
    %2834 = vmatprep.subr.mxu0 0.0
    %v2835 = vand.u32 %v243, 4294901760
    %2836 = vmatpush2.msra.mxu0 %v2835
    %2837 = vmatprep.subr.mxu0 0.0
    %v2838 = vand.u32 %v242, 4294901760
    %2839 = vmatpush2.msra.mxu0 %v2838
    %2840 = vmatprep.subr.mxu0 0.0
    %v2841 = vand.u32 %v241, 4294901760
    %2842 = vmatpush2.msra.mxu0 %v2841
    %2843 = vmatprep.subr.mxu0 0.0
    %v2844 = vand.u32 %v240, 4294901760
    %2845 = vmatpush2.msra.mxu0 %v2844
    %2846 = vmatprep.subr.mxu0 0.0
    %v2847 = vand.u32 %v239, 4294901760
    %2848 = vmatpush2.msra.mxu0 %v2847
    %2849 = vmatprep.subr.mxu0 0.0
    %v2850 = vand.u32 %v238, 4294901760
    %2851 = vmatpush2.msra.mxu0 %v2850
    %2852 = vmatprep.subr.mxu0 0.0
    %v2853 = vand.u32 %v237, 4294901760
    %2854 = vmatpush2.msra.mxu0 %v2853
    %2855 = vmatprep.subr.mxu0 0.0
    %v2856 = vand.u32 %v236, 4294901760
    %2857 = vmatpush2.msra.mxu0 %v2856
    %2858 = vmatprep.subr.mxu0 0.0
    %v2859 = vand.u32 %v235, 4294901760
    %2860 = vmatpush2.msra.mxu0 %v2859
    %v2861 = vand.u32 %v152, 4294901760
    %2862 = vmatprep.mubr.f32.mxu0 %v2861
    %v2863 = vand.u32 %v151, 4294901760
    %2864 = vmatmul.mubr.f32.gmra.mxu0 %v2863
    %v2865 = vpop.f32.mrf.mxu0
    %v2866 = vadd.f32 %v2762, %v2865
    %v2867 = vpop.f32.mrf.mxu0
    %2868 = vdwg.mxu0
    %2869 = vmatprep.subr.mxu0 0.0
    %v2870 = vand.u32 %v266, 4294901760
    %2871 = vmatpush1.msra.mxu0 %v2870
    %2872 = vmatprep.subr.mxu0 0.0
    %v2873 = vand.u32 %v265, 4294901760
    %2874 = vmatpush1.msra.mxu0 %v2873
    %2875 = vmatprep.subr.mxu0 0.0
    %v2876 = vand.u32 %v264, 4294901760
    %2877 = vmatpush1.msra.mxu0 %v2876
    %2878 = vmatprep.subr.mxu0 0.0
    %v2879 = vand.u32 %v263, 4294901760
    %2880 = vmatpush1.msra.mxu0 %v2879
    %2881 = vmatprep.subr.mxu0 0.0
    %v2882 = vand.u32 %v262, 4294901760
    %2883 = vmatpush1.msra.mxu0 %v2882
    %2884 = vmatprep.subr.mxu0 0.0
    %v2885 = vand.u32 %v261, 4294901760
    %2886 = vmatpush1.msra.mxu0 %v2885
    %2887 = vmatprep.subr.mxu0 0.0
    %v2888 = vand.u32 %v260, 4294901760
    %2889 = vmatpush1.msra.mxu0 %v2888
    %2890 = vmatprep.subr.mxu0 0.0
    %v2891 = vand.u32 %v259, 4294901760
    %2892 = vmatpush1.msra.mxu0 %v2891
    %2893 = vmatprep.subr.mxu0 0.0
    %v2894 = vand.u32 %v258, 4294901760
    %2895 = vmatpush1.msra.mxu0 %v2894
    %2896 = vmatprep.subr.mxu0 0.0
    %v2897 = vand.u32 %v257, 4294901760
    %2898 = vmatpush1.msra.mxu0 %v2897
    %2899 = vmatprep.subr.mxu0 0.0
    %v2900 = vand.u32 %v256, 4294901760
    %2901 = vmatpush1.msra.mxu0 %v2900
    %2902 = vmatprep.subr.mxu0 0.0
    %v2903 = vand.u32 %v255, 4294901760
    %2904 = vmatpush1.msra.mxu0 %v2903
    %2905 = vmatprep.subr.mxu0 0.0
    %v2906 = vand.u32 %v254, 4294901760
    %2907 = vmatpush1.msra.mxu0 %v2906
    %2908 = vmatprep.subr.mxu0 0.0
    %v2909 = vand.u32 %v253, 4294901760
    %2910 = vmatpush1.msra.mxu0 %v2909
    %2911 = vmatprep.subr.mxu0 0.0
    %v2912 = vand.u32 %v252, 4294901760
    %2913 = vmatpush1.msra.mxu0 %v2912
    %2914 = vmatprep.subr.mxu0 0.0
    %v2915 = vand.u32 %v251, 4294901760
    %2916 = vmatpush1.msra.mxu0 %v2915
    %2917 = vmatprep.subr.mxu0 0.0
    %v2918 = vand.u32 %v282, 4294901760
    %2919 = vmatpush2.msra.mxu0 %v2918
    %2920 = vmatprep.subr.mxu0 0.0
    %v2921 = vand.u32 %v281, 4294901760
    %2922 = vmatpush2.msra.mxu0 %v2921
    %2923 = vmatprep.subr.mxu0 0.0
    %v2924 = vand.u32 %v280, 4294901760
    %2925 = vmatpush2.msra.mxu0 %v2924
    %2926 = vmatprep.subr.mxu0 0.0
    %v2927 = vand.u32 %v279, 4294901760
    %2928 = vmatpush2.msra.mxu0 %v2927
    %2929 = vmatprep.subr.mxu0 0.0
    %v2930 = vand.u32 %v278, 4294901760
    %2931 = vmatpush2.msra.mxu0 %v2930
    %2932 = vmatprep.subr.mxu0 0.0
    %v2933 = vand.u32 %v277, 4294901760
    %2934 = vmatpush2.msra.mxu0 %v2933
    %2935 = vmatprep.subr.mxu0 0.0
    %v2936 = vand.u32 %v276, 4294901760
    %2937 = vmatpush2.msra.mxu0 %v2936
    %2938 = vmatprep.subr.mxu0 0.0
    %v2939 = vand.u32 %v275, 4294901760
    %2940 = vmatpush2.msra.mxu0 %v2939
    %2941 = vmatprep.subr.mxu0 0.0
    %v2942 = vand.u32 %v274, 4294901760
    %2943 = vmatpush2.msra.mxu0 %v2942
    %2944 = vmatprep.subr.mxu0 0.0
    %v2945 = vand.u32 %v273, 4294901760
    %2946 = vmatpush2.msra.mxu0 %v2945
    %2947 = vmatprep.subr.mxu0 0.0
    %v2948 = vand.u32 %v272, 4294901760
    %2949 = vmatpush2.msra.mxu0 %v2948
    %2950 = vmatprep.subr.mxu0 0.0
    %v2951 = vand.u32 %v271, 4294901760
    %2952 = vmatpush2.msra.mxu0 %v2951
    %2953 = vmatprep.subr.mxu0 0.0
    %v2954 = vand.u32 %v270, 4294901760
    %2955 = vmatpush2.msra.mxu0 %v2954
    %2956 = vmatprep.subr.mxu0 0.0
    %v2957 = vand.u32 %v269, 4294901760
    %2958 = vmatpush2.msra.mxu0 %v2957
    %2959 = vmatprep.subr.mxu0 0.0
    %v2960 = vand.u32 %v268, 4294901760
    %2961 = vmatpush2.msra.mxu0 %v2960
    %2962 = vmatprep.subr.mxu0 0.0
    %v2963 = vand.u32 %v267, 4294901760
    %2964 = vmatpush2.msra.mxu0 %v2963
    %v2965 = vand.u32 %v154, 4294901760
    %v2966 = vsub.f32 %v154, %v2965
    %v2967 = vand.u32 %v2966, 4294901760
    %v2968 = vsub.f32 %v2966, %v2967
    %v2969 = vand.u32 %v2968, 4294901760
    %2970 = vmatprep.mubr.f32.mxu0 %v2969
    %v2971 = vand.u32 %v153, 4294901760
    %v2972 = vsub.f32 %v153, %v2971
    %v2973 = vand.u32 %v2972, 4294901760
    %v2974 = vsub.f32 %v2972, %v2973
    %v2975 = vand.u32 %v2974, 4294901760
    %2976 = vmatmul.mubr.f32.gmra.mxu0 %v2975
    %v2977 = vpop.f32.mrf.mxu0
    %v2978 = vadd.f32 %v2866, %v2977
    %v2979 = vpop.f32.mrf.mxu0
    %2980 = vdwg.mxu0
    %2981 = vmatprep.subr.mxu0 0.0
    %v2982 = vand.u32 %v266, 4294901760
    %v2983 = vsub.f32 %v266, %v2982
    %v2984 = vand.u32 %v2983, 4294901760
    %v2985 = vsub.f32 %v2983, %v2984
    %v2986 = vand.u32 %v2985, 4294901760
    %2987 = vmatpush1.msra.mxu0 %v2986
    %2988 = vmatprep.subr.mxu0 0.0
    %v2989 = vand.u32 %v265, 4294901760
    %v2990 = vsub.f32 %v265, %v2989
    %v2991 = vand.u32 %v2990, 4294901760
    %v2992 = vsub.f32 %v2990, %v2991
    %v2993 = vand.u32 %v2992, 4294901760
    %2994 = vmatpush1.msra.mxu0 %v2993
    %2995 = vmatprep.subr.mxu0 0.0
    %v2996 = vand.u32 %v264, 4294901760
    %v2997 = vsub.f32 %v264, %v2996
    %v2998 = vand.u32 %v2997, 4294901760
    %v2999 = vsub.f32 %v2997, %v2998
    %v3000 = vand.u32 %v2999, 4294901760
    %3001 = vmatpush1.msra.mxu0 %v3000
    %3002 = vmatprep.subr.mxu0 0.0
    %v3003 = vand.u32 %v263, 4294901760
    %v3004 = vsub.f32 %v263, %v3003
    %v3005 = vand.u32 %v3004, 4294901760
    %v3006 = vsub.f32 %v3004, %v3005
    %v3007 = vand.u32 %v3006, 4294901760
    %3008 = vmatpush1.msra.mxu0 %v3007
    %3009 = vmatprep.subr.mxu0 0.0
    %v3010 = vand.u32 %v262, 4294901760
    %v3011 = vsub.f32 %v262, %v3010
    %v3012 = vand.u32 %v3011, 4294901760
    %v3013 = vsub.f32 %v3011, %v3012
    %v3014 = vand.u32 %v3013, 4294901760
    %3015 = vmatpush1.msra.mxu0 %v3014
    %3016 = vmatprep.subr.mxu0 0.0
    %v3017 = vand.u32 %v261, 4294901760
    %v3018 = vsub.f32 %v261, %v3017
    %v3019 = vand.u32 %v3018, 4294901760
    %v3020 = vsub.f32 %v3018, %v3019
    %v3021 = vand.u32 %v3020, 4294901760
    %3022 = vmatpush1.msra.mxu0 %v3021
    %3023 = vmatprep.subr.mxu0 0.0
    %v3024 = vand.u32 %v260, 4294901760
    %v3025 = vsub.f32 %v260, %v3024
    %v3026 = vand.u32 %v3025, 4294901760
    %v3027 = vsub.f32 %v3025, %v3026
    %v3028 = vand.u32 %v3027, 4294901760
    %3029 = vmatpush1.msra.mxu0 %v3028
    %3030 = vmatprep.subr.mxu0 0.0
    %v3031 = vand.u32 %v259, 4294901760
    %v3032 = vsub.f32 %v259, %v3031
    %v3033 = vand.u32 %v3032, 4294901760
    %v3034 = vsub.f32 %v3032, %v3033
    %v3035 = vand.u32 %v3034, 4294901760
    %3036 = vmatpush1.msra.mxu0 %v3035
    %3037 = vmatprep.subr.mxu0 0.0
    %v3038 = vand.u32 %v258, 4294901760
    %v3039 = vsub.f32 %v258, %v3038
    %v3040 = vand.u32 %v3039, 4294901760
    %v3041 = vsub.f32 %v3039, %v3040
    %v3042 = vand.u32 %v3041, 4294901760
    %3043 = vmatpush1.msra.mxu0 %v3042
    %3044 = vmatprep.subr.mxu0 0.0
    %v3045 = vand.u32 %v257, 4294901760
    %v3046 = vsub.f32 %v257, %v3045
    %v3047 = vand.u32 %v3046, 4294901760
    %v3048 = vsub.f32 %v3046, %v3047
    %v3049 = vand.u32 %v3048, 4294901760
    %3050 = vmatpush1.msra.mxu0 %v3049
    %3051 = vmatprep.subr.mxu0 0.0
    %v3052 = vand.u32 %v256, 4294901760
    %v3053 = vsub.f32 %v256, %v3052
    %v3054 = vand.u32 %v3053, 4294901760
    %v3055 = vsub.f32 %v3053, %v3054
    %v3056 = vand.u32 %v3055, 4294901760
    %3057 = vmatpush1.msra.mxu0 %v3056
    %3058 = vmatprep.subr.mxu0 0.0
    %v3059 = vand.u32 %v255, 4294901760
    %v3060 = vsub.f32 %v255, %v3059
    %v3061 = vand.u32 %v3060, 4294901760
    %v3062 = vsub.f32 %v3060, %v3061
    %v3063 = vand.u32 %v3062, 4294901760
    %3064 = vmatpush1.msra.mxu0 %v3063
    %3065 = vmatprep.subr.mxu0 0.0
    %v3066 = vand.u32 %v254, 4294901760
    %v3067 = vsub.f32 %v254, %v3066
    %v3068 = vand.u32 %v3067, 4294901760
    %v3069 = vsub.f32 %v3067, %v3068
    %v3070 = vand.u32 %v3069, 4294901760
    %3071 = vmatpush1.msra.mxu0 %v3070
    %3072 = vmatprep.subr.mxu0 0.0
    %v3073 = vand.u32 %v253, 4294901760
    %v3074 = vsub.f32 %v253, %v3073
    %v3075 = vand.u32 %v3074, 4294901760
    %v3076 = vsub.f32 %v3074, %v3075
    %v3077 = vand.u32 %v3076, 4294901760
    %3078 = vmatpush1.msra.mxu0 %v3077
    %3079 = vmatprep.subr.mxu0 0.0
    %v3080 = vand.u32 %v252, 4294901760
    %v3081 = vsub.f32 %v252, %v3080
    %v3082 = vand.u32 %v3081, 4294901760
    %v3083 = vsub.f32 %v3081, %v3082
    %v3084 = vand.u32 %v3083, 4294901760
    %3085 = vmatpush1.msra.mxu0 %v3084
    %3086 = vmatprep.subr.mxu0 0.0
    %v3087 = vand.u32 %v251, 4294901760
    %v3088 = vsub.f32 %v251, %v3087
    %v3089 = vand.u32 %v3088, 4294901760
    %v3090 = vsub.f32 %v3088, %v3089
    %v3091 = vand.u32 %v3090, 4294901760
    %3092 = vmatpush1.msra.mxu0 %v3091
    %3093 = vmatprep.subr.mxu0 0.0
    %v3094 = vand.u32 %v282, 4294901760
    %v3095 = vsub.f32 %v282, %v3094
    %v3096 = vand.u32 %v3095, 4294901760
    %v3097 = vsub.f32 %v3095, %v3096
    %v3098 = vand.u32 %v3097, 4294901760
    %3099 = vmatpush2.msra.mxu0 %v3098
    %3100 = vmatprep.subr.mxu0 0.0
    %v3101 = vand.u32 %v281, 4294901760
    %v3102 = vsub.f32 %v281, %v3101
    %v3103 = vand.u32 %v3102, 4294901760
    %v3104 = vsub.f32 %v3102, %v3103
    %v3105 = vand.u32 %v3104, 4294901760
    %3106 = vmatpush2.msra.mxu0 %v3105
    %3107 = vmatprep.subr.mxu0 0.0
    %v3108 = vand.u32 %v280, 4294901760
    %v3109 = vsub.f32 %v280, %v3108
    %v3110 = vand.u32 %v3109, 4294901760
    %v3111 = vsub.f32 %v3109, %v3110
    %v3112 = vand.u32 %v3111, 4294901760
    %3113 = vmatpush2.msra.mxu0 %v3112
    %3114 = vmatprep.subr.mxu0 0.0
    %v3115 = vand.u32 %v279, 4294901760
    %v3116 = vsub.f32 %v279, %v3115
    %v3117 = vand.u32 %v3116, 4294901760
    %v3118 = vsub.f32 %v3116, %v3117
    %v3119 = vand.u32 %v3118, 4294901760
    %3120 = vmatpush2.msra.mxu0 %v3119
    %3121 = vmatprep.subr.mxu0 0.0
    %v3122 = vand.u32 %v278, 4294901760
    %v3123 = vsub.f32 %v278, %v3122
    %v3124 = vand.u32 %v3123, 4294901760
    %v3125 = vsub.f32 %v3123, %v3124
    %v3126 = vand.u32 %v3125, 4294901760
    %3127 = vmatpush2.msra.mxu0 %v3126
    %3128 = vmatprep.subr.mxu0 0.0
    %v3129 = vand.u32 %v277, 4294901760
    %v3130 = vsub.f32 %v277, %v3129
    %v3131 = vand.u32 %v3130, 4294901760
    %v3132 = vsub.f32 %v3130, %v3131
    %v3133 = vand.u32 %v3132, 4294901760
    %3134 = vmatpush2.msra.mxu0 %v3133
    %3135 = vmatprep.subr.mxu0 0.0
    %v3136 = vand.u32 %v276, 4294901760
    %v3137 = vsub.f32 %v276, %v3136
    %v3138 = vand.u32 %v3137, 4294901760
    %v3139 = vsub.f32 %v3137, %v3138
    %v3140 = vand.u32 %v3139, 4294901760
    %3141 = vmatpush2.msra.mxu0 %v3140
    %3142 = vmatprep.subr.mxu0 0.0
    %v3143 = vand.u32 %v275, 4294901760
    %v3144 = vsub.f32 %v275, %v3143
    %v3145 = vand.u32 %v3144, 4294901760
    %v3146 = vsub.f32 %v3144, %v3145
    %v3147 = vand.u32 %v3146, 4294901760
    %3148 = vmatpush2.msra.mxu0 %v3147
    %3149 = vmatprep.subr.mxu0 0.0
    %v3150 = vand.u32 %v274, 4294901760
    %v3151 = vsub.f32 %v274, %v3150
    %v3152 = vand.u32 %v3151, 4294901760
    %v3153 = vsub.f32 %v3151, %v3152
    %v3154 = vand.u32 %v3153, 4294901760
    %3155 = vmatpush2.msra.mxu0 %v3154
    %3156 = vmatprep.subr.mxu0 0.0
    %v3157 = vand.u32 %v273, 4294901760
    %v3158 = vsub.f32 %v273, %v3157
    %v3159 = vand.u32 %v3158, 4294901760
    %v3160 = vsub.f32 %v3158, %v3159
    %v3161 = vand.u32 %v3160, 4294901760
    %3162 = vmatpush2.msra.mxu0 %v3161
    %3163 = vmatprep.subr.mxu0 0.0
    %v3164 = vand.u32 %v272, 4294901760
    %v3165 = vsub.f32 %v272, %v3164
    %v3166 = vand.u32 %v3165, 4294901760
    %v3167 = vsub.f32 %v3165, %v3166
    %v3168 = vand.u32 %v3167, 4294901760
    %3169 = vmatpush2.msra.mxu0 %v3168
    %3170 = vmatprep.subr.mxu0 0.0
    %v3171 = vand.u32 %v271, 4294901760
    %v3172 = vsub.f32 %v271, %v3171
    %v3173 = vand.u32 %v3172, 4294901760
    %v3174 = vsub.f32 %v3172, %v3173
    %v3175 = vand.u32 %v3174, 4294901760
    %3176 = vmatpush2.msra.mxu0 %v3175
    %3177 = vmatprep.subr.mxu0 0.0
    %v3178 = vand.u32 %v270, 4294901760
    %v3179 = vsub.f32 %v270, %v3178
    %v3180 = vand.u32 %v3179, 4294901760
    %v3181 = vsub.f32 %v3179, %v3180
    %v3182 = vand.u32 %v3181, 4294901760
    %3183 = vmatpush2.msra.mxu0 %v3182
    %3184 = vmatprep.subr.mxu0 0.0
    %v3185 = vand.u32 %v269, 4294901760
    %v3186 = vsub.f32 %v269, %v3185
    %v3187 = vand.u32 %v3186, 4294901760
    %v3188 = vsub.f32 %v3186, %v3187
    %v3189 = vand.u32 %v3188, 4294901760
    %3190 = vmatpush2.msra.mxu0 %v3189
    %3191 = vmatprep.subr.mxu0 0.0
    %v3192 = vand.u32 %v268, 4294901760
    %v3193 = vsub.f32 %v268, %v3192
    %v3194 = vand.u32 %v3193, 4294901760
    %v3195 = vsub.f32 %v3193, %v3194
    %v3196 = vand.u32 %v3195, 4294901760
    %3197 = vmatpush2.msra.mxu0 %v3196
    %3198 = vmatprep.subr.mxu0 0.0
    %v3199 = vand.u32 %v267, 4294901760
    %v3200 = vsub.f32 %v267, %v3199
    %v3201 = vand.u32 %v3200, 4294901760
    %v3202 = vsub.f32 %v3200, %v3201
    %v3203 = vand.u32 %v3202, 4294901760
    %3204 = vmatpush2.msra.mxu0 %v3203
    %v3205 = vand.u32 %v154, 4294901760
    %3206 = vmatprep.mubr.f32.mxu0 %v3205
    %v3207 = vand.u32 %v153, 4294901760
    %3208 = vmatmul.mubr.f32.gmra.mxu0 %v3207
    %v3209 = vpop.f32.mrf.mxu0
    %v3210 = vadd.f32 %v2978, %v3209
    %v3211 = vpop.f32.mrf.mxu0
    %3212 = vdwg.mxu0
    %3213 = vmatprep.subr.mxu0 0.0
    %v3214 = vand.u32 %v266, 4294901760
    %v3215 = vsub.f32 %v266, %v3214
    %3216 = vmatpush1.msra.mxu0 %v3215
    %3217 = vmatprep.subr.mxu0 0.0
    %v3218 = vand.u32 %v265, 4294901760
    %v3219 = vsub.f32 %v265, %v3218
    %3220 = vmatpush1.msra.mxu0 %v3219
    %3221 = vmatprep.subr.mxu0 0.0
    %v3222 = vand.u32 %v264, 4294901760
    %v3223 = vsub.f32 %v264, %v3222
    %3224 = vmatpush1.msra.mxu0 %v3223
    %3225 = vmatprep.subr.mxu0 0.0
    %v3226 = vand.u32 %v263, 4294901760
    %v3227 = vsub.f32 %v263, %v3226
    %3228 = vmatpush1.msra.mxu0 %v3227
    %3229 = vmatprep.subr.mxu0 0.0
    %v3230 = vand.u32 %v262, 4294901760
    %v3231 = vsub.f32 %v262, %v3230
    %3232 = vmatpush1.msra.mxu0 %v3231
    %3233 = vmatprep.subr.mxu0 0.0
    %v3234 = vand.u32 %v261, 4294901760
    %v3235 = vsub.f32 %v261, %v3234
    %3236 = vmatpush1.msra.mxu0 %v3235
    %3237 = vmatprep.subr.mxu0 0.0
    %v3238 = vand.u32 %v260, 4294901760
    %v3239 = vsub.f32 %v260, %v3238
    %3240 = vmatpush1.msra.mxu0 %v3239
    %3241 = vmatprep.subr.mxu0 0.0
    %v3242 = vand.u32 %v259, 4294901760
    %v3243 = vsub.f32 %v259, %v3242
    %3244 = vmatpush1.msra.mxu0 %v3243
    %3245 = vmatprep.subr.mxu0 0.0
    %v3246 = vand.u32 %v258, 4294901760
    %v3247 = vsub.f32 %v258, %v3246
    %3248 = vmatpush1.msra.mxu0 %v3247
    %3249 = vmatprep.subr.mxu0 0.0
    %v3250 = vand.u32 %v257, 4294901760
    %v3251 = vsub.f32 %v257, %v3250
    %3252 = vmatpush1.msra.mxu0 %v3251
    %3253 = vmatprep.subr.mxu0 0.0
    %v3254 = vand.u32 %v256, 4294901760
    %v3255 = vsub.f32 %v256, %v3254
    %3256 = vmatpush1.msra.mxu0 %v3255
    %3257 = vmatprep.subr.mxu0 0.0
    %v3258 = vand.u32 %v255, 4294901760
    %v3259 = vsub.f32 %v255, %v3258
    %3260 = vmatpush1.msra.mxu0 %v3259
    %3261 = vmatprep.subr.mxu0 0.0
    %v3262 = vand.u32 %v254, 4294901760
    %v3263 = vsub.f32 %v254, %v3262
    %3264 = vmatpush1.msra.mxu0 %v3263
    %3265 = vmatprep.subr.mxu0 0.0
    %v3266 = vand.u32 %v253, 4294901760
    %v3267 = vsub.f32 %v253, %v3266
    %3268 = vmatpush1.msra.mxu0 %v3267
    %3269 = vmatprep.subr.mxu0 0.0
    %v3270 = vand.u32 %v252, 4294901760
    %v3271 = vsub.f32 %v252, %v3270
    %3272 = vmatpush1.msra.mxu0 %v3271
    %3273 = vmatprep.subr.mxu0 0.0
    %v3274 = vand.u32 %v251, 4294901760
    %v3275 = vsub.f32 %v251, %v3274
    %3276 = vmatpush1.msra.mxu0 %v3275
    %3277 = vmatprep.subr.mxu0 0.0
    %v3278 = vand.u32 %v282, 4294901760
    %v3279 = vsub.f32 %v282, %v3278
    %3280 = vmatpush2.msra.mxu0 %v3279
    %3281 = vmatprep.subr.mxu0 0.0
    %v3282 = vand.u32 %v281, 4294901760
    %v3283 = vsub.f32 %v281, %v3282
    %3284 = vmatpush2.msra.mxu0 %v3283
    %3285 = vmatprep.subr.mxu0 0.0
    %v3286 = vand.u32 %v280, 4294901760
    %v3287 = vsub.f32 %v280, %v3286
    %3288 = vmatpush2.msra.mxu0 %v3287
    %3289 = vmatprep.subr.mxu0 0.0
    %v3290 = vand.u32 %v279, 4294901760
    %v3291 = vsub.f32 %v279, %v3290
    %3292 = vmatpush2.msra.mxu0 %v3291
    %3293 = vmatprep.subr.mxu0 0.0
    %v3294 = vand.u32 %v278, 4294901760
    %v3295 = vsub.f32 %v278, %v3294
    %3296 = vmatpush2.msra.mxu0 %v3295
    %3297 = vmatprep.subr.mxu0 0.0
    %v3298 = vand.u32 %v277, 4294901760
    %v3299 = vsub.f32 %v277, %v3298
    %3300 = vmatpush2.msra.mxu0 %v3299
    %3301 = vmatprep.subr.mxu0 0.0
    %v3302 = vand.u32 %v276, 4294901760
    %v3303 = vsub.f32 %v276, %v3302
    %3304 = vmatpush2.msra.mxu0 %v3303
    %3305 = vmatprep.subr.mxu0 0.0
    %v3306 = vand.u32 %v275, 4294901760
    %v3307 = vsub.f32 %v275, %v3306
    %3308 = vmatpush2.msra.mxu0 %v3307
    %3309 = vmatprep.subr.mxu0 0.0
    %v3310 = vand.u32 %v274, 4294901760
    %v3311 = vsub.f32 %v274, %v3310
    %3312 = vmatpush2.msra.mxu0 %v3311
    %3313 = vmatprep.subr.mxu0 0.0
    %v3314 = vand.u32 %v273, 4294901760
    %v3315 = vsub.f32 %v273, %v3314
    %3316 = vmatpush2.msra.mxu0 %v3315
    %3317 = vmatprep.subr.mxu0 0.0
    %v3318 = vand.u32 %v272, 4294901760
    %v3319 = vsub.f32 %v272, %v3318
    %3320 = vmatpush2.msra.mxu0 %v3319
    %3321 = vmatprep.subr.mxu0 0.0
    %v3322 = vand.u32 %v271, 4294901760
    %v3323 = vsub.f32 %v271, %v3322
    %3324 = vmatpush2.msra.mxu0 %v3323
    %3325 = vmatprep.subr.mxu0 0.0
    %v3326 = vand.u32 %v270, 4294901760
    %v3327 = vsub.f32 %v270, %v3326
    %3328 = vmatpush2.msra.mxu0 %v3327
    %3329 = vmatprep.subr.mxu0 0.0
    %v3330 = vand.u32 %v269, 4294901760
    %v3331 = vsub.f32 %v269, %v3330
    %3332 = vmatpush2.msra.mxu0 %v3331
    %3333 = vmatprep.subr.mxu0 0.0
    %v3334 = vand.u32 %v268, 4294901760
    %v3335 = vsub.f32 %v268, %v3334
    %3336 = vmatpush2.msra.mxu0 %v3335
    %3337 = vmatprep.subr.mxu0 0.0
    %v3338 = vand.u32 %v267, 4294901760
    %v3339 = vsub.f32 %v267, %v3338
    %3340 = vmatpush2.msra.mxu0 %v3339
    %v3341 = vand.u32 %v154, 4294901760
    %v3342 = vsub.f32 %v154, %v3341
    %3343 = vmatprep.mubr.f32.mxu0 %v3342
    %v3344 = vand.u32 %v153, 4294901760
    %v3345 = vsub.f32 %v153, %v3344
    %3346 = vmatmul.mubr.f32.gmra.mxu0 %v3345
    %v3347 = vpop.f32.mrf.mxu0
    %v3348 = vadd.f32 %v3210, %v3347
    %v3349 = vpop.f32.mrf.mxu0
    %3350 = vdwg.mxu0
    %3351 = vmatprep.subr.mxu0 0.0
    %v3352 = vand.u32 %v266, 4294901760
    %3353 = vmatpush1.msra.mxu0 %v3352
    %3354 = vmatprep.subr.mxu0 0.0
    %v3355 = vand.u32 %v265, 4294901760
    %3356 = vmatpush1.msra.mxu0 %v3355
    %3357 = vmatprep.subr.mxu0 0.0
    %v3358 = vand.u32 %v264, 4294901760
    %3359 = vmatpush1.msra.mxu0 %v3358
    %3360 = vmatprep.subr.mxu0 0.0
    %v3361 = vand.u32 %v263, 4294901760
    %3362 = vmatpush1.msra.mxu0 %v3361
    %3363 = vmatprep.subr.mxu0 0.0
    %v3364 = vand.u32 %v262, 4294901760
    %3365 = vmatpush1.msra.mxu0 %v3364
    %3366 = vmatprep.subr.mxu0 0.0
    %v3367 = vand.u32 %v261, 4294901760
    %3368 = vmatpush1.msra.mxu0 %v3367
    %3369 = vmatprep.subr.mxu0 0.0
    %v3370 = vand.u32 %v260, 4294901760
    %3371 = vmatpush1.msra.mxu0 %v3370
    %3372 = vmatprep.subr.mxu0 0.0
    %v3373 = vand.u32 %v259, 4294901760
    %3374 = vmatpush1.msra.mxu0 %v3373
    %3375 = vmatprep.subr.mxu0 0.0
    %v3376 = vand.u32 %v258, 4294901760
    %3377 = vmatpush1.msra.mxu0 %v3376
    %3378 = vmatprep.subr.mxu0 0.0
    %v3379 = vand.u32 %v257, 4294901760
    %3380 = vmatpush1.msra.mxu0 %v3379
    %3381 = vmatprep.subr.mxu0 0.0
    %v3382 = vand.u32 %v256, 4294901760
    %3383 = vmatpush1.msra.mxu0 %v3382
    %3384 = vmatprep.subr.mxu0 0.0
    %v3385 = vand.u32 %v255, 4294901760
    %3386 = vmatpush1.msra.mxu0 %v3385
    %3387 = vmatprep.subr.mxu0 0.0
    %v3388 = vand.u32 %v254, 4294901760
    %3389 = vmatpush1.msra.mxu0 %v3388
    %3390 = vmatprep.subr.mxu0 0.0
    %v3391 = vand.u32 %v253, 4294901760
    %3392 = vmatpush1.msra.mxu0 %v3391
    %3393 = vmatprep.subr.mxu0 0.0
    %v3394 = vand.u32 %v252, 4294901760
    %3395 = vmatpush1.msra.mxu0 %v3394
    %3396 = vmatprep.subr.mxu0 0.0
    %v3397 = vand.u32 %v251, 4294901760
    %3398 = vmatpush1.msra.mxu0 %v3397
    %3399 = vmatprep.subr.mxu0 0.0
    %v3400 = vand.u32 %v282, 4294901760
    %3401 = vmatpush2.msra.mxu0 %v3400
    %3402 = vmatprep.subr.mxu0 0.0
    %v3403 = vand.u32 %v281, 4294901760
    %3404 = vmatpush2.msra.mxu0 %v3403
    %3405 = vmatprep.subr.mxu0 0.0
    %v3406 = vand.u32 %v280, 4294901760
    %3407 = vmatpush2.msra.mxu0 %v3406
    %3408 = vmatprep.subr.mxu0 0.0
    %v3409 = vand.u32 %v279, 4294901760
    %3410 = vmatpush2.msra.mxu0 %v3409
    %3411 = vmatprep.subr.mxu0 0.0
    %v3412 = vand.u32 %v278, 4294901760
    %3413 = vmatpush2.msra.mxu0 %v3412
    %3414 = vmatprep.subr.mxu0 0.0
    %v3415 = vand.u32 %v277, 4294901760
    %3416 = vmatpush2.msra.mxu0 %v3415
    %3417 = vmatprep.subr.mxu0 0.0
    %v3418 = vand.u32 %v276, 4294901760
    %3419 = vmatpush2.msra.mxu0 %v3418
    %3420 = vmatprep.subr.mxu0 0.0
    %v3421 = vand.u32 %v275, 4294901760
    %3422 = vmatpush2.msra.mxu0 %v3421
    %3423 = vmatprep.subr.mxu0 0.0
    %v3424 = vand.u32 %v274, 4294901760
    %3425 = vmatpush2.msra.mxu0 %v3424
    %3426 = vmatprep.subr.mxu0 0.0
    %v3427 = vand.u32 %v273, 4294901760
    %3428 = vmatpush2.msra.mxu0 %v3427
    %3429 = vmatprep.subr.mxu0 0.0
    %v3430 = vand.u32 %v272, 4294901760
    %3431 = vmatpush2.msra.mxu0 %v3430
    %3432 = vmatprep.subr.mxu0 0.0
    %v3433 = vand.u32 %v271, 4294901760
    %3434 = vmatpush2.msra.mxu0 %v3433
    %3435 = vmatprep.subr.mxu0 0.0
    %v3436 = vand.u32 %v270, 4294901760
    %3437 = vmatpush2.msra.mxu0 %v3436
    %3438 = vmatprep.subr.mxu0 0.0
    %v3439 = vand.u32 %v269, 4294901760
    %3440 = vmatpush2.msra.mxu0 %v3439
    %3441 = vmatprep.subr.mxu0 0.0
    %v3442 = vand.u32 %v268, 4294901760
    %3443 = vmatpush2.msra.mxu0 %v3442
    %3444 = vmatprep.subr.mxu0 0.0
    %v3445 = vand.u32 %v267, 4294901760
    %3446 = vmatpush2.msra.mxu0 %v3445
    %v3447 = vand.u32 %v154, 4294901760
    %v3448 = vsub.f32 %v154, %v3447
    %v3449 = vand.u32 %v3448, 4294901760
    %3450 = vmatprep.mubr.f32.mxu0 %v3449
    %v3451 = vand.u32 %v153, 4294901760
    %v3452 = vsub.f32 %v153, %v3451
    %v3453 = vand.u32 %v3452, 4294901760
    %3454 = vmatmul.mubr.f32.gmra.mxu0 %v3453
    %v3455 = vpop.f32.mrf.mxu0
    %v3456 = vadd.f32 %v3348, %v3455
    %v3457 = vpop.f32.mrf.mxu0
    %3458 = vdwg.mxu0
    %3459 = vmatprep.subr.mxu0 0.0
    %v3460 = vand.u32 %v266, 4294901760
    %v3461 = vsub.f32 %v266, %v3460
    %v3462 = vand.u32 %v3461, 4294901760
    %3463 = vmatpush1.msra.mxu0 %v3462
    %3464 = vmatprep.subr.mxu0 0.0
    %v3465 = vand.u32 %v265, 4294901760
    %v3466 = vsub.f32 %v265, %v3465
    %v3467 = vand.u32 %v3466, 4294901760
    %3468 = vmatpush1.msra.mxu0 %v3467
    %3469 = vmatprep.subr.mxu0 0.0
    %v3470 = vand.u32 %v264, 4294901760
    %v3471 = vsub.f32 %v264, %v3470
    %v3472 = vand.u32 %v3471, 4294901760
    %3473 = vmatpush1.msra.mxu0 %v3472
    %3474 = vmatprep.subr.mxu0 0.0
    %v3475 = vand.u32 %v263, 4294901760
    %v3476 = vsub.f32 %v263, %v3475
    %v3477 = vand.u32 %v3476, 4294901760
    %3478 = vmatpush1.msra.mxu0 %v3477
    %3479 = vmatprep.subr.mxu0 0.0
    %v3480 = vand.u32 %v262, 4294901760
    %v3481 = vsub.f32 %v262, %v3480
    %v3482 = vand.u32 %v3481, 4294901760
    %3483 = vmatpush1.msra.mxu0 %v3482
    %3484 = vmatprep.subr.mxu0 0.0
    %v3485 = vand.u32 %v261, 4294901760
    %v3486 = vsub.f32 %v261, %v3485
    %v3487 = vand.u32 %v3486, 4294901760
    %3488 = vmatpush1.msra.mxu0 %v3487
    %3489 = vmatprep.subr.mxu0 0.0
    %v3490 = vand.u32 %v260, 4294901760
    %v3491 = vsub.f32 %v260, %v3490
    %v3492 = vand.u32 %v3491, 4294901760
    %3493 = vmatpush1.msra.mxu0 %v3492
    %3494 = vmatprep.subr.mxu0 0.0
    %v3495 = vand.u32 %v259, 4294901760
    %v3496 = vsub.f32 %v259, %v3495
    %v3497 = vand.u32 %v3496, 4294901760
    %3498 = vmatpush1.msra.mxu0 %v3497
    %3499 = vmatprep.subr.mxu0 0.0
    %v3500 = vand.u32 %v258, 4294901760
    %v3501 = vsub.f32 %v258, %v3500
    %v3502 = vand.u32 %v3501, 4294901760
    %3503 = vmatpush1.msra.mxu0 %v3502
    %3504 = vmatprep.subr.mxu0 0.0
    %v3505 = vand.u32 %v257, 4294901760
    %v3506 = vsub.f32 %v257, %v3505
    %v3507 = vand.u32 %v3506, 4294901760
    %3508 = vmatpush1.msra.mxu0 %v3507
    %3509 = vmatprep.subr.mxu0 0.0
    %v3510 = vand.u32 %v256, 4294901760
    %v3511 = vsub.f32 %v256, %v3510
    %v3512 = vand.u32 %v3511, 4294901760
    %3513 = vmatpush1.msra.mxu0 %v3512
    %3514 = vmatprep.subr.mxu0 0.0
    %v3515 = vand.u32 %v255, 4294901760
    %v3516 = vsub.f32 %v255, %v3515
    %v3517 = vand.u32 %v3516, 4294901760
    %3518 = vmatpush1.msra.mxu0 %v3517
    %3519 = vmatprep.subr.mxu0 0.0
    %v3520 = vand.u32 %v254, 4294901760
    %v3521 = vsub.f32 %v254, %v3520
    %v3522 = vand.u32 %v3521, 4294901760
    %3523 = vmatpush1.msra.mxu0 %v3522
    %3524 = vmatprep.subr.mxu0 0.0
    %v3525 = vand.u32 %v253, 4294901760
    %v3526 = vsub.f32 %v253, %v3525
    %v3527 = vand.u32 %v3526, 4294901760
    %3528 = vmatpush1.msra.mxu0 %v3527
    %3529 = vmatprep.subr.mxu0 0.0
    %v3530 = vand.u32 %v252, 4294901760
    %v3531 = vsub.f32 %v252, %v3530
    %v3532 = vand.u32 %v3531, 4294901760
    %3533 = vmatpush1.msra.mxu0 %v3532
    %3534 = vmatprep.subr.mxu0 0.0
    %v3535 = vand.u32 %v251, 4294901760
    %v3536 = vsub.f32 %v251, %v3535
    %v3537 = vand.u32 %v3536, 4294901760
    %3538 = vmatpush1.msra.mxu0 %v3537
    %3539 = vmatprep.subr.mxu0 0.0
    %v3540 = vand.u32 %v282, 4294901760
    %v3541 = vsub.f32 %v282, %v3540
    %v3542 = vand.u32 %v3541, 4294901760
    %3543 = vmatpush2.msra.mxu0 %v3542
    %3544 = vmatprep.subr.mxu0 0.0
    %v3545 = vand.u32 %v281, 4294901760
    %v3546 = vsub.f32 %v281, %v3545
    %v3547 = vand.u32 %v3546, 4294901760
    %3548 = vmatpush2.msra.mxu0 %v3547
    %3549 = vmatprep.subr.mxu0 0.0
    %v3550 = vand.u32 %v280, 4294901760
    %v3551 = vsub.f32 %v280, %v3550
    %v3552 = vand.u32 %v3551, 4294901760
    %3553 = vmatpush2.msra.mxu0 %v3552
    %3554 = vmatprep.subr.mxu0 0.0
    %v3555 = vand.u32 %v279, 4294901760
    %v3556 = vsub.f32 %v279, %v3555
    %v3557 = vand.u32 %v3556, 4294901760
    %3558 = vmatpush2.msra.mxu0 %v3557
    %3559 = vmatprep.subr.mxu0 0.0
    %v3560 = vand.u32 %v278, 4294901760
    %v3561 = vsub.f32 %v278, %v3560
    %v3562 = vand.u32 %v3561, 4294901760
    %3563 = vmatpush2.msra.mxu0 %v3562
    %3564 = vmatprep.subr.mxu0 0.0
    %v3565 = vand.u32 %v277, 4294901760
    %v3566 = vsub.f32 %v277, %v3565
    %v3567 = vand.u32 %v3566, 4294901760
    %3568 = vmatpush2.msra.mxu0 %v3567
    %3569 = vmatprep.subr.mxu0 0.0
    %v3570 = vand.u32 %v276, 4294901760
    %v3571 = vsub.f32 %v276, %v3570
    %v3572 = vand.u32 %v3571, 4294901760
    %3573 = vmatpush2.msra.mxu0 %v3572
    %3574 = vmatprep.subr.mxu0 0.0
    %v3575 = vand.u32 %v275, 4294901760
    %v3576 = vsub.f32 %v275, %v3575
    %v3577 = vand.u32 %v3576, 4294901760
    %3578 = vmatpush2.msra.mxu0 %v3577
    %3579 = vmatprep.subr.mxu0 0.0
    %v3580 = vand.u32 %v274, 4294901760
    %v3581 = vsub.f32 %v274, %v3580
    %v3582 = vand.u32 %v3581, 4294901760
    %3583 = vmatpush2.msra.mxu0 %v3582
    %3584 = vmatprep.subr.mxu0 0.0
    %v3585 = vand.u32 %v273, 4294901760
    %v3586 = vsub.f32 %v273, %v3585
    %v3587 = vand.u32 %v3586, 4294901760
    %3588 = vmatpush2.msra.mxu0 %v3587
    %3589 = vmatprep.subr.mxu0 0.0
    %v3590 = vand.u32 %v272, 4294901760
    %v3591 = vsub.f32 %v272, %v3590
    %v3592 = vand.u32 %v3591, 4294901760
    %3593 = vmatpush2.msra.mxu0 %v3592
    %3594 = vmatprep.subr.mxu0 0.0
    %v3595 = vand.u32 %v271, 4294901760
    %v3596 = vsub.f32 %v271, %v3595
    %v3597 = vand.u32 %v3596, 4294901760
    %3598 = vmatpush2.msra.mxu0 %v3597
    %3599 = vmatprep.subr.mxu0 0.0
    %v3600 = vand.u32 %v270, 4294901760
    %v3601 = vsub.f32 %v270, %v3600
    %v3602 = vand.u32 %v3601, 4294901760
    %3603 = vmatpush2.msra.mxu0 %v3602
    %3604 = vmatprep.subr.mxu0 0.0
    %v3605 = vand.u32 %v269, 4294901760
    %v3606 = vsub.f32 %v269, %v3605
    %v3607 = vand.u32 %v3606, 4294901760
    %3608 = vmatpush2.msra.mxu0 %v3607
    %3609 = vmatprep.subr.mxu0 0.0
    %v3610 = vand.u32 %v268, 4294901760
    %v3611 = vsub.f32 %v268, %v3610
    %v3612 = vand.u32 %v3611, 4294901760
    %3613 = vmatpush2.msra.mxu0 %v3612
    %3614 = vmatprep.subr.mxu0 0.0
    %v3615 = vand.u32 %v267, 4294901760
    %v3616 = vsub.f32 %v267, %v3615
    %v3617 = vand.u32 %v3616, 4294901760
    %3618 = vmatpush2.msra.mxu0 %v3617
    %v3619 = vand.u32 %v154, 4294901760
    %3620 = vmatprep.mubr.f32.mxu0 %v3619
    %v3621 = vand.u32 %v153, 4294901760
    %3622 = vmatmul.mubr.f32.gmra.mxu0 %v3621
    %v3623 = vpop.f32.mrf.mxu0
    %v3624 = vadd.f32 %v3456, %v3623
    %v3625 = vpop.f32.mrf.mxu0
    %3626 = vdwg.mxu0
    %3627 = vmatprep.subr.mxu0 0.0
    %v3628 = vand.u32 %v266, 4294901760
    %3629 = vmatpush1.msra.mxu0 %v3628
    %3630 = vmatprep.subr.mxu0 0.0
    %v3631 = vand.u32 %v265, 4294901760
    %3632 = vmatpush1.msra.mxu0 %v3631
    %3633 = vmatprep.subr.mxu0 0.0
    %v3634 = vand.u32 %v264, 4294901760
    %3635 = vmatpush1.msra.mxu0 %v3634
    %3636 = vmatprep.subr.mxu0 0.0
    %v3637 = vand.u32 %v263, 4294901760
    %3638 = vmatpush1.msra.mxu0 %v3637
    %3639 = vmatprep.subr.mxu0 0.0
    %v3640 = vand.u32 %v262, 4294901760
    %3641 = vmatpush1.msra.mxu0 %v3640
    %3642 = vmatprep.subr.mxu0 0.0
    %v3643 = vand.u32 %v261, 4294901760
    %3644 = vmatpush1.msra.mxu0 %v3643
    %3645 = vmatprep.subr.mxu0 0.0
    %v3646 = vand.u32 %v260, 4294901760
    %3647 = vmatpush1.msra.mxu0 %v3646
    %3648 = vmatprep.subr.mxu0 0.0
    %v3649 = vand.u32 %v259, 4294901760
    %3650 = vmatpush1.msra.mxu0 %v3649
    %3651 = vmatprep.subr.mxu0 0.0
    %v3652 = vand.u32 %v258, 4294901760
    %3653 = vmatpush1.msra.mxu0 %v3652
    %3654 = vmatprep.subr.mxu0 0.0
    %v3655 = vand.u32 %v257, 4294901760
    %3656 = vmatpush1.msra.mxu0 %v3655
    %3657 = vmatprep.subr.mxu0 0.0
    %v3658 = vand.u32 %v256, 4294901760
    %3659 = vmatpush1.msra.mxu0 %v3658
    %3660 = vmatprep.subr.mxu0 0.0
    %v3661 = vand.u32 %v255, 4294901760
    %3662 = vmatpush1.msra.mxu0 %v3661
    %3663 = vmatprep.subr.mxu0 0.0
    %v3664 = vand.u32 %v254, 4294901760
    %3665 = vmatpush1.msra.mxu0 %v3664
    %3666 = vmatprep.subr.mxu0 0.0
    %v3667 = vand.u32 %v253, 4294901760
    %3668 = vmatpush1.msra.mxu0 %v3667
    %3669 = vmatprep.subr.mxu0 0.0
    %v3670 = vand.u32 %v252, 4294901760
    %3671 = vmatpush1.msra.mxu0 %v3670
    %3672 = vmatprep.subr.mxu0 0.0
    %v3673 = vand.u32 %v251, 4294901760
    %3674 = vmatpush1.msra.mxu0 %v3673
    %3675 = vmatprep.subr.mxu0 0.0
    %v3676 = vand.u32 %v282, 4294901760
    %3677 = vmatpush2.msra.mxu0 %v3676
    %3678 = vmatprep.subr.mxu0 0.0
    %v3679 = vand.u32 %v281, 4294901760
    %3680 = vmatpush2.msra.mxu0 %v3679
    %3681 = vmatprep.subr.mxu0 0.0
    %v3682 = vand.u32 %v280, 4294901760
    %3683 = vmatpush2.msra.mxu0 %v3682
    %3684 = vmatprep.subr.mxu0 0.0
    %v3685 = vand.u32 %v279, 4294901760
    %3686 = vmatpush2.msra.mxu0 %v3685
    %3687 = vmatprep.subr.mxu0 0.0
    %v3688 = vand.u32 %v278, 4294901760
    %3689 = vmatpush2.msra.mxu0 %v3688
    %3690 = vmatprep.subr.mxu0 0.0
    %v3691 = vand.u32 %v277, 4294901760
    %3692 = vmatpush2.msra.mxu0 %v3691
    %3693 = vmatprep.subr.mxu0 0.0
    %v3694 = vand.u32 %v276, 4294901760
    %3695 = vmatpush2.msra.mxu0 %v3694
    %3696 = vmatprep.subr.mxu0 0.0
    %v3697 = vand.u32 %v275, 4294901760
    %3698 = vmatpush2.msra.mxu0 %v3697
    %3699 = vmatprep.subr.mxu0 0.0
    %v3700 = vand.u32 %v274, 4294901760
    %3701 = vmatpush2.msra.mxu0 %v3700
    %3702 = vmatprep.subr.mxu0 0.0
    %v3703 = vand.u32 %v273, 4294901760
    %3704 = vmatpush2.msra.mxu0 %v3703
    %3705 = vmatprep.subr.mxu0 0.0
    %v3706 = vand.u32 %v272, 4294901760
    %3707 = vmatpush2.msra.mxu0 %v3706
    %3708 = vmatprep.subr.mxu0 0.0
    %v3709 = vand.u32 %v271, 4294901760
    %3710 = vmatpush2.msra.mxu0 %v3709
    %3711 = vmatprep.subr.mxu0 0.0
    %v3712 = vand.u32 %v270, 4294901760
    %3713 = vmatpush2.msra.mxu0 %v3712
    %3714 = vmatprep.subr.mxu0 0.0
    %v3715 = vand.u32 %v269, 4294901760
    %3716 = vmatpush2.msra.mxu0 %v3715
    %3717 = vmatprep.subr.mxu0 0.0
    %v3718 = vand.u32 %v268, 4294901760
    %3719 = vmatpush2.msra.mxu0 %v3718
    %3720 = vmatprep.subr.mxu0 0.0
    %v3721 = vand.u32 %v267, 4294901760
    %3722 = vmatpush2.msra.mxu0 %v3721
    %v3723 = vand.u32 %v154, 4294901760
    %3724 = vmatprep.mubr.f32.mxu0 %v3723
    %v3725 = vand.u32 %v153, 4294901760
    %3726 = vmatmul.mubr.f32.gmra.mxu0 %v3725
    %v3727 = vpop.f32.mrf.mxu0
    %v3728 = vadd.f32 %v3624, %v3727
    %v3729 = vpop.f32.mrf.mxu0
    %3730 = vdwg.mxu0
    %v3731 = vadd.f32 %v41, %v3728
    %v3732 = vstv %s35
    %v3733 = vmul.f32 %v3732, %v3731
    %v3734 = vstv %s36
    %v3735 = vadd.f32 %v3734, %v3733
    %vm3736 = vcmask 7168
    %3737 = vst.msk [vmem:[%s5] sm:$0xff] %vm3736, %v3735
    // Predicated region
    $region26: #{tpu_custom_call.1} parent=1 // pred_check
      _
    $region27: #{tpu_custom_call.1} parent=1 // pred_check_branch
      %3739 = sbr.rel (0) target = $region29
    $region28: #{tpu_custom_call.1} parent=1 // pred_region
      _
    $region29: #{tpu_custom_call.1} parent=1 // pred_fallthru
      _
    // Predicated region
    $region30: #{tpu_custom_call.1} parent=1 // pred_check
      _
    $region31: #{tpu_custom_call.1} parent=1 // pred_check_branch
      %3741 = sbr.rel (0) target = $region33
    $region32: #{tpu_custom_call.1} parent=1 // pred_region
      _
    $region33: #{tpu_custom_call.1} parent=1 // pred_fallthru
      _
    %3742 = vsyncpa [#allocation3], 1

</llo_original>
